<compile_context>
chip_gen: v7x
topology: tpu7x:2x2x1
jax: 0.10.0
libtpu: 0.0.40
codegen_flags: <defaults>
</compile_context>

<pallas_src>
import jax
import jax.numpy as jnp
from jax import lax
from jax.experimental import pallas as pl
from jax.experimental.pallas import tpu as pltpu

MXU_DTYPE = jnp.bfloat16   # matmul-operand dtype (state / gate math stays f32)


def _round_up(x, m):
    return (x + m - 1) // m * m


# ------------------------------ per-layer kernel ------------------------------
def _make_lstm_kernel(hidden_p, tc, batch_p, project, mxu_dtype):
    Hp, Bp = hidden_p, batch_p

    def kernel(*refs):
        if project:
            (x_ref, h0_ref, c0_ref, b_ref, bp_ref,
             wih_hbm, whh_hbm, wp_hbm,
             out_ref, hT_ref, cT_ref,
             wih_v, whh_v, wp_v, gx, hch, h_sc, c_sc, sem) = refs
        else:
            (x_ref, h0_ref, c0_ref, b_ref,
             wih_hbm, whh_hbm,
             out_ref, hT_ref, cT_ref,
             wih_v, whh_v, gx, h_sc, c_sc, sem) = refs

        t = pl.program_id(0)

        # t == 0: start ALL weight DMAs, but only block on W_ih here; the
        # W_hh / W_proj transfers overlap with the chunk-0 input projection.
        @pl.when(t == 0)
        def _start_weight_dma():
            pltpu.make_async_copy(wih_hbm, wih_v, sem.at[0]).start()
            pltpu.make_async_copy(whh_hbm, whh_v, sem.at[1]).start()
            if project:
                pltpu.make_async_copy(wp_hbm, wp_v, sem.at[2]).start()
            pltpu.make_async_copy(wih_hbm, wih_v, sem.at[0]).wait()
            h_sc[...] = h0_ref[...].astype(jnp.float32)
            c_sc[...] = c0_ref[...].astype(jnp.float32)

        # Hoisted per-chunk input projection: one (Tc*Bp, D_in)x(D_in, 4Hp)
        # MXU matmul + bias, off the serial critical path.
        gx[...] = (jnp.dot(x_ref[...].astype(mxu_dtype), wih_v[...],
                           preferred_element_type=jnp.float32)
                   + b_ref[...])

        # W_hh is only needed from here on; its DMA hid behind the gx matmul.
        @pl.when(t == 0)
        def _wait_whh():
            pltpu.make_async_copy(whh_hbm, whh_v, sem.at[1]).wait()

        dst = hch if project else out_ref

        def step_body(step, carry):
            h, c = carry
            row = pl.multiple_of(step * Bp, 8)       # sublane-aligned offsets
            gates = (gx[pl.ds(row, Bp), :]
                     + jnp.dot(h.astype(mxu_dtype), whh_v[...],
                               preferred_element_type=jnp.float32))
            # Hp is a multiple of 128 -> lane-aligned gate slices.
            i = jax.nn.sigmoid(gates[:, 0 * Hp:1 * Hp])
            f = jax.nn.sigmoid(gates[:, 1 * Hp:2 * Hp])
            g = jnp.tanh(gates[:, 2 * Hp:3 * Hp])
            o = jax.nn.sigmoid(gates[:, 3 * Hp:4 * Hp])
            c = f * c + i * g
            h = o * jnp.tanh(c)
            dst[pl.ds(row, Bp), :] = h.astype(dst.dtype)
            return (h, c)

        h, c = lax.fori_loop(0, tc, step_body, (h_sc[...], c_sc[...]),
                             unroll=min(tc, 8))
        h_sc[...] = h
        c_sc[...] = c

        if project:
            # Fused output Linear for the whole chunk (lane-dense, padded to
            # 128 output lanes).  W_proj DMA hid behind the whole chunk.
            @pl.when(t == 0)
            def _wait_wp():
                pltpu.make_async_copy(wp_hbm, wp_v, sem.at[2]).wait()

            out_ref[...] = (jnp.dot(hch[...].astype(mxu_dtype), wp_v[...],
                                    preferred_element_type=jnp.float32)
                            + bp_ref[...]).astype(out_ref.dtype)

        @pl.when(t == pl.num_programs(0) - 1)
        def _finalize():
            hT_ref[...] = h.astype(hT_ref.dtype)
            cT_ref[...] = c.astype(cT_ref.dtype)

    return kernel


# --------------------------- VMEM budget / Tc sizing --------------------------
def _vmem_budget_bytes(frac=0.75, fallback=64 << 20):
    try:
        cap = pltpu.get_tpu_info().vmem_capacity_bytes
    except Exception:
        cap = fallback            # conservative: fits v7x's 64 MiB physical
    return max(int(cap * frac), 32 << 20)


def _layer_vmem_bytes(tc, bp, d_in, hp, d_out, project):
    rows = tc * bp
    total = d_in * 4 * hp * 2 + hp * 4 * hp * 2            # resident W_ih, W_hh
    total += rows * 4 * hp * 4                             # gx (f32)
    total += 2 * bp * hp * 4                               # h/c carries
    total += 2 * rows * d_in * 4                           # 2x-buffered x blocks
    total += 2 * rows * max(d_out, hp) * 4                 # 2x-buffered out blocks
    total += 2 * (2 * bp * hp * 4 + 4 * hp * 4 + d_out * 4)  # h0/c0/bias blocks
    total += 2 * 2 * bp * hp * 4                           # hT/cT blocks
    if project:
        total += hp * d_out * 2                            # resident W_proj
        total += rows * hp * 4                             # hch (f32)
    return total


def _pick_tc(T, bp, d_in, hp, d_out, project, budget):
    best = 1
    for tc in range(1, T + 1):
        if T % tc == 0 and _layer_vmem_bytes(tc, bp, d_in, hp, d_out,
                                             project) <= budget:
            best = tc
    return best


# ------------------------------ per-layer wrapper ------------------------------
def lstm_layer(x2d, h0, c0, w_ih, w_hh, bias2d, w_proj=None, b_proj2d=None,
               *, tc, vmem_limit, mxu_dtype=MXU_DTYPE):
    """One LSTM layer over time-major rows x2d: (T*Bp, D_in), row = t*Bp + b."""
    TBp, d_in = x2d.shape
    Bp, Hp = h0.shape
    T = TBp // Bp
    assert T * Bp == TBp and T % tc == 0
    n_chunks = T // tc
    rows = tc * Bp
    project = w_proj is not None
    d_out = w_proj.shape[1] if project else Hp

    in_specs = [
        pl.BlockSpec((rows, d_in), lambda t: (t, 0)),       # x chunk
        pl.BlockSpec((Bp, Hp), lambda t: (0, 0)),           # h0
        pl.BlockSpec((Bp, Hp), lambda t: (0, 0)),           # c0
        pl.BlockSpec((1, 4 * Hp), lambda t: (0, 0)),        # bias (i,f,g,o)
    ]
    inputs = [x2d, h0, c0, bias2d]
    if project:
        in_specs.append(pl.BlockSpec((1, d_out), lambda t: (0, 0)))
        inputs.append(b_proj2d)
    in_specs += [pl.BlockSpec(memory_space=pl.ANY),          # W_ih stays in HBM
                 pl.BlockSpec(memory_space=pl.ANY)]          # W_hh stays in HBM
    inputs += [w_ih, w_hh]
    if project:
        in_specs.append(pl.BlockSpec(memory_space=pl.ANY))   # W_proj in HBM
        inputs.append(w_proj)

    scratch = [pltpu.VMEM((d_in, 4 * Hp), mxu_dtype),        # W_ih resident copy
               pltpu.VMEM((Hp, 4 * Hp), mxu_dtype)]          # W_hh resident copy
    if project:
        scratch.append(pltpu.VMEM((Hp, d_out), mxu_dtype))   # W_proj resident
    scratch.append(pltpu.VMEM((rows, 4 * Hp), jnp.float32))  # gates_x chunk
    if project:
        scratch.append(pltpu.VMEM((rows, Hp), jnp.float32))  # h chunk (epilogue LHS)
    scratch += [pltpu.VMEM((Bp, Hp), jnp.float32),           # h carry
                pltpu.VMEM((Bp, Hp), jnp.float32),           # c carry
                pltpu.SemaphoreType.DMA((3 if project else 2,))]

    kernel = _make_lstm_kernel(Hp, tc, Bp, project, mxu_dtype)
    out, hT, cT = pl.pallas_call(
        kernel,
        out_shape=(jax.ShapeDtypeStruct((TBp, d_out), jnp.float32),
                   jax.ShapeDtypeStruct((Bp, Hp), jnp.float32),
                   jax.ShapeDtypeStruct((Bp, Hp), jnp.float32)),
        grid_spec=pltpu.PrefetchScalarGridSpec(
            num_scalar_prefetch=0,
            grid=(n_chunks,),
            in_specs=in_specs,
            out_specs=[pl.BlockSpec((rows, d_out), lambda t: (t, 0)),
                       pl.BlockSpec((Bp, Hp), lambda t: (0, 0)),
                       pl.BlockSpec((Bp, Hp), lambda t: (0, 0))],
            scratch_shapes=scratch),
        compiler_params=pltpu.CompilerParams(
            dimension_semantics=("arbitrary",),
            vmem_limit_bytes=int(vmem_limit)),
    )(*inputs)
    return out, hT, cT


# ------------------------------ parameter handling -----------------------------
def init_params(key, total_dims, hidden_dims, num_layers):
    """Deterministic init matching PyTorch parameter shapes (stored transposed)."""
    params = {"layers": []}
    bound = 1.0 / jnp.sqrt(hidden_dims)
    for layer in range(num_layers):
        d_in = total_dims if layer == 0 else hidden_dims
        key, k1, k2, k3, k4 = jax.random.split(key, 5)
        w_ih = jax.random.uniform(k1, (d_in, 4 * hidden_dims), jnp.float32,
                                  -bound, bound)
        w_hh = jax.random.uniform(k2, (hidden_dims, 4 * hidden_dims),
                                  jnp.float32, -bound, bound)
        b_ih = jax.random.uniform(k3, (4 * hidden_dims,), jnp.float32,
                                  -bound, bound)
        b_hh = jax.random.uniform(k4, (4 * hidden_dims,), jnp.float32,
                                  -bound, bound)
        params["layers"].append(
            {"w_ih": w_ih, "w_hh": w_hh, "bias": b_ih + b_hh})
    key, k5, k6 = jax.random.split(key, 3)
    params["aff_w"] = jax.random.uniform(k5, (hidden_dims, total_dims),
                                         jnp.float32, -bound, bound)
    params["aff_b"] = jax.random.uniform(k6, (total_dims,), jnp.float32,
                                         -bound, bound)
    return params


def _pad_gate_axis(w, H, Hp, axis):
    """Pad each of the 4 gate blocks (size H) to Hp along `axis` with zeros."""
    if Hp == H:
        return w
    parts = jnp.split(w, 4, axis=axis)
    widths = [(0, 0)] * w.ndim
    widths[axis] = (0, Hp - H)
    return jnp.concatenate([jnp.pad(p, widths) for p in parts], axis=axis)


def prepare_params(params, total_dims, hidden_dims, mxu_dtype=MXU_DTYPE):
    """Pad to lane/sublane quanta and cast to bf16 ONCE (not per forward)."""
    H = hidden_dims
    Hp = _round_up(H, 128)
    Dp = _round_up(total_dims, 128)
    prepared = {"layers": []}
    for idx, lp in enumerate(params["layers"]):
        wih = _pad_gate_axis(lp["w_ih"], H, Hp, axis=1)
        if idx > 0:                                   # input of layer>0 is padded h
            wih = jnp.pad(wih, ((0, Hp - H), (0, 0)))
        whh = jnp.pad(_pad_gate_axis(lp["w_hh"], H, Hp, axis=1),
                      ((0, Hp - H), (0, 0)))
        bias = _pad_gate_axis(lp["bias"], H, Hp, axis=0).reshape(1, 4 * Hp)
        prepared["layers"].append({"w_ih": wih.astype(mxu_dtype),
                                   "w_hh": whh.astype(mxu_dtype),
                                   "bias": bias.astype(jnp.float32)})
    prepared["aff_w"] = jnp.pad(
        params["aff_w"], ((0, Hp - H), (0, Dp - total_dims))).astype(mxu_dtype)
    prepared["aff_b"] = jnp.pad(
        params["aff_b"], (0, Dp - total_dims)).reshape(1, Dp).astype(jnp.float32)
    return prepared


# ------------------------------ LSTM_Decoder forward ---------------------------
def lstm_decoder_forward(prepared, data_in, h1, c1, *, tc=None):
    """data_in: (B, T, total_dims); h1, c1: (num_layers, B, hidden_dims)."""
    B, T, D = data_in.shape
    L, _, H = h1.shape
    Hp = prepared["layers"][0]["w_hh"].shape[0]
    Dp = prepared["aff_w"].shape[1]
    Bp = _round_up(B, 8)                      # sublane-aligned batch rows

    # Only transposes / pads: the tiny (total_dims / H-wide) tensors.
    x = jnp.transpose(data_in, (1, 0, 2))                     # (T, B, D)
    x = jnp.pad(x, ((0, 0), (0, Bp - B), (0, 0)))             # (T, Bp, D)
    x2d = x.reshape(T * Bp, D)

    h1p = jnp.pad(h1, ((0, 0), (0, Bp - B), (0, Hp - H)))
    c1p = jnp.pad(c1, ((0, 0), (0, Bp - B), (0, Hp - H)))

    budget = _vmem_budget_bytes()
    d_in_worst = max(D, Hp if L > 1 else D)
    if tc is None:
        tc = _pick_tc(T, Bp, d_in_worst, Hp, Dp, True, budget)

    hs, cs = [], []
    out2d = x2d
    for layer in range(L):
        lp = prepared["layers"][layer]
        last = layer == L - 1
        out2d, hT, cT = lstm_layer(
            out2d, h1p[layer], c1p[layer], lp["w_ih"], lp["w_hh"], lp["bias"],
            w_proj=prepared["aff_w"] if last else None,
            b_proj2d=prepared["aff_b"] if last else None,
            tc=tc, vmem_limit=budget)
        hs.append(hT[:B, :H])
        cs.append(cT[:B, :H])

    data_out = jnp.transpose(out2d.reshape(T, Bp, Dp), (1, 0, 2))[:B, :, :D]
    pred = data_out[:, :, 0]
    return data_out, pred, jnp.stack(hs), jnp.stack(cs)


# --------------------------- pure-JAX reference --------------------------------
def _reference(params, data_in, h1, c1, mxu_dtype=MXU_DTYPE):
    def mm(a, b):
        return jnp.dot(a.astype(mxu_dtype), b.astype(mxu_dtype),
                       preferred_element_type=jnp.float32)

    B, T, D = data_in.shape
    L = h1.shape[0]
    H = h1.shape[-1]
    x = jnp.transpose(data_in, (1, 0, 2))           # (T, B, D) time-major
    hs, cs = [], []
    for layer in range(L):
        lp = params["layers"][layer]

        def step(carry, xt, lp=lp):
            h, c = carry
            gates = mm(xt, lp["w_ih"]) + mm(h, lp["w_hh"]) + lp["bias"]
            i = jax.nn.sigmoid(gates[:, 0 * H:1 * H])
            f = jax.nn.sigmoid(gates[:, 1 * H:2 * H])
            g = jnp.tanh(gates[:, 2 * H:3 * H])
            o = jax.nn.sigmoid(gates[:, 3 * H:4 * H])
            c = f * c + i * g
            h = o * jnp.tanh(c)
            return (h, c), h

        (hT, cT), ys = jax.lax.scan(step, (h1[layer], c1[layer]), x)
        x = ys
        hs.append(hT)
        cs.append(cT)
    out = mm(x.reshape(T * B, H), params["aff_w"]).reshape(T, B, -1) \
        + params["aff_b"]
    data_out = jnp.transpose(out, (1, 0, 2))
    return data_out, data_out[:, :, 0], jnp.stack(hs), jnp.stack(cs)


if __name__ == "__main__":
    B, T, total_dims, hidden_dims, num_layers = 2, 8, 4, 32, 2

    key = jax.random.PRNGKey(0)
    kp, kx, kh, kc = jax.random.split(key, 4)
    params = init_params(kp, total_dims, hidden_dims, num_layers)
    prepared = prepare_params(params, total_dims, hidden_dims)   # pad+cast once

    data_in = jax.random.normal(kx, (B, T, total_dims), jnp.float32)
    h1 = jax.random.normal(kh, (num_layers, B, hidden_dims), jnp.float32)
    c1 = jax.random.normal(kc, (num_layers, B, hidden_dims), jnp.float32)

    fwd = jax.jit(lstm_decoder_forward)
    data_out, pred, h_f, c_f = fwd(prepared, data_in, h1, c1)
    jax.block_until_ready((data_out, pred, h_f, c_f))

    ref_matched = _reference(params, data_in, h1, c1, mxu_dtype=MXU_DTYPE)
    ref_f32 = _reference(params, data_in, h1, c1, mxu_dtype=jnp.float32)
    for got, want_m, want_f in zip((data_out, pred, h_f, c_f),
                                   ref_matched, ref_f32):
        assert got.shape == want_m.shape, (got.shape, want_m.shape)
        # tight check vs. same-precision (bf16-operand / f32-accum) reference
        assert jnp.max(jnp.abs(got - want_m)) < 2e-3
        # loose semantic check vs. full-f32 reference
        assert jnp.max(jnp.abs(got - want_f)) < 1e-1

    print("KERNEL_OK")
</pallas_src>

<mosaic_0001>
module attributes {stable_mosaic.version = 11 : i64} {
  func.func @kernel(%arg0: i32, %arg1: memref<64x4xf32, #tpu.memory_space<vmem>>, %arg2: memref<8x128xf32, #tpu.memory_space<vmem>>, %arg3: memref<8x128xf32, #tpu.memory_space<vmem>>, %arg4: memref<1x512xf32, #tpu.memory_space<vmem>>, %arg5: memref<4x512xbf16, #tpu.memory_space<any>>, %arg6: memref<128x512xbf16, #tpu.memory_space<any>>, %arg7: memref<64x128xf32, #tpu.memory_space<vmem>>, %arg8: memref<8x128xf32, #tpu.memory_space<vmem>>, %arg9: memref<8x128xf32, #tpu.memory_space<vmem>>, %arg10: memref<4x512xbf16, #tpu.memory_space<vmem>>, %arg11: memref<128x512xbf16, #tpu.memory_space<vmem>>, %arg12: memref<64x512xf32, #tpu.memory_space<vmem>>, %arg13: memref<8x128xf32, #tpu.memory_space<vmem>>, %arg14: memref<8x128xf32, #tpu.memory_space<vmem>>, %arg15: memref<2x!tpu.dma_semaphore, #tpu.memory_space<semaphore_mem>>) attributes {dimension_semantics = [#tpu.dimension_semantics<arbitrary>], iteration_bounds = array<i64: 1>, scalar_prefetch = 0 : i64, scratch_operands = 6 : i64, tpu.core_type = #tpu.core_type<tc>, window_params = [{transform_indices = @transform_0, window_bounds = array<i64: 64, 4>}, {pipeline_mode = #tpu.pipeline_mode<synchronous>, transform_indices = @transform_1, window_bounds = array<i64: 8, 128>}, {pipeline_mode = #tpu.pipeline_mode<synchronous>, transform_indices = @transform_2, window_bounds = array<i64: 8, 128>}, {pipeline_mode = #tpu.pipeline_mode<synchronous>, transform_indices = @transform_3, window_bounds = array<i64: 1, 512>}, {}, {}, {transform_indices = @transform_6, window_bounds = array<i64: 64, 128>}, {pipeline_mode = #tpu.pipeline_mode<synchronous>, transform_indices = @transform_7, window_bounds = array<i64: 8, 128>}, {pipeline_mode = #tpu.pipeline_mode<synchronous>, transform_indices = @transform_8, window_bounds = array<i64: 8, 128>}]} {
    %c0_i32 = arith.constant 0 : i32
    %0 = arith.cmpi eq, %arg0, %c0_i32 : i32
    %1 = arith.extui %0 : i1 to i32
    %c0_i32_0 = arith.constant 0 : i32
    %2 = arith.cmpi ne, %1, %c0_i32_0 : i32
    scf.if %2 {
      %c0_i32_93 = arith.constant 0 : i32
      %301 = tpu.memref_slice %arg15[%c0_i32_93] : memref<2x!tpu.dma_semaphore, #tpu.memory_space<semaphore_mem>> -> memref<1x!tpu.dma_semaphore, #tpu.memory_space<semaphore_mem>>
      %302 = tpu.memref_squeeze %301 : memref<1x!tpu.dma_semaphore, #tpu.memory_space<semaphore_mem>> -> memref<!tpu.dma_semaphore, #tpu.memory_space<semaphore_mem>>
      tpu.enqueue_dma source(%arg5 : memref<4x512xbf16, #tpu.memory_space<any>>) target(%arg10 : memref<4x512xbf16, #tpu.memory_space<vmem>>) target_semaphore(%302 : memref<!tpu.dma_semaphore, #tpu.memory_space<semaphore_mem>>)
      %c1_i32_94 = arith.constant 1 : i32
      %303 = tpu.memref_slice %arg15[%c1_i32_94] : memref<2x!tpu.dma_semaphore, #tpu.memory_space<semaphore_mem>> -> memref<1x!tpu.dma_semaphore, #tpu.memory_space<semaphore_mem>>
      %304 = tpu.memref_squeeze %303 : memref<1x!tpu.dma_semaphore, #tpu.memory_space<semaphore_mem>> -> memref<!tpu.dma_semaphore, #tpu.memory_space<semaphore_mem>>
      tpu.enqueue_dma source(%arg6 : memref<128x512xbf16, #tpu.memory_space<any>>) target(%arg11 : memref<128x512xbf16, #tpu.memory_space<vmem>>) target_semaphore(%304 : memref<!tpu.dma_semaphore, #tpu.memory_space<semaphore_mem>>)
      %c0_i32_95 = arith.constant 0 : i32
      %305 = tpu.memref_slice %arg15[%c0_i32_95] : memref<2x!tpu.dma_semaphore, #tpu.memory_space<semaphore_mem>> -> memref<1x!tpu.dma_semaphore, #tpu.memory_space<semaphore_mem>>
      %306 = tpu.memref_squeeze %305 : memref<1x!tpu.dma_semaphore, #tpu.memory_space<semaphore_mem>> -> memref<!tpu.dma_semaphore, #tpu.memory_space<semaphore_mem>>
      tpu.wait_dma2 semaphore(%306 : memref<!tpu.dma_semaphore, #tpu.memory_space<semaphore_mem>>) src(%arg5 : memref<4x512xbf16, #tpu.memory_space<any>>) dst(%arg10 : memref<4x512xbf16, #tpu.memory_space<vmem>>)
      %c0_96 = arith.constant 0 : index
      %c0_97 = arith.constant 0 : index
      %307 = vector.load %arg2[%c0_96, %c0_97] : memref<8x128xf32, #tpu.memory_space<vmem>>, vector<8x128xf32>
      %c0_98 = arith.constant 0 : index
      %c0_99 = arith.constant 0 : index
      %308 = vector.load %arg13[%c0_98, %c0_99] : memref<8x128xf32, #tpu.memory_space<vmem>>, vector<8x128xf32>
      tpu.vector_store %arg13[%c0_98, %c0_99], %307 {strides = array<i32>} : memref<8x128xf32, #tpu.memory_space<vmem>>, vector<8x128xf32>,
      %c0_100 = arith.constant 0 : index
      %c0_101 = arith.constant 0 : index
      %309 = vector.load %arg3[%c0_100, %c0_101] : memref<8x128xf32, #tpu.memory_space<vmem>>, vector<8x128xf32>
      %c0_102 = arith.constant 0 : index
      %c0_103 = arith.constant 0 : index
      %310 = vector.load %arg14[%c0_102, %c0_103] : memref<8x128xf32, #tpu.memory_space<vmem>>, vector<8x128xf32>
      tpu.vector_store %arg14[%c0_102, %c0_103], %309 {strides = array<i32>} : memref<8x128xf32, #tpu.memory_space<vmem>>, vector<8x128xf32>,
    } else {
    }
    %c0 = arith.constant 0 : index
    %c0_1 = arith.constant 0 : index
    %3 = vector.load %arg1[%c0, %c0_1] : memref<64x4xf32, #tpu.memory_space<vmem>>, vector<64x4xf32>
    %4 = arith.truncf %3 : vector<64x4xf32> to vector<64x4xbf16>
    %c0_2 = arith.constant 0 : index
    %c0_3 = arith.constant 0 : index
    %5 = vector.load %arg10[%c0_2, %c0_3] : memref<4x512xbf16, #tpu.memory_space<vmem>>, vector<4x512xbf16>
    %cst = arith.constant dense<0.000000e+00> : vector<64x512xf32>
    %6 = tpu.matmul %4, %5, %cst {dimension_numbers = #tpu.dot_dimension_numbers<[1], [0], [0], [1], [0, 0, 1, 1], [], []>} : vector<64x4xbf16>, vector<4x512xbf16>, vector<64x512xf32> -> vector<64x512xf32>
    %c0_4 = arith.constant 0 : index
    %c0_5 = arith.constant 0 : index
    %7 = vector.load %arg4[%c0_4, %c0_5] : memref<1x512xf32, #tpu.memory_space<vmem>>, vector<1x512xf32>
    %8 = vector.broadcast %7 : vector<1x512xf32> to vector<64x512xf32>
    %9 = arith.addf %6, %8 : vector<64x512xf32>
    %c0_6 = arith.constant 0 : index
    %c0_7 = arith.constant 0 : index
    %10 = vector.load %arg12[%c0_6, %c0_7] : memref<64x512xf32, #tpu.memory_space<vmem>>, vector<64x512xf32>
    tpu.vector_store %arg12[%c0_6, %c0_7], %9 {strides = array<i32>} : memref<64x512xf32, #tpu.memory_space<vmem>>, vector<64x512xf32>,
    %c0_i32_8 = arith.constant 0 : i32
    %11 = arith.cmpi eq, %arg0, %c0_i32_8 : i32
    %12 = arith.extui %11 : i1 to i32
    %c0_i32_9 = arith.constant 0 : i32
    %13 = arith.cmpi ne, %12, %c0_i32_9 : i32
    scf.if %13 {
      %c1_i32_93 = arith.constant 1 : i32
      %301 = tpu.memref_slice %arg15[%c1_i32_93] : memref<2x!tpu.dma_semaphore, #tpu.memory_space<semaphore_mem>> -> memref<1x!tpu.dma_semaphore, #tpu.memory_space<semaphore_mem>>
      %302 = tpu.memref_squeeze %301 : memref<1x!tpu.dma_semaphore, #tpu.memory_space<semaphore_mem>> -> memref<!tpu.dma_semaphore, #tpu.memory_space<semaphore_mem>>
      tpu.wait_dma2 semaphore(%302 : memref<!tpu.dma_semaphore, #tpu.memory_space<semaphore_mem>>) src(%arg6 : memref<128x512xbf16, #tpu.memory_space<any>>) dst(%arg11 : memref<128x512xbf16, #tpu.memory_space<vmem>>)
    } else {
    }
    %c0_10 = arith.constant 0 : index
    %c0_11 = arith.constant 0 : index
    %14 = vector.load %arg13[%c0_10, %c0_11] : memref<8x128xf32, #tpu.memory_space<vmem>>, vector<8x128xf32>
    %c0_12 = arith.constant 0 : index
    %c0_13 = arith.constant 0 : index
    %15 = vector.load %arg14[%c0_12, %c0_13] : memref<8x128xf32, #tpu.memory_space<vmem>>, vector<8x128xf32>
    %c0_i32_14 = arith.constant 0 : i32
    %c8_i32 = arith.constant 8 : i32
    %16 = arith.muli %c0_i32_14, %c8_i32 : i32
    %17 = tpu.assume_multiple %16, 8 : i32
    %18 = arith.index_cast %17 : i32 to index
    %c0_15 = arith.constant 0 : index
    %19 = vector.load %arg12[%18, %c0_15] : memref<64x512xf32, #tpu.memory_space<vmem>>, vector<8x512xf32>
    %20 = arith.truncf %14 : vector<8x128xf32> to vector<8x128xbf16>
    %c0_16 = arith.constant 0 : index
    %c0_17 = arith.constant 0 : index
    %21 = vector.load %arg11[%c0_16, %c0_17] : memref<128x512xbf16, #tpu.memory_space<vmem>>, vector<128x512xbf16>
    %cst_18 = arith.constant dense<0.000000e+00> : vector<8x512xf32>
    %22 = tpu.matmul %20, %21, %cst_18 {dimension_numbers = #tpu.dot_dimension_numbers<[1], [0], [0], [1], [0, 0, 1, 1], [], []>} : vector<8x128xbf16>, vector<128x512xbf16>, vector<8x512xf32> -> vector<8x512xf32>
    %23 = arith.addf %19, %22 : vector<8x512xf32>
    %24 = vector.extract_strided_slice %23 {offsets = [0, 0], sizes = [8, 128], strides = [1, 1]} : vector<8x512xf32> to vector<8x128xf32>
    %25 = arith.negf %24 : vector<8x128xf32>
    %26 = math.exp %25 : vector<8x128xf32>
    %cst_19 = arith.constant 1.000000e+00 : f32
    %27 = vector.broadcast %cst_19 : f32 to vector<8x128xf32>
    %28 = arith.addf %27, %26 : vector<8x128xf32>
    %29 = arith.divf %27, %28 : vector<8x128xf32>
    %30 = vector.extract_strided_slice %23 {offsets = [0, 128], sizes = [8, 128], strides = [1, 1]} : vector<8x512xf32> to vector<8x128xf32>
    %31 = arith.negf %30 : vector<8x128xf32>
    %32 = math.exp %31 : vector<8x128xf32>
    %cst_20 = arith.constant 1.000000e+00 : f32
    %33 = vector.broadcast %cst_20 : f32 to vector<8x128xf32>
    %34 = arith.addf %33, %32 : vector<8x128xf32>
    %35 = arith.divf %33, %34 : vector<8x128xf32>
    %36 = vector.extract_strided_slice %23 {offsets = [0, 256], sizes = [8, 128], strides = [1, 1]} : vector<8x512xf32> to vector<8x128xf32>
    %37 = math.tanh %36 : vector<8x128xf32>
    %38 = vector.extract_strided_slice %23 {offsets = [0, 384], sizes = [8, 128], strides = [1, 1]} : vector<8x512xf32> to vector<8x128xf32>
    %39 = arith.negf %38 : vector<8x128xf32>
    %40 = math.exp %39 : vector<8x128xf32>
    %cst_21 = arith.constant 1.000000e+00 : f32
    %41 = vector.broadcast %cst_21 : f32 to vector<8x128xf32>
    %42 = arith.addf %41, %40 : vector<8x128xf32>
    %43 = arith.divf %41, %42 : vector<8x128xf32>
    %44 = arith.mulf %35, %15 : vector<8x128xf32>
    %45 = arith.mulf %29, %37 : vector<8x128xf32>
    %46 = arith.addf %44, %45 : vector<8x128xf32>
    %47 = math.tanh %46 : vector<8x128xf32>
    %48 = arith.mulf %43, %47 : vector<8x128xf32>
    %49 = arith.index_cast %17 : i32 to index
    %c0_22 = arith.constant 0 : index
    %50 = vector.load %arg7[%49, %c0_22] : memref<64x128xf32, #tpu.memory_space<vmem>>, vector<8x128xf32>
    tpu.vector_store %arg7[%49, %c0_22], %48 {strides = array<i32>} : memref<64x128xf32, #tpu.memory_space<vmem>>, vector<8x128xf32>,
    %c1_i32 = arith.constant 1 : i32
    %c8_i32_23 = arith.constant 8 : i32
    %51 = arith.muli %c1_i32, %c8_i32_23 : i32
    %52 = tpu.assume_multiple %51, 8 : i32
    %53 = arith.index_cast %52 : i32 to index
    %c0_24 = arith.constant 0 : index
    %54 = vector.load %arg12[%53, %c0_24] : memref<64x512xf32, #tpu.memory_space<vmem>>, vector<8x512xf32>
    %55 = arith.truncf %48 : vector<8x128xf32> to vector<8x128xbf16>
    %c0_25 = arith.constant 0 : index
    %c0_26 = arith.constant 0 : index
    %56 = vector.load %arg11[%c0_25, %c0_26] : memref<128x512xbf16, #tpu.memory_space<vmem>>, vector<128x512xbf16>
    %cst_27 = arith.constant dense<0.000000e+00> : vector<8x512xf32>
    %57 = tpu.matmul %55, %56, %cst_27 {dimension_numbers = #tpu.dot_dimension_numbers<[1], [0], [0], [1], [0, 0, 1, 1], [], []>} : vector<8x128xbf16>, vector<128x512xbf16>, vector<8x512xf32> -> vector<8x512xf32>
    %58 = arith.addf %54, %57 : vector<8x512xf32>
    %59 = vector.extract_strided_slice %58 {offsets = [0, 0], sizes = [8, 128], strides = [1, 1]} : vector<8x512xf32> to vector<8x128xf32>
    %60 = arith.negf %59 : vector<8x128xf32>
    %61 = math.exp %60 : vector<8x128xf32>
    %cst_28 = arith.constant 1.000000e+00 : f32
    %62 = vector.broadcast %cst_28 : f32 to vector<8x128xf32>
    %63 = arith.addf %62, %61 : vector<8x128xf32>
    %64 = arith.divf %62, %63 : vector<8x128xf32>
    %65 = vector.extract_strided_slice %58 {offsets = [0, 128], sizes = [8, 128], strides = [1, 1]} : vector<8x512xf32> to vector<8x128xf32>
    %66 = arith.negf %65 : vector<8x128xf32>
    %67 = math.exp %66 : vector<8x128xf32>
    %cst_29 = arith.constant 1.000000e+00 : f32
    %68 = vector.broadcast %cst_29 : f32 to vector<8x128xf32>
    %69 = arith.addf %68, %67 : vector<8x128xf32>
    %70 = arith.divf %68, %69 : vector<8x128xf32>
    %71 = vector.extract_strided_slice %58 {offsets = [0, 256], sizes = [8, 128], strides = [1, 1]} : vector<8x512xf32> to vector<8x128xf32>
    %72 = math.tanh %71 : vector<8x128xf32>
    %73 = vector.extract_strided_slice %58 {offsets = [0, 384], sizes = [8, 128], strides = [1, 1]} : vector<8x512xf32> to vector<8x128xf32>
    %74 = arith.negf %73 : vector<8x128xf32>
    %75 = math.exp %74 : vector<8x128xf32>
    %cst_30 = arith.constant 1.000000e+00 : f32
    %76 = vector.broadcast %cst_30 : f32 to vector<8x128xf32>
    %77 = arith.addf %76, %75 : vector<8x128xf32>
    %78 = arith.divf %76, %77 : vector<8x128xf32>
    %79 = arith.mulf %70, %46 : vector<8x128xf32>
    %80 = arith.mulf %64, %72 : vector<8x128xf32>
    %81 = arith.addf %79, %80 : vector<8x128xf32>
    %82 = math.tanh %81 : vector<8x128xf32>
    %83 = arith.mulf %78, %82 : vector<8x128xf32>
    %84 = arith.index_cast %52 : i32 to index
    %c0_31 = arith.constant 0 : index
    %85 = vector.load %arg7[%84, %c0_31] : memref<64x128xf32, #tpu.memory_space<vmem>>, vector<8x128xf32>
    tpu.vector_store %arg7[%84, %c0_31], %83 {strides = array<i32>} : memref<64x128xf32, #tpu.memory_space<vmem>>, vector<8x128xf32>,
    %c2_i32 = arith.constant 2 : i32
    %c8_i32_32 = arith.constant 8 : i32
    %86 = arith.muli %c2_i32, %c8_i32_32 : i32
    %87 = tpu.assume_multiple %86, 8 : i32
    %88 = arith.index_cast %87 : i32 to index
    %c0_33 = arith.constant 0 : index
    %89 = vector.load %arg12[%88, %c0_33] : memref<64x512xf32, #tpu.memory_space<vmem>>, vector<8x512xf32>
    %90 = arith.truncf %83 : vector<8x128xf32> to vector<8x128xbf16>
    %c0_34 = arith.constant 0 : index
    %c0_35 = arith.constant 0 : index
    %91 = vector.load %arg11[%c0_34, %c0_35] : memref<128x512xbf16, #tpu.memory_space<vmem>>, vector<128x512xbf16>
    %cst_36 = arith.constant dense<0.000000e+00> : vector<8x512xf32>
    %92 = tpu.matmul %90, %91, %cst_36 {dimension_numbers = #tpu.dot_dimension_numbers<[1], [0], [0], [1], [0, 0, 1, 1], [], []>} : vector<8x128xbf16>, vector<128x512xbf16>, vector<8x512xf32> -> vector<8x512xf32>
    %93 = arith.addf %89, %92 : vector<8x512xf32>
    %94 = vector.extract_strided_slice %93 {offsets = [0, 0], sizes = [8, 128], strides = [1, 1]} : vector<8x512xf32> to vector<8x128xf32>
    %95 = arith.negf %94 : vector<8x128xf32>
    %96 = math.exp %95 : vector<8x128xf32>
    %cst_37 = arith.constant 1.000000e+00 : f32
    %97 = vector.broadcast %cst_37 : f32 to vector<8x128xf32>
    %98 = arith.addf %97, %96 : vector<8x128xf32>
    %99 = arith.divf %97, %98 : vector<8x128xf32>
    %100 = vector.extract_strided_slice %93 {offsets = [0, 128], sizes = [8, 128], strides = [1, 1]} : vector<8x512xf32> to vector<8x128xf32>
    %101 = arith.negf %100 : vector<8x128xf32>
    %102 = math.exp %101 : vector<8x128xf32>
    %cst_38 = arith.constant 1.000000e+00 : f32
    %103 = vector.broadcast %cst_38 : f32 to vector<8x128xf32>
    %104 = arith.addf %103, %102 : vector<8x128xf32>
    %105 = arith.divf %103, %104 : vector<8x128xf32>
    %106 = vector.extract_strided_slice %93 {offsets = [0, 256], sizes = [8, 128], strides = [1, 1]} : vector<8x512xf32> to vector<8x128xf32>
    %107 = math.tanh %106 : vector<8x128xf32>
    %108 = vector.extract_strided_slice %93 {offsets = [0, 384], sizes = [8, 128], strides = [1, 1]} : vector<8x512xf32> to vector<8x128xf32>
    %109 = arith.negf %108 : vector<8x128xf32>
    %110 = math.exp %109 : vector<8x128xf32>
    %cst_39 = arith.constant 1.000000e+00 : f32
    %111 = vector.broadcast %cst_39 : f32 to vector<8x128xf32>
    %112 = arith.addf %111, %110 : vector<8x128xf32>
    %113 = arith.divf %111, %112 : vector<8x128xf32>
    %114 = arith.mulf %105, %81 : vector<8x128xf32>
    %115 = arith.mulf %99, %107 : vector<8x128xf32>
    %116 = arith.addf %114, %115 : vector<8x128xf32>
    %117 = math.tanh %116 : vector<8x128xf32>
    %118 = arith.mulf %113, %117 : vector<8x128xf32>
    %119 = arith.index_cast %87 : i32 to index
    %c0_40 = arith.constant 0 : index
    %120 = vector.load %arg7[%119, %c0_40] : memref<64x128xf32, #tpu.memory_space<vmem>>, vector<8x128xf32>
    tpu.vector_store %arg7[%119, %c0_40], %118 {strides = array<i32>} : memref<64x128xf32, #tpu.memory_space<vmem>>, vector<8x128xf32>,
    %c3_i32 = arith.constant 3 : i32
    %c8_i32_41 = arith.constant 8 : i32
    %121 = arith.muli %c3_i32, %c8_i32_41 : i32
    %122 = tpu.assume_multiple %121, 8 : i32
    %123 = arith.index_cast %122 : i32 to index
    %c0_42 = arith.constant 0 : index
    %124 = vector.load %arg12[%123, %c0_42] : memref<64x512xf32, #tpu.memory_space<vmem>>, vector<8x512xf32>
    %125 = arith.truncf %118 : vector<8x128xf32> to vector<8x128xbf16>
    %c0_43 = arith.constant 0 : index
    %c0_44 = arith.constant 0 : index
    %126 = vector.load %arg11[%c0_43, %c0_44] : memref<128x512xbf16, #tpu.memory_space<vmem>>, vector<128x512xbf16>
    %cst_45 = arith.constant dense<0.000000e+00> : vector<8x512xf32>
    %127 = tpu.matmul %125, %126, %cst_45 {dimension_numbers = #tpu.dot_dimension_numbers<[1], [0], [0], [1], [0, 0, 1, 1], [], []>} : vector<8x128xbf16>, vector<128x512xbf16>, vector<8x512xf32> -> vector<8x512xf32>
    %128 = arith.addf %124, %127 : vector<8x512xf32>
    %129 = vector.extract_strided_slice %128 {offsets = [0, 0], sizes = [8, 128], strides = [1, 1]} : vector<8x512xf32> to vector<8x128xf32>
    %130 = arith.negf %129 : vector<8x128xf32>
    %131 = math.exp %130 : vector<8x128xf32>
    %cst_46 = arith.constant 1.000000e+00 : f32
    %132 = vector.broadcast %cst_46 : f32 to vector<8x128xf32>
    %133 = arith.addf %132, %131 : vector<8x128xf32>
    %134 = arith.divf %132, %133 : vector<8x128xf32>
    %135 = vector.extract_strided_slice %128 {offsets = [0, 128], sizes = [8, 128], strides = [1, 1]} : vector<8x512xf32> to vector<8x128xf32>
    %136 = arith.negf %135 : vector<8x128xf32>
    %137 = math.exp %136 : vector<8x128xf32>
    %cst_47 = arith.constant 1.000000e+00 : f32
    %138 = vector.broadcast %cst_47 : f32 to vector<8x128xf32>
    %139 = arith.addf %138, %137 : vector<8x128xf32>
    %140 = arith.divf %138, %139 : vector<8x128xf32>
    %141 = vector.extract_strided_slice %128 {offsets = [0, 256], sizes = [8, 128], strides = [1, 1]} : vector<8x512xf32> to vector<8x128xf32>
    %142 = math.tanh %141 : vector<8x128xf32>
    %143 = vector.extract_strided_slice %128 {offsets = [0, 384], sizes = [8, 128], strides = [1, 1]} : vector<8x512xf32> to vector<8x128xf32>
    %144 = arith.negf %143 : vector<8x128xf32>
    %145 = math.exp %144 : vector<8x128xf32>
    %cst_48 = arith.constant 1.000000e+00 : f32
    %146 = vector.broadcast %cst_48 : f32 to vector<8x128xf32>
    %147 = arith.addf %146, %145 : vector<8x128xf32>
    %148 = arith.divf %146, %147 : vector<8x128xf32>
    %149 = arith.mulf %140, %116 : vector<8x128xf32>
    %150 = arith.mulf %134, %142 : vector<8x128xf32>
    %151 = arith.addf %149, %150 : vector<8x128xf32>
    %152 = math.tanh %151 : vector<8x128xf32>
    %153 = arith.mulf %148, %152 : vector<8x128xf32>
    %154 = arith.index_cast %122 : i32 to index
    %c0_49 = arith.constant 0 : index
    %155 = vector.load %arg7[%154, %c0_49] : memref<64x128xf32, #tpu.memory_space<vmem>>, vector<8x128xf32>
    tpu.vector_store %arg7[%154, %c0_49], %153 {strides = array<i32>} : memref<64x128xf32, #tpu.memory_space<vmem>>, vector<8x128xf32>,
    %c4_i32 = arith.constant 4 : i32
    %c8_i32_50 = arith.constant 8 : i32
    %156 = arith.muli %c4_i32, %c8_i32_50 : i32
    %157 = tpu.assume_multiple %156, 8 : i32
    %158 = arith.index_cast %157 : i32 to index
    %c0_51 = arith.constant 0 : index
    %159 = vector.load %arg12[%158, %c0_51] : memref<64x512xf32, #tpu.memory_space<vmem>>, vector<8x512xf32>
    %160 = arith.truncf %153 : vector<8x128xf32> to vector<8x128xbf16>
    %c0_52 = arith.constant 0 : index
    %c0_53 = arith.constant 0 : index
    %161 = vector.load %arg11[%c0_52, %c0_53] : memref<128x512xbf16, #tpu.memory_space<vmem>>, vector<128x512xbf16>
    %cst_54 = arith.constant dense<0.000000e+00> : vector<8x512xf32>
    %162 = tpu.matmul %160, %161, %cst_54 {dimension_numbers = #tpu.dot_dimension_numbers<[1], [0], [0], [1], [0, 0, 1, 1], [], []>} : vector<8x128xbf16>, vector<128x512xbf16>, vector<8x512xf32> -> vector<8x512xf32>
    %163 = arith.addf %159, %162 : vector<8x512xf32>
    %164 = vector.extract_strided_slice %163 {offsets = [0, 0], sizes = [8, 128], strides = [1, 1]} : vector<8x512xf32> to vector<8x128xf32>
    %165 = arith.negf %164 : vector<8x128xf32>
    %166 = math.exp %165 : vector<8x128xf32>
    %cst_55 = arith.constant 1.000000e+00 : f32
    %167 = vector.broadcast %cst_55 : f32 to vector<8x128xf32>
    %168 = arith.addf %167, %166 : vector<8x128xf32>
    %169 = arith.divf %167, %168 : vector<8x128xf32>
    %170 = vector.extract_strided_slice %163 {offsets = [0, 128], sizes = [8, 128], strides = [1, 1]} : vector<8x512xf32> to vector<8x128xf32>
    %171 = arith.negf %170 : vector<8x128xf32>
    %172 = math.exp %171 : vector<8x128xf32>
    %cst_56 = arith.constant 1.000000e+00 : f32
    %173 = vector.broadcast %cst_56 : f32 to vector<8x128xf32>
    %174 = arith.addf %173, %172 : vector<8x128xf32>
    %175 = arith.divf %173, %174 : vector<8x128xf32>
    %176 = vector.extract_strided_slice %163 {offsets = [0, 256], sizes = [8, 128], strides = [1, 1]} : vector<8x512xf32> to vector<8x128xf32>
    %177 = math.tanh %176 : vector<8x128xf32>
    %178 = vector.extract_strided_slice %163 {offsets = [0, 384], sizes = [8, 128], strides = [1, 1]} : vector<8x512xf32> to vector<8x128xf32>
    %179 = arith.negf %178 : vector<8x128xf32>
    %180 = math.exp %179 : vector<8x128xf32>
    %cst_57 = arith.constant 1.000000e+00 : f32
    %181 = vector.broadcast %cst_57 : f32 to vector<8x128xf32>
    %182 = arith.addf %181, %180 : vector<8x128xf32>
    %183 = arith.divf %181, %182 : vector<8x128xf32>
    %184 = arith.mulf %175, %151 : vector<8x128xf32>
    %185 = arith.mulf %169, %177 : vector<8x128xf32>
    %186 = arith.addf %184, %185 : vector<8x128xf32>
    %187 = math.tanh %186 : vector<8x128xf32>
    %188 = arith.mulf %183, %187 : vector<8x128xf32>
    %189 = arith.index_cast %157 : i32 to index
    %c0_58 = arith.constant 0 : index
    %190 = vector.load %arg7[%189, %c0_58] : memref<64x128xf32, #tpu.memory_space<vmem>>, vector<8x128xf32>
    tpu.vector_store %arg7[%189, %c0_58], %188 {strides = array<i32>} : memref<64x128xf32, #tpu.memory_space<vmem>>, vector<8x128xf32>,
    %c5_i32 = arith.constant 5 : i32
    %c8_i32_59 = arith.constant 8 : i32
    %191 = arith.muli %c5_i32, %c8_i32_59 : i32
    %192 = tpu.assume_multiple %191, 8 : i32
    %193 = arith.index_cast %192 : i32 to index
    %c0_60 = arith.constant 0 : index
    %194 = vector.load %arg12[%193, %c0_60] : memref<64x512xf32, #tpu.memory_space<vmem>>, vector<8x512xf32>
    %195 = arith.truncf %188 : vector<8x128xf32> to vector<8x128xbf16>
    %c0_61 = arith.constant 0 : index
    %c0_62 = arith.constant 0 : index
    %196 = vector.load %arg11[%c0_61, %c0_62] : memref<128x512xbf16, #tpu.memory_space<vmem>>, vector<128x512xbf16>
    %cst_63 = arith.constant dense<0.000000e+00> : vector<8x512xf32>
    %197 = tpu.matmul %195, %196, %cst_63 {dimension_numbers = #tpu.dot_dimension_numbers<[1], [0], [0], [1], [0, 0, 1, 1], [], []>} : vector<8x128xbf16>, vector<128x512xbf16>, vector<8x512xf32> -> vector<8x512xf32>
    %198 = arith.addf %194, %197 : vector<8x512xf32>
    %199 = vector.extract_strided_slice %198 {offsets = [0, 0], sizes = [8, 128], strides = [1, 1]} : vector<8x512xf32> to vector<8x128xf32>
    %200 = arith.negf %199 : vector<8x128xf32>
    %201 = math.exp %200 : vector<8x128xf32>
    %cst_64 = arith.constant 1.000000e+00 : f32
    %202 = vector.broadcast %cst_64 : f32 to vector<8x128xf32>
    %203 = arith.addf %202, %201 : vector<8x128xf32>
    %204 = arith.divf %202, %203 : vector<8x128xf32>
    %205 = vector.extract_strided_slice %198 {offsets = [0, 128], sizes = [8, 128], strides = [1, 1]} : vector<8x512xf32> to vector<8x128xf32>
    %206 = arith.negf %205 : vector<8x128xf32>
    %207 = math.exp %206 : vector<8x128xf32>
    %cst_65 = arith.constant 1.000000e+00 : f32
    %208 = vector.broadcast %cst_65 : f32 to vector<8x128xf32>
    %209 = arith.addf %208, %207 : vector<8x128xf32>
    %210 = arith.divf %208, %209 : vector<8x128xf32>
    %211 = vector.extract_strided_slice %198 {offsets = [0, 256], sizes = [8, 128], strides = [1, 1]} : vector<8x512xf32> to vector<8x128xf32>
    %212 = math.tanh %211 : vector<8x128xf32>
    %213 = vector.extract_strided_slice %198 {offsets = [0, 384], sizes = [8, 128], strides = [1, 1]} : vector<8x512xf32> to vector<8x128xf32>
    %214 = arith.negf %213 : vector<8x128xf32>
    %215 = math.exp %214 : vector<8x128xf32>
    %cst_66 = arith.constant 1.000000e+00 : f32
    %216 = vector.broadcast %cst_66 : f32 to vector<8x128xf32>
    %217 = arith.addf %216, %215 : vector<8x128xf32>
    %218 = arith.divf %216, %217 : vector<8x128xf32>
    %219 = arith.mulf %210, %186 : vector<8x128xf32>
    %220 = arith.mulf %204, %212 : vector<8x128xf32>
    %221 = arith.addf %219, %220 : vector<8x128xf32>
    %222 = math.tanh %221 : vector<8x128xf32>
    %223 = arith.mulf %218, %222 : vector<8x128xf32>
    %224 = arith.index_cast %192 : i32 to index
    %c0_67 = arith.constant 0 : index
    %225 = vector.load %arg7[%224, %c0_67] : memref<64x128xf32, #tpu.memory_space<vmem>>, vector<8x128xf32>
    tpu.vector_store %arg7[%224, %c0_67], %223 {strides = array<i32>} : memref<64x128xf32, #tpu.memory_space<vmem>>, vector<8x128xf32>,
    %c6_i32 = arith.constant 6 : i32
    %c8_i32_68 = arith.constant 8 : i32
    %226 = arith.muli %c6_i32, %c8_i32_68 : i32
    %227 = tpu.assume_multiple %226, 8 : i32
    %228 = arith.index_cast %227 : i32 to index
    %c0_69 = arith.constant 0 : index
    %229 = vector.load %arg12[%228, %c0_69] : memref<64x512xf32, #tpu.memory_space<vmem>>, vector<8x512xf32>
    %230 = arith.truncf %223 : vector<8x128xf32> to vector<8x128xbf16>
    %c0_70 = arith.constant 0 : index
    %c0_71 = arith.constant 0 : index
    %231 = vector.load %arg11[%c0_70, %c0_71] : memref<128x512xbf16, #tpu.memory_space<vmem>>, vector<128x512xbf16>
    %cst_72 = arith.constant dense<0.000000e+00> : vector<8x512xf32>
    %232 = tpu.matmul %230, %231, %cst_72 {dimension_numbers = #tpu.dot_dimension_numbers<[1], [0], [0], [1], [0, 0, 1, 1], [], []>} : vector<8x128xbf16>, vector<128x512xbf16>, vector<8x512xf32> -> vector<8x512xf32>
    %233 = arith.addf %229, %232 : vector<8x512xf32>
    %234 = vector.extract_strided_slice %233 {offsets = [0, 0], sizes = [8, 128], strides = [1, 1]} : vector<8x512xf32> to vector<8x128xf32>
    %235 = arith.negf %234 : vector<8x128xf32>
    %236 = math.exp %235 : vector<8x128xf32>
    %cst_73 = arith.constant 1.000000e+00 : f32
    %237 = vector.broadcast %cst_73 : f32 to vector<8x128xf32>
    %238 = arith.addf %237, %236 : vector<8x128xf32>
    %239 = arith.divf %237, %238 : vector<8x128xf32>
    %240 = vector.extract_strided_slice %233 {offsets = [0, 128], sizes = [8, 128], strides = [1, 1]} : vector<8x512xf32> to vector<8x128xf32>
    %241 = arith.negf %240 : vector<8x128xf32>
    %242 = math.exp %241 : vector<8x128xf32>
    %cst_74 = arith.constant 1.000000e+00 : f32
    %243 = vector.broadcast %cst_74 : f32 to vector<8x128xf32>
    %244 = arith.addf %243, %242 : vector<8x128xf32>
    %245 = arith.divf %243, %244 : vector<8x128xf32>
    %246 = vector.extract_strided_slice %233 {offsets = [0, 256], sizes = [8, 128], strides = [1, 1]} : vector<8x512xf32> to vector<8x128xf32>
    %247 = math.tanh %246 : vector<8x128xf32>
    %248 = vector.extract_strided_slice %233 {offsets = [0, 384], sizes = [8, 128], strides = [1, 1]} : vector<8x512xf32> to vector<8x128xf32>
    %249 = arith.negf %248 : vector<8x128xf32>
    %250 = math.exp %249 : vector<8x128xf32>
    %cst_75 = arith.constant 1.000000e+00 : f32
    %251 = vector.broadcast %cst_75 : f32 to vector<8x128xf32>
    %252 = arith.addf %251, %250 : vector<8x128xf32>
    %253 = arith.divf %251, %252 : vector<8x128xf32>
    %254 = arith.mulf %245, %221 : vector<8x128xf32>
    %255 = arith.mulf %239, %247 : vector<8x128xf32>
    %256 = arith.addf %254, %255 : vector<8x128xf32>
    %257 = math.tanh %256 : vector<8x128xf32>
    %258 = arith.mulf %253, %257 : vector<8x128xf32>
    %259 = arith.index_cast %227 : i32 to index
    %c0_76 = arith.constant 0 : index
    %260 = vector.load %arg7[%259, %c0_76] : memref<64x128xf32, #tpu.memory_space<vmem>>, vector<8x128xf32>
    tpu.vector_store %arg7[%259, %c0_76], %258 {strides = array<i32>} : memref<64x128xf32, #tpu.memory_space<vmem>>, vector<8x128xf32>,
    %c7_i32 = arith.constant 7 : i32
    %c8_i32_77 = arith.constant 8 : i32
    %261 = arith.muli %c7_i32, %c8_i32_77 : i32
    %262 = tpu.assume_multiple %261, 8 : i32
    %263 = arith.index_cast %262 : i32 to index
    %c0_78 = arith.constant 0 : index
    %264 = vector.load %arg12[%263, %c0_78] : memref<64x512xf32, #tpu.memory_space<vmem>>, vector<8x512xf32>
    %265 = arith.truncf %258 : vector<8x128xf32> to vector<8x128xbf16>
    %c0_79 = arith.constant 0 : index
    %c0_80 = arith.constant 0 : index
    %266 = vector.load %arg11[%c0_79, %c0_80] : memref<128x512xbf16, #tpu.memory_space<vmem>>, vector<128x512xbf16>
    %cst_81 = arith.constant dense<0.000000e+00> : vector<8x512xf32>
    %267 = tpu.matmul %265, %266, %cst_81 {dimension_numbers = #tpu.dot_dimension_numbers<[1], [0], [0], [1], [0, 0, 1, 1], [], []>} : vector<8x128xbf16>, vector<128x512xbf16>, vector<8x512xf32> -> vector<8x512xf32>
    %268 = arith.addf %264, %267 : vector<8x512xf32>
    %269 = vector.extract_strided_slice %268 {offsets = [0, 0], sizes = [8, 128], strides = [1, 1]} : vector<8x512xf32> to vector<8x128xf32>
    %270 = arith.negf %269 : vector<8x128xf32>
    %271 = math.exp %270 : vector<8x128xf32>
    %cst_82 = arith.constant 1.000000e+00 : f32
    %272 = vector.broadcast %cst_82 : f32 to vector<8x128xf32>
    %273 = arith.addf %272, %271 : vector<8x128xf32>
    %274 = arith.divf %272, %273 : vector<8x128xf32>
    %275 = vector.extract_strided_slice %268 {offsets = [0, 128], sizes = [8, 128], strides = [1, 1]} : vector<8x512xf32> to vector<8x128xf32>
    %276 = arith.negf %275 : vector<8x128xf32>
    %277 = math.exp %276 : vector<8x128xf32>
    %cst_83 = arith.constant 1.000000e+00 : f32
    %278 = vector.broadcast %cst_83 : f32 to vector<8x128xf32>
    %279 = arith.addf %278, %277 : vector<8x128xf32>
    %280 = arith.divf %278, %279 : vector<8x128xf32>
    %281 = vector.extract_strided_slice %268 {offsets = [0, 256], sizes = [8, 128], strides = [1, 1]} : vector<8x512xf32> to vector<8x128xf32>
    %282 = math.tanh %281 : vector<8x128xf32>
    %283 = vector.extract_strided_slice %268 {offsets = [0, 384], sizes = [8, 128], strides = [1, 1]} : vector<8x512xf32> to vector<8x128xf32>
    %284 = arith.negf %283 : vector<8x128xf32>
    %285 = math.exp %284 : vector<8x128xf32>
    %cst_84 = arith.constant 1.000000e+00 : f32
    %286 = vector.broadcast %cst_84 : f32 to vector<8x128xf32>
    %287 = arith.addf %286, %285 : vector<8x128xf32>
    %288 = arith.divf %286, %287 : vector<8x128xf32>
    %289 = arith.mulf %280, %256 : vector<8x128xf32>
    %290 = arith.mulf %274, %282 : vector<8x128xf32>
    %291 = arith.addf %289, %290 : vector<8x128xf32>
    %292 = math.tanh %291 : vector<8x128xf32>
    %293 = arith.mulf %288, %292 : vector<8x128xf32>
    %294 = arith.index_cast %262 : i32 to index
    %c0_85 = arith.constant 0 : index
    %295 = vector.load %arg7[%294, %c0_85] : memref<64x128xf32, #tpu.memory_space<vmem>>, vector<8x128xf32>
    tpu.vector_store %arg7[%294, %c0_85], %293 {strides = array<i32>} : memref<64x128xf32, #tpu.memory_space<vmem>>, vector<8x128xf32>,
    %c8_i32_86 = arith.constant 8 : i32
    %c0_87 = arith.constant 0 : index
    %c0_88 = arith.constant 0 : index
    %296 = vector.load %arg13[%c0_87, %c0_88] : memref<8x128xf32, #tpu.memory_space<vmem>>, vector<8x128xf32>
    tpu.vector_store %arg13[%c0_87, %c0_88], %293 {strides = array<i32>} : memref<8x128xf32, #tpu.memory_space<vmem>>, vector<8x128xf32>,
    %c0_89 = arith.constant 0 : index
    %c0_90 = arith.constant 0 : index
    %297 = vector.load %arg14[%c0_89, %c0_90] : memref<8x128xf32, #tpu.memory_space<vmem>>, vector<8x128xf32>
    tpu.vector_store %arg14[%c0_89, %c0_90], %291 {strides = array<i32>} : memref<8x128xf32, #tpu.memory_space<vmem>>, vector<8x128xf32>,
    %c0_i32_91 = arith.constant 0 : i32
    %298 = arith.cmpi eq, %arg0, %c0_i32_91 : i32
    %299 = arith.extui %298 : i1 to i32
    %c0_i32_92 = arith.constant 0 : i32
    %300 = arith.cmpi ne, %299, %c0_i32_92 : i32
    scf.if %300 {
      %c0_93 = arith.constant 0 : index
      %c0_94 = arith.constant 0 : index
      %301 = vector.load %arg8[%c0_93, %c0_94] : memref<8x128xf32, #tpu.memory_space<vmem>>, vector<8x128xf32>
      tpu.vector_store %arg8[%c0_93, %c0_94], %293 {strides = array<i32>} : memref<8x128xf32, #tpu.memory_space<vmem>>, vector<8x128xf32>,
      %c0_95 = arith.constant 0 : index
      %c0_96 = arith.constant 0 : index
      %302 = vector.load %arg9[%c0_95, %c0_96] : memref<8x128xf32, #tpu.memory_space<vmem>>, vector<8x128xf32>
      tpu.vector_store %arg9[%c0_95, %c0_96], %291 {strides = array<i32>} : memref<8x128xf32, #tpu.memory_space<vmem>>, vector<8x128xf32>,
    } else {
    }
    return
  }
  func.func @transform_0(%arg0: i32) -> (i32, i32) {
    %c0_i32 = arith.constant 0 : i32
    %c0_i32_0 = arith.constant 0 : i32
    return %arg0, %c0_i32 : i32, i32
  }
  func.func @transform_1(%arg0: i32) -> (i32, i32) {
    %c0_i32 = arith.constant 0 : i32
    %c0_i32_0 = arith.constant 0 : i32
    %c0_i32_1 = arith.constant 0 : i32
    return %c0_i32, %c0_i32_0 : i32, i32
  }
  func.func @transform_2(%arg0: i32) -> (i32, i32) {
    %c0_i32 = arith.constant 0 : i32
    %c0_i32_0 = arith.constant 0 : i32
    %c0_i32_1 = arith.constant 0 : i32
    return %c0_i32, %c0_i32_0 : i32, i32
  }
  func.func @transform_3(%arg0: i32) -> (i32, i32) {
    %c0_i32 = arith.constant 0 : i32
    %c0_i32_0 = arith.constant 0 : i32
    %c0_i32_1 = arith.constant 0 : i32
    return %c0_i32, %c0_i32_0 : i32, i32
  }
  func.func @transform_6(%arg0: i32) -> (i32, i32) {
    %c0_i32 = arith.constant 0 : i32
    %c0_i32_0 = arith.constant 0 : i32
    return %arg0, %c0_i32 : i32, i32
  }
  func.func @transform_7(%arg0: i32) -> (i32, i32) {
    %c0_i32 = arith.constant 0 : i32
    %c0_i32_0 = arith.constant 0 : i32
    %c0_i32_1 = arith.constant 0 : i32
    return %c0_i32, %c0_i32_0 : i32, i32
  }
  func.func @transform_8(%arg0: i32) -> (i32, i32) {
    %c0_i32 = arith.constant 0 : i32
    %c0_i32_0 = arith.constant 0 : i32
    %c0_i32_1 = arith.constant 0 : i32
    return %c0_i32, %c0_i32_0 : i32, i32
  }
}

module attributes {stable_mosaic.version = 11 : i64} {
  func.func @kernel(%arg0: i32, %arg1: memref<64x128xf32, #tpu.memory_space<vmem>>, %arg2: memref<8x128xf32, #tpu.memory_space<vmem>>, %arg3: memref<8x128xf32, #tpu.memory_space<vmem>>, %arg4: memref<1x512xf32, #tpu.memory_space<vmem>>, %arg5: memref<1x128xf32, #tpu.memory_space<vmem>>, %arg6: memref<128x512xbf16, #tpu.memory_space<any>>, %arg7: memref<128x512xbf16, #tpu.memory_space<any>>, %arg8: memref<128x128xbf16, #tpu.memory_space<any>>, %arg9: memref<64x128xf32, #tpu.memory_space<vmem>>, %arg10: memref<8x128xf32, #tpu.memory_space<vmem>>, %arg11: memref<8x128xf32, #tpu.memory_space<vmem>>, %arg12: memref<128x512xbf16, #tpu.memory_space<vmem>>, %arg13: memref<128x512xbf16, #tpu.memory_space<vmem>>, %arg14: memref<128x128xbf16, #tpu.memory_space<vmem>>, %arg15: memref<64x512xf32, #tpu.memory_space<vmem>>, %arg16: memref<64x128xf32, #tpu.memory_space<vmem>>, %arg17: memref<8x128xf32, #tpu.memory_space<vmem>>, %arg18: memref<8x128xf32, #tpu.memory_space<vmem>>, %arg19: memref<3x!tpu.dma_semaphore, #tpu.memory_space<semaphore_mem>>) attributes {dimension_semantics = [#tpu.dimension_semantics<arbitrary>], iteration_bounds = array<i64: 1>, scalar_prefetch = 0 : i64, scratch_operands = 8 : i64, tpu.core_type = #tpu.core_type<tc>, window_params = [{transform_indices = @transform_0, window_bounds = array<i64: 64, 128>}, {pipeline_mode = #tpu.pipeline_mode<synchronous>, transform_indices = @transform_1, window_bounds = array<i64: 8, 128>}, {pipeline_mode = #tpu.pipeline_mode<synchronous>, transform_indices = @transform_2, window_bounds = array<i64: 8, 128>}, {pipeline_mode = #tpu.pipeline_mode<synchronous>, transform_indices = @transform_3, window_bounds = array<i64: 1, 512>}, {pipeline_mode = #tpu.pipeline_mode<synchronous>, transform_indices = @transform_4, window_bounds = array<i64: 1, 128>}, {}, {}, {}, {transform_indices = @transform_8, window_bounds = array<i64: 64, 128>}, {pipeline_mode = #tpu.pipeline_mode<synchronous>, transform_indices = @transform_9, window_bounds = array<i64: 8, 128>}, {pipeline_mode = #tpu.pipeline_mode<synchronous>, transform_indices = @transform_10, window_bounds = array<i64: 8, 128>}]} {
    %c0_i32 = arith.constant 0 : i32
    %0 = arith.cmpi eq, %arg0, %c0_i32 : i32
    %1 = arith.extui %0 : i1 to i32
    %c0_i32_0 = arith.constant 0 : i32
    %2 = arith.cmpi ne, %1, %c0_i32_0 : i32
    scf.if %2 {
      %c0_i32_104 = arith.constant 0 : i32
      %312 = tpu.memref_slice %arg19[%c0_i32_104] : memref<3x!tpu.dma_semaphore, #tpu.memory_space<semaphore_mem>> -> memref<1x!tpu.dma_semaphore, #tpu.memory_space<semaphore_mem>>
      %313 = tpu.memref_squeeze %312 : memref<1x!tpu.dma_semaphore, #tpu.memory_space<semaphore_mem>> -> memref<!tpu.dma_semaphore, #tpu.memory_space<semaphore_mem>>
      tpu.enqueue_dma source(%arg6 : memref<128x512xbf16, #tpu.memory_space<any>>) target(%arg12 : memref<128x512xbf16, #tpu.memory_space<vmem>>) target_semaphore(%313 : memref<!tpu.dma_semaphore, #tpu.memory_space<semaphore_mem>>)
      %c1_i32_105 = arith.constant 1 : i32
      %314 = tpu.memref_slice %arg19[%c1_i32_105] : memref<3x!tpu.dma_semaphore, #tpu.memory_space<semaphore_mem>> -> memref<1x!tpu.dma_semaphore, #tpu.memory_space<semaphore_mem>>
      %315 = tpu.memref_squeeze %314 : memref<1x!tpu.dma_semaphore, #tpu.memory_space<semaphore_mem>> -> memref<!tpu.dma_semaphore, #tpu.memory_space<semaphore_mem>>
      tpu.enqueue_dma source(%arg7 : memref<128x512xbf16, #tpu.memory_space<any>>) target(%arg13 : memref<128x512xbf16, #tpu.memory_space<vmem>>) target_semaphore(%315 : memref<!tpu.dma_semaphore, #tpu.memory_space<semaphore_mem>>)
      %c2_i32_106 = arith.constant 2 : i32
      %316 = tpu.memref_slice %arg19[%c2_i32_106] : memref<3x!tpu.dma_semaphore, #tpu.memory_space<semaphore_mem>> -> memref<1x!tpu.dma_semaphore, #tpu.memory_space<semaphore_mem>>
      %317 = tpu.memref_squeeze %316 : memref<1x!tpu.dma_semaphore, #tpu.memory_space<semaphore_mem>> -> memref<!tpu.dma_semaphore, #tpu.memory_space<semaphore_mem>>
      tpu.enqueue_dma source(%arg8 : memref<128x128xbf16, #tpu.memory_space<any>>) target(%arg14 : memref<128x128xbf16, #tpu.memory_space<vmem>>) target_semaphore(%317 : memref<!tpu.dma_semaphore, #tpu.memory_space<semaphore_mem>>)
      %c0_i32_107 = arith.constant 0 : i32
      %318 = tpu.memref_slice %arg19[%c0_i32_107] : memref<3x!tpu.dma_semaphore, #tpu.memory_space<semaphore_mem>> -> memref<1x!tpu.dma_semaphore, #tpu.memory_space<semaphore_mem>>
      %319 = tpu.memref_squeeze %318 : memref<1x!tpu.dma_semaphore, #tpu.memory_space<semaphore_mem>> -> memref<!tpu.dma_semaphore, #tpu.memory_space<semaphore_mem>>
      tpu.wait_dma2 semaphore(%319 : memref<!tpu.dma_semaphore, #tpu.memory_space<semaphore_mem>>) src(%arg6 : memref<128x512xbf16, #tpu.memory_space<any>>) dst(%arg12 : memref<128x512xbf16, #tpu.memory_space<vmem>>)
      %c0_108 = arith.constant 0 : index
      %c0_109 = arith.constant 0 : index
      %320 = vector.load %arg2[%c0_108, %c0_109] : memref<8x128xf32, #tpu.memory_space<vmem>>, vector<8x128xf32>
      %c0_110 = arith.constant 0 : index
      %c0_111 = arith.constant 0 : index
      %321 = vector.load %arg17[%c0_110, %c0_111] : memref<8x128xf32, #tpu.memory_space<vmem>>, vector<8x128xf32>
      tpu.vector_store %arg17[%c0_110, %c0_111], %320 {strides = array<i32>} : memref<8x128xf32, #tpu.memory_space<vmem>>, vector<8x128xf32>,
      %c0_112 = arith.constant 0 : index
      %c0_113 = arith.constant 0 : index
      %322 = vector.load %arg3[%c0_112, %c0_113] : memref<8x128xf32, #tpu.memory_space<vmem>>, vector<8x128xf32>
      %c0_114 = arith.constant 0 : index
      %c0_115 = arith.constant 0 : index
      %323 = vector.load %arg18[%c0_114, %c0_115] : memref<8x128xf32, #tpu.memory_space<vmem>>, vector<8x128xf32>
      tpu.vector_store %arg18[%c0_114, %c0_115], %322 {strides = array<i32>} : memref<8x128xf32, #tpu.memory_space<vmem>>, vector<8x128xf32>,
    } else {
    }
    %c0 = arith.constant 0 : index
    %c0_1 = arith.constant 0 : index
    %3 = vector.load %arg1[%c0, %c0_1] : memref<64x128xf32, #tpu.memory_space<vmem>>, vector<64x128xf32>
    %4 = arith.truncf %3 : vector<64x128xf32> to vector<64x128xbf16>
    %c0_2 = arith.constant 0 : index
    %c0_3 = arith.constant 0 : index
    %5 = vector.load %arg12[%c0_2, %c0_3] : memref<128x512xbf16, #tpu.memory_space<vmem>>, vector<128x512xbf16>
    %cst = arith.constant dense<0.000000e+00> : vector<64x512xf32>
    %6 = tpu.matmul %4, %5, %cst {dimension_numbers = #tpu.dot_dimension_numbers<[1], [0], [0], [1], [0, 0, 1, 1], [], []>} : vector<64x128xbf16>, vector<128x512xbf16>, vector<64x512xf32> -> vector<64x512xf32>
    %c0_4 = arith.constant 0 : index
    %c0_5 = arith.constant 0 : index
    %7 = vector.load %arg4[%c0_4, %c0_5] : memref<1x512xf32, #tpu.memory_space<vmem>>, vector<1x512xf32>
    %8 = vector.broadcast %7 : vector<1x512xf32> to vector<64x512xf32>
    %9 = arith.addf %6, %8 : vector<64x512xf32>
    %c0_6 = arith.constant 0 : index
    %c0_7 = arith.constant 0 : index
    %10 = vector.load %arg15[%c0_6, %c0_7] : memref<64x512xf32, #tpu.memory_space<vmem>>, vector<64x512xf32>
    tpu.vector_store %arg15[%c0_6, %c0_7], %9 {strides = array<i32>} : memref<64x512xf32, #tpu.memory_space<vmem>>, vector<64x512xf32>,
    %c0_i32_8 = arith.constant 0 : i32
    %11 = arith.cmpi eq, %arg0, %c0_i32_8 : i32
    %12 = arith.extui %11 : i1 to i32
    %c0_i32_9 = arith.constant 0 : i32
    %13 = arith.cmpi ne, %12, %c0_i32_9 : i32
    scf.if %13 {
      %c1_i32_104 = arith.constant 1 : i32
      %312 = tpu.memref_slice %arg19[%c1_i32_104] : memref<3x!tpu.dma_semaphore, #tpu.memory_space<semaphore_mem>> -> memref<1x!tpu.dma_semaphore, #tpu.memory_space<semaphore_mem>>
      %313 = tpu.memref_squeeze %312 : memref<1x!tpu.dma_semaphore, #tpu.memory_space<semaphore_mem>> -> memref<!tpu.dma_semaphore, #tpu.memory_space<semaphore_mem>>
      tpu.wait_dma2 semaphore(%313 : memref<!tpu.dma_semaphore, #tpu.memory_space<semaphore_mem>>) src(%arg7 : memref<128x512xbf16, #tpu.memory_space<any>>) dst(%arg13 : memref<128x512xbf16, #tpu.memory_space<vmem>>)
    } else {
    }
    %c0_10 = arith.constant 0 : index
    %c0_11 = arith.constant 0 : index
    %14 = vector.load %arg17[%c0_10, %c0_11] : memref<8x128xf32, #tpu.memory_space<vmem>>, vector<8x128xf32>
    %c0_12 = arith.constant 0 : index
    %c0_13 = arith.constant 0 : index
    %15 = vector.load %arg18[%c0_12, %c0_13] : memref<8x128xf32, #tpu.memory_space<vmem>>, vector<8x128xf32>
    %c0_i32_14 = arith.constant 0 : i32
    %c8_i32 = arith.constant 8 : i32
    %16 = arith.muli %c0_i32_14, %c8_i32 : i32
    %17 = tpu.assume_multiple %16, 8 : i32
    %18 = arith.index_cast %17 : i32 to index
    %c0_15 = arith.constant 0 : index
    %19 = vector.load %arg15[%18, %c0_15] : memref<64x512xf32, #tpu.memory_space<vmem>>, vector<8x512xf32>
    %20 = arith.truncf %14 : vector<8x128xf32> to vector<8x128xbf16>
    %c0_16 = arith.constant 0 : index
    %c0_17 = arith.constant 0 : index
    %21 = vector.load %arg13[%c0_16, %c0_17] : memref<128x512xbf16, #tpu.memory_space<vmem>>, vector<128x512xbf16>
    %cst_18 = arith.constant dense<0.000000e+00> : vector<8x512xf32>
    %22 = tpu.matmul %20, %21, %cst_18 {dimension_numbers = #tpu.dot_dimension_numbers<[1], [0], [0], [1], [0, 0, 1, 1], [], []>} : vector<8x128xbf16>, vector<128x512xbf16>, vector<8x512xf32> -> vector<8x512xf32>
    %23 = arith.addf %19, %22 : vector<8x512xf32>
    %24 = vector.extract_strided_slice %23 {offsets = [0, 0], sizes = [8, 128], strides = [1, 1]} : vector<8x512xf32> to vector<8x128xf32>
    %25 = arith.negf %24 : vector<8x128xf32>
    %26 = math.exp %25 : vector<8x128xf32>
    %cst_19 = arith.constant 1.000000e+00 : f32
    %27 = vector.broadcast %cst_19 : f32 to vector<8x128xf32>
    %28 = arith.addf %27, %26 : vector<8x128xf32>
    %29 = arith.divf %27, %28 : vector<8x128xf32>
    %30 = vector.extract_strided_slice %23 {offsets = [0, 128], sizes = [8, 128], strides = [1, 1]} : vector<8x512xf32> to vector<8x128xf32>
    %31 = arith.negf %30 : vector<8x128xf32>
    %32 = math.exp %31 : vector<8x128xf32>
    %cst_20 = arith.constant 1.000000e+00 : f32
    %33 = vector.broadcast %cst_20 : f32 to vector<8x128xf32>
    %34 = arith.addf %33, %32 : vector<8x128xf32>
    %35 = arith.divf %33, %34 : vector<8x128xf32>
    %36 = vector.extract_strided_slice %23 {offsets = [0, 256], sizes = [8, 128], strides = [1, 1]} : vector<8x512xf32> to vector<8x128xf32>
    %37 = math.tanh %36 : vector<8x128xf32>
    %38 = vector.extract_strided_slice %23 {offsets = [0, 384], sizes = [8, 128], strides = [1, 1]} : vector<8x512xf32> to vector<8x128xf32>
    %39 = arith.negf %38 : vector<8x128xf32>
    %40 = math.exp %39 : vector<8x128xf32>
    %cst_21 = arith.constant 1.000000e+00 : f32
    %41 = vector.broadcast %cst_21 : f32 to vector<8x128xf32>
    %42 = arith.addf %41, %40 : vector<8x128xf32>
    %43 = arith.divf %41, %42 : vector<8x128xf32>
    %44 = arith.mulf %35, %15 : vector<8x128xf32>
    %45 = arith.mulf %29, %37 : vector<8x128xf32>
    %46 = arith.addf %44, %45 : vector<8x128xf32>
    %47 = math.tanh %46 : vector<8x128xf32>
    %48 = arith.mulf %43, %47 : vector<8x128xf32>
    %49 = arith.index_cast %17 : i32 to index
    %c0_22 = arith.constant 0 : index
    %50 = vector.load %arg16[%49, %c0_22] : memref<64x128xf32, #tpu.memory_space<vmem>>, vector<8x128xf32>
    tpu.vector_store %arg16[%49, %c0_22], %48 {strides = array<i32>} : memref<64x128xf32, #tpu.memory_space<vmem>>, vector<8x128xf32>,
    %c1_i32 = arith.constant 1 : i32
    %c8_i32_23 = arith.constant 8 : i32
    %51 = arith.muli %c1_i32, %c8_i32_23 : i32
    %52 = tpu.assume_multiple %51, 8 : i32
    %53 = arith.index_cast %52 : i32 to index
    %c0_24 = arith.constant 0 : index
    %54 = vector.load %arg15[%53, %c0_24] : memref<64x512xf32, #tpu.memory_space<vmem>>, vector<8x512xf32>
    %55 = arith.truncf %48 : vector<8x128xf32> to vector<8x128xbf16>
    %c0_25 = arith.constant 0 : index
    %c0_26 = arith.constant 0 : index
    %56 = vector.load %arg13[%c0_25, %c0_26] : memref<128x512xbf16, #tpu.memory_space<vmem>>, vector<128x512xbf16>
    %cst_27 = arith.constant dense<0.000000e+00> : vector<8x512xf32>
    %57 = tpu.matmul %55, %56, %cst_27 {dimension_numbers = #tpu.dot_dimension_numbers<[1], [0], [0], [1], [0, 0, 1, 1], [], []>} : vector<8x128xbf16>, vector<128x512xbf16>, vector<8x512xf32> -> vector<8x512xf32>
    %58 = arith.addf %54, %57 : vector<8x512xf32>
    %59 = vector.extract_strided_slice %58 {offsets = [0, 0], sizes = [8, 128], strides = [1, 1]} : vector<8x512xf32> to vector<8x128xf32>
    %60 = arith.negf %59 : vector<8x128xf32>
    %61 = math.exp %60 : vector<8x128xf32>
    %cst_28 = arith.constant 1.000000e+00 : f32
    %62 = vector.broadcast %cst_28 : f32 to vector<8x128xf32>
    %63 = arith.addf %62, %61 : vector<8x128xf32>
    %64 = arith.divf %62, %63 : vector<8x128xf32>
    %65 = vector.extract_strided_slice %58 {offsets = [0, 128], sizes = [8, 128], strides = [1, 1]} : vector<8x512xf32> to vector<8x128xf32>
    %66 = arith.negf %65 : vector<8x128xf32>
    %67 = math.exp %66 : vector<8x128xf32>
    %cst_29 = arith.constant 1.000000e+00 : f32
    %68 = vector.broadcast %cst_29 : f32 to vector<8x128xf32>
    %69 = arith.addf %68, %67 : vector<8x128xf32>
    %70 = arith.divf %68, %69 : vector<8x128xf32>
    %71 = vector.extract_strided_slice %58 {offsets = [0, 256], sizes = [8, 128], strides = [1, 1]} : vector<8x512xf32> to vector<8x128xf32>
    %72 = math.tanh %71 : vector<8x128xf32>
    %73 = vector.extract_strided_slice %58 {offsets = [0, 384], sizes = [8, 128], strides = [1, 1]} : vector<8x512xf32> to vector<8x128xf32>
    %74 = arith.negf %73 : vector<8x128xf32>
    %75 = math.exp %74 : vector<8x128xf32>
    %cst_30 = arith.constant 1.000000e+00 : f32
    %76 = vector.broadcast %cst_30 : f32 to vector<8x128xf32>
    %77 = arith.addf %76, %75 : vector<8x128xf32>
    %78 = arith.divf %76, %77 : vector<8x128xf32>
    %79 = arith.mulf %70, %46 : vector<8x128xf32>
    %80 = arith.mulf %64, %72 : vector<8x128xf32>
    %81 = arith.addf %79, %80 : vector<8x128xf32>
    %82 = math.tanh %81 : vector<8x128xf32>
    %83 = arith.mulf %78, %82 : vector<8x128xf32>
    %84 = arith.index_cast %52 : i32 to index
    %c0_31 = arith.constant 0 : index
    %85 = vector.load %arg16[%84, %c0_31] : memref<64x128xf32, #tpu.memory_space<vmem>>, vector<8x128xf32>
    tpu.vector_store %arg16[%84, %c0_31], %83 {strides = array<i32>} : memref<64x128xf32, #tpu.memory_space<vmem>>, vector<8x128xf32>,
    %c2_i32 = arith.constant 2 : i32
    %c8_i32_32 = arith.constant 8 : i32
    %86 = arith.muli %c2_i32, %c8_i32_32 : i32
    %87 = tpu.assume_multiple %86, 8 : i32
    %88 = arith.index_cast %87 : i32 to index
    %c0_33 = arith.constant 0 : index
    %89 = vector.load %arg15[%88, %c0_33] : memref<64x512xf32, #tpu.memory_space<vmem>>, vector<8x512xf32>
    %90 = arith.truncf %83 : vector<8x128xf32> to vector<8x128xbf16>
    %c0_34 = arith.constant 0 : index
    %c0_35 = arith.constant 0 : index
    %91 = vector.load %arg13[%c0_34, %c0_35] : memref<128x512xbf16, #tpu.memory_space<vmem>>, vector<128x512xbf16>
    %cst_36 = arith.constant dense<0.000000e+00> : vector<8x512xf32>
    %92 = tpu.matmul %90, %91, %cst_36 {dimension_numbers = #tpu.dot_dimension_numbers<[1], [0], [0], [1], [0, 0, 1, 1], [], []>} : vector<8x128xbf16>, vector<128x512xbf16>, vector<8x512xf32> -> vector<8x512xf32>
    %93 = arith.addf %89, %92 : vector<8x512xf32>
    %94 = vector.extract_strided_slice %93 {offsets = [0, 0], sizes = [8, 128], strides = [1, 1]} : vector<8x512xf32> to vector<8x128xf32>
    %95 = arith.negf %94 : vector<8x128xf32>
    %96 = math.exp %95 : vector<8x128xf32>
    %cst_37 = arith.constant 1.000000e+00 : f32
    %97 = vector.broadcast %cst_37 : f32 to vector<8x128xf32>
    %98 = arith.addf %97, %96 : vector<8x128xf32>
    %99 = arith.divf %97, %98 : vector<8x128xf32>
    %100 = vector.extract_strided_slice %93 {offsets = [0, 128], sizes = [8, 128], strides = [1, 1]} : vector<8x512xf32> to vector<8x128xf32>
    %101 = arith.negf %100 : vector<8x128xf32>
    %102 = math.exp %101 : vector<8x128xf32>
    %cst_38 = arith.constant 1.000000e+00 : f32
    %103 = vector.broadcast %cst_38 : f32 to vector<8x128xf32>
    %104 = arith.addf %103, %102 : vector<8x128xf32>
    %105 = arith.divf %103, %104 : vector<8x128xf32>
    %106 = vector.extract_strided_slice %93 {offsets = [0, 256], sizes = [8, 128], strides = [1, 1]} : vector<8x512xf32> to vector<8x128xf32>
    %107 = math.tanh %106 : vector<8x128xf32>
    %108 = vector.extract_strided_slice %93 {offsets = [0, 384], sizes = [8, 128], strides = [1, 1]} : vector<8x512xf32> to vector<8x128xf32>
    %109 = arith.negf %108 : vector<8x128xf32>
    %110 = math.exp %109 : vector<8x128xf32>
    %cst_39 = arith.constant 1.000000e+00 : f32
    %111 = vector.broadcast %cst_39 : f32 to vector<8x128xf32>
    %112 = arith.addf %111, %110 : vector<8x128xf32>
    %113 = arith.divf %111, %112 : vector<8x128xf32>
    %114 = arith.mulf %105, %81 : vector<8x128xf32>
    %115 = arith.mulf %99, %107 : vector<8x128xf32>
    %116 = arith.addf %114, %115 : vector<8x128xf32>
    %117 = math.tanh %116 : vector<8x128xf32>
    %118 = arith.mulf %113, %117 : vector<8x128xf32>
    %119 = arith.index_cast %87 : i32 to index
    %c0_40 = arith.constant 0 : index
    %120 = vector.load %arg16[%119, %c0_40] : memref<64x128xf32, #tpu.memory_space<vmem>>, vector<8x128xf32>
    tpu.vector_store %arg16[%119, %c0_40], %118 {strides = array<i32>} : memref<64x128xf32, #tpu.memory_space<vmem>>, vector<8x128xf32>,
    %c3_i32 = arith.constant 3 : i32
    %c8_i32_41 = arith.constant 8 : i32
    %121 = arith.muli %c3_i32, %c8_i32_41 : i32
    %122 = tpu.assume_multiple %121, 8 : i32
    %123 = arith.index_cast %122 : i32 to index
    %c0_42 = arith.constant 0 : index
    %124 = vector.load %arg15[%123, %c0_42] : memref<64x512xf32, #tpu.memory_space<vmem>>, vector<8x512xf32>
    %125 = arith.truncf %118 : vector<8x128xf32> to vector<8x128xbf16>
    %c0_43 = arith.constant 0 : index
    %c0_44 = arith.constant 0 : index
    %126 = vector.load %arg13[%c0_43, %c0_44] : memref<128x512xbf16, #tpu.memory_space<vmem>>, vector<128x512xbf16>
    %cst_45 = arith.constant dense<0.000000e+00> : vector<8x512xf32>
    %127 = tpu.matmul %125, %126, %cst_45 {dimension_numbers = #tpu.dot_dimension_numbers<[1], [0], [0], [1], [0, 0, 1, 1], [], []>} : vector<8x128xbf16>, vector<128x512xbf16>, vector<8x512xf32> -> vector<8x512xf32>
    %128 = arith.addf %124, %127 : vector<8x512xf32>
    %129 = vector.extract_strided_slice %128 {offsets = [0, 0], sizes = [8, 128], strides = [1, 1]} : vector<8x512xf32> to vector<8x128xf32>
    %130 = arith.negf %129 : vector<8x128xf32>
    %131 = math.exp %130 : vector<8x128xf32>
    %cst_46 = arith.constant 1.000000e+00 : f32
    %132 = vector.broadcast %cst_46 : f32 to vector<8x128xf32>
    %133 = arith.addf %132, %131 : vector<8x128xf32>
    %134 = arith.divf %132, %133 : vector<8x128xf32>
    %135 = vector.extract_strided_slice %128 {offsets = [0, 128], sizes = [8, 128], strides = [1, 1]} : vector<8x512xf32> to vector<8x128xf32>
    %136 = arith.negf %135 : vector<8x128xf32>
    %137 = math.exp %136 : vector<8x128xf32>
    %cst_47 = arith.constant 1.000000e+00 : f32
    %138 = vector.broadcast %cst_47 : f32 to vector<8x128xf32>
    %139 = arith.addf %138, %137 : vector<8x128xf32>
    %140 = arith.divf %138, %139 : vector<8x128xf32>
    %141 = vector.extract_strided_slice %128 {offsets = [0, 256], sizes = [8, 128], strides = [1, 1]} : vector<8x512xf32> to vector<8x128xf32>
    %142 = math.tanh %141 : vector<8x128xf32>
    %143 = vector.extract_strided_slice %128 {offsets = [0, 384], sizes = [8, 128], strides = [1, 1]} : vector<8x512xf32> to vector<8x128xf32>
    %144 = arith.negf %143 : vector<8x128xf32>
    %145 = math.exp %144 : vector<8x128xf32>
    %cst_48 = arith.constant 1.000000e+00 : f32
    %146 = vector.broadcast %cst_48 : f32 to vector<8x128xf32>
    %147 = arith.addf %146, %145 : vector<8x128xf32>
    %148 = arith.divf %146, %147 : vector<8x128xf32>
    %149 = arith.mulf %140, %116 : vector<8x128xf32>
    %150 = arith.mulf %134, %142 : vector<8x128xf32>
    %151 = arith.addf %149, %150 : vector<8x128xf32>
    %152 = math.tanh %151 : vector<8x128xf32>
    %153 = arith.mulf %148, %152 : vector<8x128xf32>
    %154 = arith.index_cast %122 : i32 to index
    %c0_49 = arith.constant 0 : index
    %155 = vector.load %arg16[%154, %c0_49] : memref<64x128xf32, #tpu.memory_space<vmem>>, vector<8x128xf32>
    tpu.vector_store %arg16[%154, %c0_49], %153 {strides = array<i32>} : memref<64x128xf32, #tpu.memory_space<vmem>>, vector<8x128xf32>,
    %c4_i32 = arith.constant 4 : i32
    %c8_i32_50 = arith.constant 8 : i32
    %156 = arith.muli %c4_i32, %c8_i32_50 : i32
    %157 = tpu.assume_multiple %156, 8 : i32
    %158 = arith.index_cast %157 : i32 to index
    %c0_51 = arith.constant 0 : index
    %159 = vector.load %arg15[%158, %c0_51] : memref<64x512xf32, #tpu.memory_space<vmem>>, vector<8x512xf32>
    %160 = arith.truncf %153 : vector<8x128xf32> to vector<8x128xbf16>
    %c0_52 = arith.constant 0 : index
    %c0_53 = arith.constant 0 : index
    %161 = vector.load %arg13[%c0_52, %c0_53] : memref<128x512xbf16, #tpu.memory_space<vmem>>, vector<128x512xbf16>
    %cst_54 = arith.constant dense<0.000000e+00> : vector<8x512xf32>
    %162 = tpu.matmul %160, %161, %cst_54 {dimension_numbers = #tpu.dot_dimension_numbers<[1], [0], [0], [1], [0, 0, 1, 1], [], []>} : vector<8x128xbf16>, vector<128x512xbf16>, vector<8x512xf32> -> vector<8x512xf32>
    %163 = arith.addf %159, %162 : vector<8x512xf32>
    %164 = vector.extract_strided_slice %163 {offsets = [0, 0], sizes = [8, 128], strides = [1, 1]} : vector<8x512xf32> to vector<8x128xf32>
    %165 = arith.negf %164 : vector<8x128xf32>
    %166 = math.exp %165 : vector<8x128xf32>
    %cst_55 = arith.constant 1.000000e+00 : f32
    %167 = vector.broadcast %cst_55 : f32 to vector<8x128xf32>
    %168 = arith.addf %167, %166 : vector<8x128xf32>
    %169 = arith.divf %167, %168 : vector<8x128xf32>
    %170 = vector.extract_strided_slice %163 {offsets = [0, 128], sizes = [8, 128], strides = [1, 1]} : vector<8x512xf32> to vector<8x128xf32>
    %171 = arith.negf %170 : vector<8x128xf32>
    %172 = math.exp %171 : vector<8x128xf32>
    %cst_56 = arith.constant 1.000000e+00 : f32
    %173 = vector.broadcast %cst_56 : f32 to vector<8x128xf32>
    %174 = arith.addf %173, %172 : vector<8x128xf32>
    %175 = arith.divf %173, %174 : vector<8x128xf32>
    %176 = vector.extract_strided_slice %163 {offsets = [0, 256], sizes = [8, 128], strides = [1, 1]} : vector<8x512xf32> to vector<8x128xf32>
    %177 = math.tanh %176 : vector<8x128xf32>
    %178 = vector.extract_strided_slice %163 {offsets = [0, 384], sizes = [8, 128], strides = [1, 1]} : vector<8x512xf32> to vector<8x128xf32>
    %179 = arith.negf %178 : vector<8x128xf32>
    %180 = math.exp %179 : vector<8x128xf32>
    %cst_57 = arith.constant 1.000000e+00 : f32
    %181 = vector.broadcast %cst_57 : f32 to vector<8x128xf32>
    %182 = arith.addf %181, %180 : vector<8x128xf32>
    %183 = arith.divf %181, %182 : vector<8x128xf32>
    %184 = arith.mulf %175, %151 : vector<8x128xf32>
    %185 = arith.mulf %169, %177 : vector<8x128xf32>
    %186 = arith.addf %184, %185 : vector<8x128xf32>
    %187 = math.tanh %186 : vector<8x128xf32>
    %188 = arith.mulf %183, %187 : vector<8x128xf32>
    %189 = arith.index_cast %157 : i32 to index
    %c0_58 = arith.constant 0 : index
    %190 = vector.load %arg16[%189, %c0_58] : memref<64x128xf32, #tpu.memory_space<vmem>>, vector<8x128xf32>
    tpu.vector_store %arg16[%189, %c0_58], %188 {strides = array<i32>} : memref<64x128xf32, #tpu.memory_space<vmem>>, vector<8x128xf32>,
    %c5_i32 = arith.constant 5 : i32
    %c8_i32_59 = arith.constant 8 : i32
    %191 = arith.muli %c5_i32, %c8_i32_59 : i32
    %192 = tpu.assume_multiple %191, 8 : i32
    %193 = arith.index_cast %192 : i32 to index
    %c0_60 = arith.constant 0 : index
    %194 = vector.load %arg15[%193, %c0_60] : memref<64x512xf32, #tpu.memory_space<vmem>>, vector<8x512xf32>
    %195 = arith.truncf %188 : vector<8x128xf32> to vector<8x128xbf16>
    %c0_61 = arith.constant 0 : index
    %c0_62 = arith.constant 0 : index
    %196 = vector.load %arg13[%c0_61, %c0_62] : memref<128x512xbf16, #tpu.memory_space<vmem>>, vector<128x512xbf16>
    %cst_63 = arith.constant dense<0.000000e+00> : vector<8x512xf32>
    %197 = tpu.matmul %195, %196, %cst_63 {dimension_numbers = #tpu.dot_dimension_numbers<[1], [0], [0], [1], [0, 0, 1, 1], [], []>} : vector<8x128xbf16>, vector<128x512xbf16>, vector<8x512xf32> -> vector<8x512xf32>
    %198 = arith.addf %194, %197 : vector<8x512xf32>
    %199 = vector.extract_strided_slice %198 {offsets = [0, 0], sizes = [8, 128], strides = [1, 1]} : vector<8x512xf32> to vector<8x128xf32>
    %200 = arith.negf %199 : vector<8x128xf32>
    %201 = math.exp %200 : vector<8x128xf32>
    %cst_64 = arith.constant 1.000000e+00 : f32
    %202 = vector.broadcast %cst_64 : f32 to vector<8x128xf32>
    %203 = arith.addf %202, %201 : vector<8x128xf32>
    %204 = arith.divf %202, %203 : vector<8x128xf32>
    %205 = vector.extract_strided_slice %198 {offsets = [0, 128], sizes = [8, 128], strides = [1, 1]} : vector<8x512xf32> to vector<8x128xf32>
    %206 = arith.negf %205 : vector<8x128xf32>
    %207 = math.exp %206 : vector<8x128xf32>
    %cst_65 = arith.constant 1.000000e+00 : f32
    %208 = vector.broadcast %cst_65 : f32 to vector<8x128xf32>
    %209 = arith.addf %208, %207 : vector<8x128xf32>
    %210 = arith.divf %208, %209 : vector<8x128xf32>
    %211 = vector.extract_strided_slice %198 {offsets = [0, 256], sizes = [8, 128], strides = [1, 1]} : vector<8x512xf32> to vector<8x128xf32>
    %212 = math.tanh %211 : vector<8x128xf32>
    %213 = vector.extract_strided_slice %198 {offsets = [0, 384], sizes = [8, 128], strides = [1, 1]} : vector<8x512xf32> to vector<8x128xf32>
    %214 = arith.negf %213 : vector<8x128xf32>
    %215 = math.exp %214 : vector<8x128xf32>
    %cst_66 = arith.constant 1.000000e+00 : f32
    %216 = vector.broadcast %cst_66 : f32 to vector<8x128xf32>
    %217 = arith.addf %216, %215 : vector<8x128xf32>
    %218 = arith.divf %216, %217 : vector<8x128xf32>
    %219 = arith.mulf %210, %186 : vector<8x128xf32>
    %220 = arith.mulf %204, %212 : vector<8x128xf32>
    %221 = arith.addf %219, %220 : vector<8x128xf32>
    %222 = math.tanh %221 : vector<8x128xf32>
    %223 = arith.mulf %218, %222 : vector<8x128xf32>
    %224 = arith.index_cast %192 : i32 to index
    %c0_67 = arith.constant 0 : index
    %225 = vector.load %arg16[%224, %c0_67] : memref<64x128xf32, #tpu.memory_space<vmem>>, vector<8x128xf32>
    tpu.vector_store %arg16[%224, %c0_67], %223 {strides = array<i32>} : memref<64x128xf32, #tpu.memory_space<vmem>>, vector<8x128xf32>,
    %c6_i32 = arith.constant 6 : i32
    %c8_i32_68 = arith.constant 8 : i32
    %226 = arith.muli %c6_i32, %c8_i32_68 : i32
    %227 = tpu.assume_multiple %226, 8 : i32
    %228 = arith.index_cast %227 : i32 to index
    %c0_69 = arith.constant 0 : index
    %229 = vector.load %arg15[%228, %c0_69] : memref<64x512xf32, #tpu.memory_space<vmem>>, vector<8x512xf32>
    %230 = arith.truncf %223 : vector<8x128xf32> to vector<8x128xbf16>
    %c0_70 = arith.constant 0 : index
    %c0_71 = arith.constant 0 : index
    %231 = vector.load %arg13[%c0_70, %c0_71] : memref<128x512xbf16, #tpu.memory_space<vmem>>, vector<128x512xbf16>
    %cst_72 = arith.constant dense<0.000000e+00> : vector<8x512xf32>
    %232 = tpu.matmul %230, %231, %cst_72 {dimension_numbers = #tpu.dot_dimension_numbers<[1], [0], [0], [1], [0, 0, 1, 1], [], []>} : vector<8x128xbf16>, vector<128x512xbf16>, vector<8x512xf32> -> vector<8x512xf32>
    %233 = arith.addf %229, %232 : vector<8x512xf32>
    %234 = vector.extract_strided_slice %233 {offsets = [0, 0], sizes = [8, 128], strides = [1, 1]} : vector<8x512xf32> to vector<8x128xf32>
    %235 = arith.negf %234 : vector<8x128xf32>
    %236 = math.exp %235 : vector<8x128xf32>
    %cst_73 = arith.constant 1.000000e+00 : f32
    %237 = vector.broadcast %cst_73 : f32 to vector<8x128xf32>
    %238 = arith.addf %237, %236 : vector<8x128xf32>
    %239 = arith.divf %237, %238 : vector<8x128xf32>
    %240 = vector.extract_strided_slice %233 {offsets = [0, 128], sizes = [8, 128], strides = [1, 1]} : vector<8x512xf32> to vector<8x128xf32>
    %241 = arith.negf %240 : vector<8x128xf32>
    %242 = math.exp %241 : vector<8x128xf32>
    %cst_74 = arith.constant 1.000000e+00 : f32
    %243 = vector.broadcast %cst_74 : f32 to vector<8x128xf32>
    %244 = arith.addf %243, %242 : vector<8x128xf32>
    %245 = arith.divf %243, %244 : vector<8x128xf32>
    %246 = vector.extract_strided_slice %233 {offsets = [0, 256], sizes = [8, 128], strides = [1, 1]} : vector<8x512xf32> to vector<8x128xf32>
    %247 = math.tanh %246 : vector<8x128xf32>
    %248 = vector.extract_strided_slice %233 {offsets = [0, 384], sizes = [8, 128], strides = [1, 1]} : vector<8x512xf32> to vector<8x128xf32>
    %249 = arith.negf %248 : vector<8x128xf32>
    %250 = math.exp %249 : vector<8x128xf32>
    %cst_75 = arith.constant 1.000000e+00 : f32
    %251 = vector.broadcast %cst_75 : f32 to vector<8x128xf32>
    %252 = arith.addf %251, %250 : vector<8x128xf32>
    %253 = arith.divf %251, %252 : vector<8x128xf32>
    %254 = arith.mulf %245, %221 : vector<8x128xf32>
    %255 = arith.mulf %239, %247 : vector<8x128xf32>
    %256 = arith.addf %254, %255 : vector<8x128xf32>
    %257 = math.tanh %256 : vector<8x128xf32>
    %258 = arith.mulf %253, %257 : vector<8x128xf32>
    %259 = arith.index_cast %227 : i32 to index
    %c0_76 = arith.constant 0 : index
    %260 = vector.load %arg16[%259, %c0_76] : memref<64x128xf32, #tpu.memory_space<vmem>>, vector<8x128xf32>
    tpu.vector_store %arg16[%259, %c0_76], %258 {strides = array<i32>} : memref<64x128xf32, #tpu.memory_space<vmem>>, vector<8x128xf32>,
    %c7_i32 = arith.constant 7 : i32
    %c8_i32_77 = arith.constant 8 : i32
    %261 = arith.muli %c7_i32, %c8_i32_77 : i32
    %262 = tpu.assume_multiple %261, 8 : i32
    %263 = arith.index_cast %262 : i32 to index
    %c0_78 = arith.constant 0 : index
    %264 = vector.load %arg15[%263, %c0_78] : memref<64x512xf32, #tpu.memory_space<vmem>>, vector<8x512xf32>
    %265 = arith.truncf %258 : vector<8x128xf32> to vector<8x128xbf16>
    %c0_79 = arith.constant 0 : index
    %c0_80 = arith.constant 0 : index
    %266 = vector.load %arg13[%c0_79, %c0_80] : memref<128x512xbf16, #tpu.memory_space<vmem>>, vector<128x512xbf16>
    %cst_81 = arith.constant dense<0.000000e+00> : vector<8x512xf32>
    %267 = tpu.matmul %265, %266, %cst_81 {dimension_numbers = #tpu.dot_dimension_numbers<[1], [0], [0], [1], [0, 0, 1, 1], [], []>} : vector<8x128xbf16>, vector<128x512xbf16>, vector<8x512xf32> -> vector<8x512xf32>
    %268 = arith.addf %264, %267 : vector<8x512xf32>
    %269 = vector.extract_strided_slice %268 {offsets = [0, 0], sizes = [8, 128], strides = [1, 1]} : vector<8x512xf32> to vector<8x128xf32>
    %270 = arith.negf %269 : vector<8x128xf32>
    %271 = math.exp %270 : vector<8x128xf32>
    %cst_82 = arith.constant 1.000000e+00 : f32
    %272 = vector.broadcast %cst_82 : f32 to vector<8x128xf32>
    %273 = arith.addf %272, %271 : vector<8x128xf32>
    %274 = arith.divf %272, %273 : vector<8x128xf32>
    %275 = vector.extract_strided_slice %268 {offsets = [0, 128], sizes = [8, 128], strides = [1, 1]} : vector<8x512xf32> to vector<8x128xf32>
    %276 = arith.negf %275 : vector<8x128xf32>
    %277 = math.exp %276 : vector<8x128xf32>
    %cst_83 = arith.constant 1.000000e+00 : f32
    %278 = vector.broadcast %cst_83 : f32 to vector<8x128xf32>
    %279 = arith.addf %278, %277 : vector<8x128xf32>
    %280 = arith.divf %278, %279 : vector<8x128xf32>
    %281 = vector.extract_strided_slice %268 {offsets = [0, 256], sizes = [8, 128], strides = [1, 1]} : vector<8x512xf32> to vector<8x128xf32>
    %282 = math.tanh %281 : vector<8x128xf32>
    %283 = vector.extract_strided_slice %268 {offsets = [0, 384], sizes = [8, 128], strides = [1, 1]} : vector<8x512xf32> to vector<8x128xf32>
    %284 = arith.negf %283 : vector<8x128xf32>
    %285 = math.exp %284 : vector<8x128xf32>
    %cst_84 = arith.constant 1.000000e+00 : f32
    %286 = vector.broadcast %cst_84 : f32 to vector<8x128xf32>
    %287 = arith.addf %286, %285 : vector<8x128xf32>
    %288 = arith.divf %286, %287 : vector<8x128xf32>
    %289 = arith.mulf %280, %256 : vector<8x128xf32>
    %290 = arith.mulf %274, %282 : vector<8x128xf32>
    %291 = arith.addf %289, %290 : vector<8x128xf32>
    %292 = math.tanh %291 : vector<8x128xf32>
    %293 = arith.mulf %288, %292 : vector<8x128xf32>
    %294 = arith.index_cast %262 : i32 to index
    %c0_85 = arith.constant 0 : index
    %295 = vector.load %arg16[%294, %c0_85] : memref<64x128xf32, #tpu.memory_space<vmem>>, vector<8x128xf32>
    tpu.vector_store %arg16[%294, %c0_85], %293 {strides = array<i32>} : memref<64x128xf32, #tpu.memory_space<vmem>>, vector<8x128xf32>,
    %c8_i32_86 = arith.constant 8 : i32
    %c0_87 = arith.constant 0 : index
    %c0_88 = arith.constant 0 : index
    %296 = vector.load %arg17[%c0_87, %c0_88] : memref<8x128xf32, #tpu.memory_space<vmem>>, vector<8x128xf32>
    tpu.vector_store %arg17[%c0_87, %c0_88], %293 {strides = array<i32>} : memref<8x128xf32, #tpu.memory_space<vmem>>, vector<8x128xf32>,
    %c0_89 = arith.constant 0 : index
    %c0_90 = arith.constant 0 : index
    %297 = vector.load %arg18[%c0_89, %c0_90] : memref<8x128xf32, #tpu.memory_space<vmem>>, vector<8x128xf32>
    tpu.vector_store %arg18[%c0_89, %c0_90], %291 {strides = array<i32>} : memref<8x128xf32, #tpu.memory_space<vmem>>, vector<8x128xf32>,
    %c0_i32_91 = arith.constant 0 : i32
    %298 = arith.cmpi eq, %arg0, %c0_i32_91 : i32
    %299 = arith.extui %298 : i1 to i32
    %c0_i32_92 = arith.constant 0 : i32
    %300 = arith.cmpi ne, %299, %c0_i32_92 : i32
    scf.if %300 {
      %c2_i32_104 = arith.constant 2 : i32
      %312 = tpu.memref_slice %arg19[%c2_i32_104] : memref<3x!tpu.dma_semaphore, #tpu.memory_space<semaphore_mem>> -> memref<1x!tpu.dma_semaphore, #tpu.memory_space<semaphore_mem>>
      %313 = tpu.memref_squeeze %312 : memref<1x!tpu.dma_semaphore, #tpu.memory_space<semaphore_mem>> -> memref<!tpu.dma_semaphore, #tpu.memory_space<semaphore_mem>>
      tpu.wait_dma2 semaphore(%313 : memref<!tpu.dma_semaphore, #tpu.memory_space<semaphore_mem>>) src(%arg8 : memref<128x128xbf16, #tpu.memory_space<any>>) dst(%arg14 : memref<128x128xbf16, #tpu.memory_space<vmem>>)
    } else {
    }
    %c0_93 = arith.constant 0 : index
    %c0_94 = arith.constant 0 : index
    %301 = vector.load %arg16[%c0_93, %c0_94] : memref<64x128xf32, #tpu.memory_space<vmem>>, vector<64x128xf32>
    %302 = arith.truncf %301 : vector<64x128xf32> to vector<64x128xbf16>
    %c0_95 = arith.constant 0 : index
    %c0_96 = arith.constant 0 : index
    %303 = vector.load %arg14[%c0_95, %c0_96] : memref<128x128xbf16, #tpu.memory_space<vmem>>, vector<128x128xbf16>
    %cst_97 = arith.constant dense<0.000000e+00> : vector<64x128xf32>
    %304 = tpu.matmul %302, %303, %cst_97 {dimension_numbers = #tpu.dot_dimension_numbers<[1], [0], [0], [1], [0, 0, 1, 1], [], []>} : vector<64x128xbf16>, vector<128x128xbf16>, vector<64x128xf32> -> vector<64x128xf32>
    %c0_98 = arith.constant 0 : index
    %c0_99 = arith.constant 0 : index
    %305 = vector.load %arg5[%c0_98, %c0_99] : memref<1x128xf32, #tpu.memory_space<vmem>>, vector<1x128xf32>
    %306 = vector.broadcast %305 : vector<1x128xf32> to vector<64x128xf32>
    %307 = arith.addf %304, %306 : vector<64x128xf32>
    %c0_100 = arith.constant 0 : index
    %c0_101 = arith.constant 0 : index
    %308 = vector.load %arg9[%c0_100, %c0_101] : memref<64x128xf32, #tpu.memory_space<vmem>>, vector<64x128xf32>
    tpu.vector_store %arg9[%c0_100, %c0_101], %307 {strides = array<i32>} : memref<64x128xf32, #tpu.memory_space<vmem>>, vector<64x128xf32>,
    %c0_i32_102 = arith.constant 0 : i32
    %309 = arith.cmpi eq, %arg0, %c0_i32_102 : i32
    %310 = arith.extui %309 : i1 to i32
    %c0_i32_103 = arith.constant 0 : i32
    %311 = arith.cmpi ne, %310, %c0_i32_103 : i32
    scf.if %311 {
      %c0_104 = arith.constant 0 : index
      %c0_105 = arith.constant 0 : index
      %312 = vector.load %arg10[%c0_104, %c0_105] : memref<8x128xf32, #tpu.memory_space<vmem>>, vector<8x128xf32>
      tpu.vector_store %arg10[%c0_104, %c0_105], %293 {strides = array<i32>} : memref<8x128xf32, #tpu.memory_space<vmem>>, vector<8x128xf32>,
      %c0_106 = arith.constant 0 : index
      %c0_107 = arith.constant 0 : index
      %313 = vector.load %arg11[%c0_106, %c0_107] : memref<8x128xf32, #tpu.memory_space<vmem>>, vector<8x128xf32>
      tpu.vector_store %arg11[%c0_106, %c0_107], %291 {strides = array<i32>} : memref<8x128xf32, #tpu.memory_space<vmem>>, vector<8x128xf32>,
    } else {
    }
    return
  }
  func.func @transform_0(%arg0: i32) -> (i32, i32) {
    %c0_i32 = arith.constant 0 : i32
    %c0_i32_0 = arith.constant 0 : i32
    return %arg0, %c0_i32 : i32, i32
  }
  func.func @transform_1(%arg0: i32) -> (i32, i32) {
    %c0_i32 = arith.constant 0 : i32
    %c0_i32_0 = arith.constant 0 : i32
    %c0_i32_1 = arith.constant 0 : i32
    return %c0_i32, %c0_i32_0 : i32, i32
  }
  func.func @transform_2(%arg0: i32) -> (i32, i32) {
    %c0_i32 = arith.constant 0 : i32
    %c0_i32_0 = arith.constant 0 : i32
    %c0_i32_1 = arith.constant 0 : i32
    return %c0_i32, %c0_i32_0 : i32, i32
  }
  func.func @transform_3(%arg0: i32) -> (i32, i32) {
    %c0_i32 = arith.constant 0 : i32
    %c0_i32_0 = arith.constant 0 : i32
    %c0_i32_1 = arith.constant 0 : i32
    return %c0_i32, %c0_i32_0 : i32, i32
  }
  func.func @transform_4(%arg0: i32) -> (i32, i32) {
    %c0_i32 = arith.constant 0 : i32
    %c0_i32_0 = arith.constant 0 : i32
    %c0_i32_1 = arith.constant 0 : i32
    return %c0_i32, %c0_i32_0 : i32, i32
  }
  func.func @transform_8(%arg0: i32) -> (i32, i32) {
    %c0_i32 = arith.constant 0 : i32
    %c0_i32_0 = arith.constant 0 : i32
    return %arg0, %c0_i32 : i32, i32
  }
  func.func @transform_9(%arg0: i32) -> (i32, i32) {
    %c0_i32 = arith.constant 0 : i32
    %c0_i32_0 = arith.constant 0 : i32
    %c0_i32_1 = arith.constant 0 : i32
    return %c0_i32, %c0_i32_0 : i32, i32
  }
  func.func @transform_10(%arg0: i32) -> (i32, i32) {
    %c0_i32 = arith.constant 0 : i32
    %c0_i32_0 = arith.constant 0 : i32
    %c0_i32_1 = arith.constant 0 : i32
    return %c0_i32, %c0_i32_0 : i32, i32
  }
}

</mosaic_0001>

<llo_original>
// kernel: lstm_decoder_forward.2
$region0: #{lstm_decoder_forward.2}
  #allocation0 [shape = 'u32[]', space=smem, size = 0x4, offset = 0x4, fixed_abs, tag = 'smem constant byte address 0x4 - core index']
  #allocation1 [shape = 'u32[144,128]{1,0:T(1,128)}', space=vmem, size = 0x12000, scoped, tag = 'internal scratch']
  #allocation2 [shape = 'bf16[4,512]{1,0:T(4,128)(2,1)}', space=vmem, size = 0x1000, scoped, tag = 'scratch operand']
  #allocation3 [shape = 'bf16[128,512]{1,0:T(16,128)(2,1)}', space=vmem, size = 0x20000, scoped, tag = 'scratch operand']
  #allocation4 [shape = 'f32[64,512]{1,0:T(8,128)}', space=vmem, size = 0x20000, scoped, tag = 'scratch operand']
  #allocation5 [shape = 'f32[8,128]{1,0:T(8,128)}', space=vmem, size = 0x1000, scoped, tag = 'scratch operand']
  #allocation6 [shape = 'f32[8,128]{1,0:T(8,128)}', space=vmem, size = 0x1000, scoped, tag = 'scratch operand']
  #allocation7 [shape = 's32[2]{0}', space=sflag, size = 0x8, scoped, tag = 'scratch operand']
  #allocation8 [shape = 's32[]', space=sflag, size = 0x4, offset = 0, fixed_abs, tag = 'sflag constant byte address 0x0 - dummy sync flag']
  #allocation9 [shape = 's32[]', space=sflag, size = 0x4, offset = 0, fixed_abs, tag = 'sflag constant byte address 0x0 - dummy sync flag']
  %s0 = inlined_call_operand.vmem [shape: f32[64,4], index: 0, kind: input, shape index: {}]
  %s1 = inlined_call_operand.vmem [shape: f32[8,128], index: 1, kind: input, shape index: {}]
  %s2 = inlined_call_operand.vmem [shape: f32[8,128], index: 2, kind: input, shape index: {}]
  %s3 = inlined_call_operand.vmem [shape: f32[1,512], index: 3, kind: input, shape index: {}]
  %s4 = inlined_call_operand.vmem [shape: bf16[4,512], index: 4, kind: input, shape index: {}]
  %s5 = inlined_call_operand.hbm [shape: bf16[128,512], index: 5, kind: input, shape index: {}]
  %s6 = inlined_call_operand.vmem [shape: f32[64,128], index: 6, kind: output, shape index: {0}]
  %s7 = inlined_call_operand.vmem [shape: f32[8,128], index: 7, kind: output, shape index: {1}]
  %s8 = inlined_call_operand.vmem [shape: f32[8,128], index: 8, kind: output, shape index: {2}]
  %9 = xla_tuple %s6, %s7, %s8
  %s10 = sld [smem:[#allocation0]]
  $region88: #{lstm_decoder_forward.2} parent=0
    _
  %s12 = ssub.s32 1, %s10
  %s13 = scalar_select 0, %s12, %s10
  // Predicated region
  $region2: #{lstm_decoder_forward.2} parent=0 // pred_check
    _
  $region3: #{lstm_decoder_forward.2} parent=0 // pred_check_branch
    %15 = sbr.rel (0) target = $region5
  $region4: #{lstm_decoder_forward.2} parent=0 // pred_region
    _
  $region5: #{lstm_decoder_forward.2} parent=0 // pred_fallthru
    _
  // Predicated region
  $region6: #{lstm_decoder_forward.2} parent=0 // pred_check
    _
  $region7: #{lstm_decoder_forward.2} parent=0 // pred_check_branch
    %17 = sbr.rel (0) target = $region9
  $region8: #{lstm_decoder_forward.2} parent=0 // pred_region
    _
  $region9: #{lstm_decoder_forward.2} parent=0 // pred_fallthru
    _
  // Predicated region
  $region10: #{lstm_decoder_forward.2} parent=0 // pred_check
    _
  $region11: #{lstm_decoder_forward.2} parent=0 // pred_check_branch
    %19 = sbr.rel (0) target = $region13
  $region12: #{lstm_decoder_forward.2} parent=0 // pred_region
    _
  $region13: #{lstm_decoder_forward.2} parent=0 // pred_fallthru
    _
  // Predicated region
  $region14: #{lstm_decoder_forward.2} parent=0 // pred_check
    _
  $region15: #{lstm_decoder_forward.2} parent=0 // pred_check_branch
    %21 = sbr.rel (0) target = $region17
  $region16: #{lstm_decoder_forward.2} parent=0 // pred_region
    _
  $region17: #{lstm_decoder_forward.2} parent=0 // pred_fallthru
    _
  %p23 = scmp.eq.s32.totalorder 0, 0
  // Predicated region
  $region18: #{lstm_decoder_forward.2} parent=0 // pred_check
    %p24 = pneg %p23
  $region19: #{lstm_decoder_forward.2} parent=0 // pred_check_branch
    %26 = sbr.rel (%p24) target = $region21
  $region20: #{lstm_decoder_forward.2} parent=0 // pred_region
    #allocation10 [shape = 'u32[9]{0}', space=smem, size = 0x24, scoped, tag = 'DMA stride descriptor']
    %p28 = scmp.lt.u32.totalorder 8, 8
    %p29 = pneg %p28
    // Predicated region
    $region22: #{lstm_decoder_forward.2} parent=20 // pred_check
      _
    $region23: #{lstm_decoder_forward.2} parent=20 // pred_check_branch
      %31 = sbr.rel (%p28) target = $region25
    $region24: #{lstm_decoder_forward.2} parent=20 // pred_region
      %s46 = sand.u32 8, 7
      %p47 = scmp.eq.s32.totalorder %s46, 0
      // Predicated region
      $region37: #{lstm_decoder_forward.2} parent=24 // pred_check
        %p48 = pneg %p47
      $region38: #{lstm_decoder_forward.2} parent=24 // pred_check_branch
        %50 = sbr.rel (%p48) target = $region40
      $region39: #{lstm_decoder_forward.2} parent=24 // pred_region
        loop: start=0, step=1, limit=1
        $region41: #{lstm_decoder_forward.2} parent=39 // loop_pre_header
          _
        $region42: #{lstm_decoder_forward.2} parent=39 // loop_header
          %s52 = sphi 0, %s56
          %p53 = scmp.ge.s32.totalorder %s52, 1
          %s57 = sphi %s4, %s4
          %s58 = sphi [#allocation2], [#allocation2]
        $region43: #{lstm_decoder_forward.2} parent=39 // loop_header_branch
          %55 = sbr.rel (%p53) target = $region47
        $region44: #{lstm_decoder_forward.2} parent=39 // loop_body
          %v59 = vld [vmem:[%s57] sm:$0xff]
          %60 = vst [vmem:[%s58] sm:$0xff] %v59
        $region45: #{lstm_decoder_forward.2} parent=39 // loop_footer
          %s56 = sadd.s32 1, %s52
        $region46: #{lstm_decoder_forward.2} parent=39 // loop_footer_branch
          %51 = sbr.rel target = $region42
        $region47: #{lstm_decoder_forward.2} parent=39 // loop_exit
          _
      $region40: #{lstm_decoder_forward.2} parent=24 // pred_fallthru
        _
      %p61 = pneg %p47
      // Predicated region
      $region48: #{lstm_decoder_forward.2} parent=24 // pred_check
        _
      $region49: #{lstm_decoder_forward.2} parent=24 // pred_check_branch
        %63 = sbr.rel (%p47) target = $region51
      $region50: #{lstm_decoder_forward.2} parent=24 // pred_region
        %s64 = sand.u32 8, 7
      $region51: #{lstm_decoder_forward.2} parent=24 // pred_fallthru
        _
    $region25: #{lstm_decoder_forward.2} parent=20 // pred_fallthru
      _
    // Predicated region
    $region26: #{lstm_decoder_forward.2} parent=20 // pred_check
      %p32 = pneg %p28
    $region27: #{lstm_decoder_forward.2} parent=20 // pred_check_branch
      %34 = sbr.rel (%p32) target = $region29
    $region28: #{lstm_decoder_forward.2} parent=20 // pred_region
      %s35 = sshllo.u32 0, 8
      loop: start=0, step=1, limit=1
      $region30: #{lstm_decoder_forward.2} parent=28 // loop_pre_header
        _
      $region31: #{lstm_decoder_forward.2} parent=28 // loop_header
        %s37 = sphi 0, %s41
        %p38 = scmp.ge.s32.totalorder %s37, 1
        %s42 = sphi %s4, %s4
        %s43 = sphi [#allocation2], [#allocation2]
      $region32: #{lstm_decoder_forward.2} parent=28 // loop_header_branch
        %40 = sbr.rel (%p38) target = $region36
      $region33: #{lstm_decoder_forward.2} parent=28 // loop_body
        %v44 = vld [vmem:[%s42] sm:%s35]
        %45 = vst [vmem:[%s43] sm:%s35] %v44
      $region34: #{lstm_decoder_forward.2} parent=28 // loop_footer
        %s41 = sadd.s32 1, %s37
      $region35: #{lstm_decoder_forward.2} parent=28 // loop_footer_branch
        %36 = sbr.rel target = $region31
      $region36: #{lstm_decoder_forward.2} parent=28 // loop_exit
        _
    $region29: #{lstm_decoder_forward.2} parent=20 // pred_fallthru
      _
    // Predicated region
    $region52: #{lstm_decoder_forward.2} parent=20 // pred_check
      _
    $region53: #{lstm_decoder_forward.2} parent=20 // pred_check_branch
      %67 = sbr.rel (0) target = $region55
    $region54: #{lstm_decoder_forward.2} parent=20 // pred_region
      %68 = vsyncadd [#allocation7], 128
    $region55: #{lstm_decoder_forward.2} parent=20 // pred_fallthru
      _
    %s69 = scalar_lea.sflag [#allocation7], 1
    %s71 = sshll.u32 1, 14
    %s72 = sxor.u32 4294967295, %s71
    %s74 = sld [smem:[#allocation0]]
    %s75 = sadd.s32 2, %s74
    %s77 = sshll.u32 7, 26
    %s78 = sxor.u32 4294967295, %s77
    %s79 = sand.u32 0, %s78
    %s80 = sshll.u32 %s75, 26
    %s81 = sor.u32 %s79, %s80
    %s82 = sshll.u32 [#allocation3], 4
    %s83 = int_to_ptr.vmem [resolvable:$true] %s82
    %86 = sst [smem:[#allocation10]] 512
    %s87 = scalar_lea.smem [#allocation10], 1
    %88 = sst [smem:[%s87]] 512
    %s89 = scalar_lea.smem [#allocation10], 2
    %90 = sst [smem:[%s89]] 4
    %s91 = scalar_lea.smem [#allocation10], 3
    %92 = sst [smem:[%s91]] 64
    %s93 = scalar_lea.smem [#allocation10], 4
    %94 = sst [smem:[%s93]] 128
    %s95 = scalar_lea.smem [#allocation10], 5
    %96 = sst [smem:[%s95]] 2
    %s97 = scalar_lea.smem [#allocation10], 6
    %98 = sst [smem:[%s97]] 256
    %s99 = scalar_lea.smem [#allocation10], 7
    %100 = sst [smem:[%s99]] 64
    %s101 = scalar_lea.smem [#allocation10], 8
    %102 = sst [smem:[%s101]] 4
    %104 = dma.general %s5, 4096, %s83, %s69, [#allocation9], [#allocation10], %s81, 0
    %s105 = smul.u32 2, 1
    %s106 = smul.u32 %s105, 4
    %s107 = sshll.u32 %s106, 4
    %108 = dma.done [#allocation7], %s107
    %v109 = vld [vmem:[%s1] sm:$0xff]
    %110 = vst [vmem:[#allocation5] sm:$0xff] %v109
    %v111 = vld [vmem:[%s2] sm:$0xff]
    %112 = vst [vmem:[#allocation6] sm:$0xff] %v111
  $region21: #{lstm_decoder_forward.2} parent=0 // pred_fallthru
    _
  %v113 = vld [vmem:[%s0] sm:$0xff]
  %v114 = vld [vmem:[%s0 + $0x8] sm:$0xff]
  %v115 = vld [vmem:[%s0 + $0x10] sm:$0xff]
  %v116 = vld [vmem:[%s0 + $0x18] sm:$0xff]
  %v117 = vld [vmem:[%s0 + $0x20] sm:$0xff]
  %v118 = vld [vmem:[%s0 + $0x28] sm:$0xff]
  %v119 = vld [vmem:[%s0 + $0x30] sm:$0xff]
  %v120 = vld [vmem:[%s0 + $0x38] sm:$0xff]
  %v121 = vpack.c.bf16 %v114, %v113
  %v122 = vpack.c.bf16 %v116, %v115
  %v123 = vpack.c.bf16 %v118, %v117
  %v124 = vpack.c.bf16 %v120, %v119
  %v125 = vld [vmem:[#allocation2] sm:$0xff]
  %v126 = vld [vmem:[%s3] sm:$0xf]
  %v128 = vlaneseq
  %v129 = vshrl.u32 %v128, 7
  %v130 = vsub.s32 0, %v129
  %v131 = vrot.slane %v126, %v130
  %v132 = vlaneseq
  %v133 = vshrl.u32 %v132, 7
  %v134 = vsub.s32 1, %v133
  %v135 = vrot.slane %v126, %v134
  %v136 = vlaneseq
  %v137 = vshrl.u32 %v136, 7
  %v138 = vsub.s32 2, %v137
  %v139 = vrot.slane %v126, %v138
  %v140 = vlaneseq
  %v141 = vshrl.u32 %v140, 7
  %v142 = vsub.s32 3, %v141
  %v143 = vrot.slane %v126, %v142
  %v149 = vcombine.high %v125, %v125
  %v151 = vunpack.c.l.s4 1983009808
  %v152 = vunpack.c.0.s8 %v151
  %v153 = vlaneseq
  %v154 = vshrl.u32 %v153, 7
  %v155 = vsub.s32 %v152, %v154
  %v156 = vrot.slane %v125, %v155
  %v158 = vunpack.c.l.s4 1983009808
  %v159 = vunpack.c.0.s8 %v158
  %v160 = vlaneseq
  %v161 = vshrl.u32 %v160, 7
  %v162 = vsub.s32 %v159, %v161
  %v163 = vrot.slane %v149, %v162
  %v164 = vcombine.high %v156, %v156
  %v165 = vcombine.high %v163, %v163
  %vm166 = vcmask 31744
  %v168 = vsel %vm166, %v121, 0
  %v171 = vsel %vm166, %v122, 0
  %v174 = vsel %vm166, %v123, 0
  %v177 = vsel %vm166, %v124, 0
  %vm179 = vcmask 1041408
  %v181 = vsel %vm179, %v156, 0
  %v184 = vsel %vm179, %v164, 0
  %v187 = vsel %vm179, %v163, 0
  %v190 = vsel %vm179, %v165, 0
  %192 = vmatprep.subr.bf16.mxu0 %v184
  %193 = vmatpush1.bf16.msra.mxu0 %v181
  %194 = vmatprep.subr.bf16.mxu0 0
  %195 = vmatpush1.bf16.msra.mxu0 0
  %196 = vmatprep.subr.bf16.mxu0 0
  %197 = vmatpush1.bf16.msra.mxu0 0
  %198 = vmatprep.subr.bf16.mxu0 0
  %199 = vmatpush1.bf16.msra.mxu0 0
  %200 = vmatprep.subr.bf16.mxu0 0
  %201 = vmatpush1.bf16.msra.mxu0 0
  %202 = vmatprep.subr.bf16.mxu0 0
  %203 = vmatpush1.bf16.msra.mxu0 0
  %204 = vmatprep.subr.bf16.mxu0 0
  %205 = vmatpush1.bf16.msra.mxu0 0
  %206 = vmatprep.subr.bf16.mxu0 0
  %207 = vmatpush1.bf16.msra.mxu0 0
  %208 = vmatprep.subr.bf16.mxu0 0
  %209 = vmatpush1.bf16.msra.mxu0 0
  %210 = vmatprep.subr.bf16.mxu0 0
  %211 = vmatpush1.bf16.msra.mxu0 0
  %212 = vmatprep.subr.bf16.mxu0 0
  %213 = vmatpush1.bf16.msra.mxu0 0
  %214 = vmatprep.subr.bf16.mxu0 0
  %215 = vmatpush1.bf16.msra.mxu0 0
  %216 = vmatprep.subr.bf16.mxu0 0
  %217 = vmatpush1.bf16.msra.mxu0 0
  %218 = vmatprep.subr.bf16.mxu0 0
  %219 = vmatpush1.bf16.msra.mxu0 0
  %220 = vmatprep.subr.bf16.mxu0 0
  %221 = vmatpush1.bf16.msra.mxu0 0
  %222 = vmatprep.subr.bf16.mxu0 0
  %223 = vmatpush1.bf16.msra.mxu0 0
  %224 = vmatprep.mubr.bf16.mxu0 0
  %225 = vmatmul.mubr.bf16.gmra.mrb[0].mxu0 %v168
  %v226 = vpop.f32.mrb[0].mxu0
  %v227 = vadd.f32 %v131, %v226
  %v228 = vpop.f32.mrb[0].mxu0
  %v229 = vadd.f32 %v135, %v228
  %v230 = vpop.f32.mrb[0].mxu0
  %v231 = vadd.f32 %v131, %v230
  %v232 = vpop.f32.mrb[0].mxu0
  %v233 = vadd.f32 %v135, %v232
  %234 = vmatprep.mubr.bf16.mxu0 0
  %235 = vmatmul.mubr.bf16.gmra.mrb[0].mxu0 %v171
  %v236 = vpop.f32.mrb[0].mxu0
  %v237 = vadd.f32 %v131, %v236
  %v238 = vpop.f32.mrb[0].mxu0
  %v239 = vadd.f32 %v135, %v238
  %v240 = vpop.f32.mrb[0].mxu0
  %v241 = vadd.f32 %v131, %v240
  %v242 = vpop.f32.mrb[0].mxu0
  %v243 = vadd.f32 %v135, %v242
  %244 = vmatprep.mubr.bf16.mxu0 0
  %245 = vmatmul.mubr.bf16.gmra.mrb[0].mxu0 %v174
  %v246 = vpop.f32.mrb[0].mxu0
  %v247 = vadd.f32 %v131, %v246
  %v248 = vpop.f32.mrb[0].mxu0
  %v249 = vadd.f32 %v135, %v248
  %v250 = vpop.f32.mrb[0].mxu0
  %v251 = vadd.f32 %v131, %v250
  %v252 = vpop.f32.mrb[0].mxu0
  %v253 = vadd.f32 %v135, %v252
  %254 = vmatprep.mubr.bf16.mxu0 0
  %255 = vmatmul.mubr.bf16.gmra.mrb[0].mxu0 %v177
  %v256 = vpop.f32.mrb[0].mxu0
  %v257 = vadd.f32 %v131, %v256
  %v258 = vpop.f32.mrb[0].mxu0
  %v259 = vadd.f32 %v135, %v258
  %v260 = vpop.f32.mrb[0].mxu0
  %v261 = vadd.f32 %v131, %v260
  %v262 = vpop.f32.mrb[0].mxu0
  %v263 = vadd.f32 %v135, %v262
  %264 = vdwg.mxu0
  %265 = vmatprep.subr.bf16.mxu0 %v190
  %266 = vmatpush1.bf16.msra.mxu0 %v187
  %267 = vmatprep.subr.bf16.mxu0 0
  %268 = vmatpush1.bf16.msra.mxu0 0
  %269 = vmatprep.subr.bf16.mxu0 0
  %270 = vmatpush1.bf16.msra.mxu0 0
  %271 = vmatprep.subr.bf16.mxu0 0
  %272 = vmatpush1.bf16.msra.mxu0 0
  %273 = vmatprep.subr.bf16.mxu0 0
  %274 = vmatpush1.bf16.msra.mxu0 0
  %275 = vmatprep.subr.bf16.mxu0 0
  %276 = vmatpush1.bf16.msra.mxu0 0
  %277 = vmatprep.subr.bf16.mxu0 0
  %278 = vmatpush1.bf16.msra.mxu0 0
  %279 = vmatprep.subr.bf16.mxu0 0
  %280 = vmatpush1.bf16.msra.mxu0 0
  %281 = vmatprep.subr.bf16.mxu0 0
  %282 = vmatpush1.bf16.msra.mxu0 0
  %283 = vmatprep.subr.bf16.mxu0 0
  %284 = vmatpush1.bf16.msra.mxu0 0
  %285 = vmatprep.subr.bf16.mxu0 0
  %286 = vmatpush1.bf16.msra.mxu0 0
  %287 = vmatprep.subr.bf16.mxu0 0
  %288 = vmatpush1.bf16.msra.mxu0 0
  %289 = vmatprep.subr.bf16.mxu0 0
  %290 = vmatpush1.bf16.msra.mxu0 0
  %291 = vmatprep.subr.bf16.mxu0 0
  %292 = vmatpush1.bf16.msra.mxu0 0
  %293 = vmatprep.subr.bf16.mxu0 0
  %294 = vmatpush1.bf16.msra.mxu0 0
  %295 = vmatprep.subr.bf16.mxu0 0
  %296 = vmatpush1.bf16.msra.mxu0 0
  %297 = vmatprep.mubr.bf16.mxu0 0
  %298 = vmatmul.mubr.bf16.gmra.mrb[0].mxu0 %v168
  %v299 = vpop.f32.mrb[0].mxu0
  %v300 = vadd.f32 %v139, %v299
  %v301 = vpop.f32.mrb[0].mxu0
  %v302 = vadd.f32 %v143, %v301
  %v303 = vpop.f32.mrb[0].mxu0
  %v304 = vadd.f32 %v139, %v303
  %v305 = vpop.f32.mrb[0].mxu0
  %v306 = vadd.f32 %v143, %v305
  %307 = vmatprep.mubr.bf16.mxu0 0
  %308 = vmatmul.mubr.bf16.gmra.mrb[0].mxu0 %v171
  %v309 = vpop.f32.mrb[0].mxu0
  %v310 = vadd.f32 %v139, %v309
  %v311 = vpop.f32.mrb[0].mxu0
  %v312 = vadd.f32 %v143, %v311
  %v313 = vpop.f32.mrb[0].mxu0
  %v314 = vadd.f32 %v139, %v313
  %v315 = vpop.f32.mrb[0].mxu0
  %v316 = vadd.f32 %v143, %v315
  %317 = vmatprep.mubr.bf16.mxu0 0
  %318 = vmatmul.mubr.bf16.gmra.mrb[0].mxu0 %v174
  %v319 = vpop.f32.mrb[0].mxu0
  %v320 = vadd.f32 %v139, %v319
  %v321 = vpop.f32.mrb[0].mxu0
  %v322 = vadd.f32 %v143, %v321
  %v323 = vpop.f32.mrb[0].mxu0
  %v324 = vadd.f32 %v139, %v323
  %v325 = vpop.f32.mrb[0].mxu0
  %v326 = vadd.f32 %v143, %v325
  %327 = vmatprep.mubr.bf16.mxu0 0
  %328 = vmatmul.mubr.bf16.gmra.mrb[0].mxu0 %v177
  %v329 = vpop.f32.mrb[0].mxu0
  %v330 = vadd.f32 %v139, %v329
  %v331 = vpop.f32.mrb[0].mxu0
  %v332 = vadd.f32 %v143, %v331
  %v333 = vpop.f32.mrb[0].mxu0
  %v334 = vadd.f32 %v139, %v333
  %v335 = vpop.f32.mrb[0].mxu0
  %v336 = vadd.f32 %v143, %v335
  %337 = vdwg.mxu0
  %338 = vst [vmem:[#allocation4] sm:$0xff] %v227
  %339 = vst [vmem:[#allocation4 + $0x8] sm:$0xff] %v229
  %340 = vst [vmem:[#allocation4 + $0x10] sm:$0xff] %v300
  %341 = vst [vmem:[#allocation4 + $0x18] sm:$0xff] %v302
  %342 = vst [vmem:[#allocation4 + $0x20] sm:$0xff] %v231
  %343 = vst [vmem:[#allocation4 + $0x28] sm:$0xff] %v233
  %344 = vst [vmem:[#allocation4 + $0x30] sm:$0xff] %v304
  %345 = vst [vmem:[#allocation4 + $0x38] sm:$0xff] %v306
  %346 = vst [vmem:[#allocation4 + $0x40] sm:$0xff] %v237
  %347 = vst [vmem:[#allocation4 + $0x48] sm:$0xff] %v239
  %348 = vst [vmem:[#allocation4 + $0x50] sm:$0xff] %v310
  %349 = vst [vmem:[#allocation4 + $0x58] sm:$0xff] %v312
  %350 = vst [vmem:[#allocation4 + $0x60] sm:$0xff] %v241
  %351 = vst [vmem:[#allocation4 + $0x68] sm:$0xff] %v243
  %352 = vst [vmem:[#allocation4 + $0x70] sm:$0xff] %v314
  %353 = vst [vmem:[#allocation4 + $0x78] sm:$0xff] %v316
  %354 = vst [vmem:[#allocation4 + $0x80] sm:$0xff] %v247
  %355 = vst [vmem:[#allocation4 + $0x88] sm:$0xff] %v249
  %356 = vst [vmem:[#allocation4 + $0x90] sm:$0xff] %v320
  %357 = vst [vmem:[#allocation4 + $0x98] sm:$0xff] %v322
  %358 = vst [vmem:[#allocation4 + $0xa0] sm:$0xff] %v251
  %359 = vst [vmem:[#allocation4 + $0xa8] sm:$0xff] %v253
  %360 = vst [vmem:[#allocation4 + $0xb0] sm:$0xff] %v324
  %361 = vst [vmem:[#allocation4 + $0xb8] sm:$0xff] %v326
  %362 = vst [vmem:[#allocation4 + $0xc0] sm:$0xff] %v257
  %363 = vst [vmem:[#allocation4 + $0xc8] sm:$0xff] %v259
  %364 = vst [vmem:[#allocation4 + $0xd0] sm:$0xff] %v330
  %365 = vst [vmem:[#allocation4 + $0xd8] sm:$0xff] %v332
  %366 = vst [vmem:[#allocation4 + $0xe0] sm:$0xff] %v261
  %367 = vst [vmem:[#allocation4 + $0xe8] sm:$0xff] %v263
  %368 = vst [vmem:[#allocation4 + $0xf0] sm:$0xff] %v334
  %369 = vst [vmem:[#allocation4 + $0xf8] sm:$0xff] %v336
  // Predicated region
  $region56: #{lstm_decoder_forward.2} parent=0 // pred_check
    %p370 = pneg %p23
  $region57: #{lstm_decoder_forward.2} parent=0 // pred_check_branch
    %372 = sbr.rel (%p370) target = $region59
  $region58: #{lstm_decoder_forward.2} parent=0 // pred_region
    %s373 = scalar_lea.sflag [#allocation7], 1
    %s374 = smul.u32 4, 16
    %s375 = smul.u32 %s374, 4
    %s376 = sshll.u32 %s375, 4
    %377 = dma.done %s373, %s376
  $region59: #{lstm_decoder_forward.2} parent=0 // pred_fallthru
    _
  %v378 = vld [vmem:[#allocation5] sm:$0xff]
  %v379 = vld [vmem:[#allocation6] sm:$0xff]
  %s380 = smul.u32 0, 4
  %s381 = smul.addr %s380, 8
  %s382 = scalar_lea.vmem [#allocation4], %s381
  %v383 = vld [vmem:[%s382] sm:$0xff]
  %v384 = vld [vmem:[%s382 + $0x8] sm:$0xff]
  %v385 = vld [vmem:[%s382 + $0x10] sm:$0xff]
  %v386 = vld [vmem:[%s382 + $0x18] sm:$0xff]
  %v387 = vpack.c.bf16 %v378, %v378
  %v388 = vld [vmem:[#allocation3] sm:$0xff]
  %v389 = vld [vmem:[#allocation3 + $0x8] sm:$0xff]
  %v390 = vld [vmem:[#allocation3 + $0x10] sm:$0xff]
  %v391 = vld [vmem:[#allocation3 + $0x18] sm:$0xff]
  %v392 = vld [vmem:[#allocation3 + $0x20] sm:$0xff]
  %v393 = vld [vmem:[#allocation3 + $0x28] sm:$0xff]
  %v394 = vld [vmem:[#allocation3 + $0x30] sm:$0xff]
  %v395 = vld [vmem:[#allocation3 + $0x38] sm:$0xff]
  %v396 = vld [vmem:[#allocation3 + $0x40] sm:$0xff]
  %v397 = vld [vmem:[#allocation3 + $0x48] sm:$0xff]
  %v398 = vld [vmem:[#allocation3 + $0x50] sm:$0xff]
  %v399 = vld [vmem:[#allocation3 + $0x58] sm:$0xff]
  %v400 = vld [vmem:[#allocation3 + $0x60] sm:$0xff]
  %v401 = vld [vmem:[#allocation3 + $0x68] sm:$0xff]
  %v402 = vld [vmem:[#allocation3 + $0x70] sm:$0xff]
  %v403 = vld [vmem:[#allocation3 + $0x78] sm:$0xff]
  %v404 = vld [vmem:[#allocation3 + $0x80] sm:$0xff]
  %v405 = vld [vmem:[#allocation3 + $0x88] sm:$0xff]
  %v406 = vld [vmem:[#allocation3 + $0x90] sm:$0xff]
  %v407 = vld [vmem:[#allocation3 + $0x98] sm:$0xff]
  %v408 = vld [vmem:[#allocation3 + $0xa0] sm:$0xff]
  %v409 = vld [vmem:[#allocation3 + $0xa8] sm:$0xff]
  %v410 = vld [vmem:[#allocation3 + $0xb0] sm:$0xff]
  %v411 = vld [vmem:[#allocation3 + $0xb8] sm:$0xff]
  %v412 = vld [vmem:[#allocation3 + $0xc0] sm:$0xff]
  %v413 = vld [vmem:[#allocation3 + $0xc8] sm:$0xff]
  %v414 = vld [vmem:[#allocation3 + $0xd0] sm:$0xff]
  %v415 = vld [vmem:[#allocation3 + $0xd8] sm:$0xff]
  %v416 = vld [vmem:[#allocation3 + $0xe0] sm:$0xff]
  %v417 = vld [vmem:[#allocation3 + $0xe8] sm:$0xff]
  %v418 = vld [vmem:[#allocation3 + $0xf0] sm:$0xff]
  %v419 = vld [vmem:[#allocation3 + $0xf8] sm:$0xff]
  %420 = vmatprep.subr.bf16.mxu0 %v389
  %421 = vmatpush1.bf16.msra.mxu0 %v388
  %422 = vmatprep.subr.bf16.mxu0 %v393
  %423 = vmatpush1.bf16.msra.mxu0 %v392
  %424 = vmatprep.subr.bf16.mxu0 %v397
  %425 = vmatpush1.bf16.msra.mxu0 %v396
  %426 = vmatprep.subr.bf16.mxu0 %v401
  %427 = vmatpush1.bf16.msra.mxu0 %v400
  %428 = vmatprep.subr.bf16.mxu0 %v405
  %429 = vmatpush1.bf16.msra.mxu0 %v404
  %430 = vmatprep.subr.bf16.mxu0 %v409
  %431 = vmatpush1.bf16.msra.mxu0 %v408
  %432 = vmatprep.subr.bf16.mxu0 %v413
  %433 = vmatpush1.bf16.msra.mxu0 %v412
  %434 = vmatprep.subr.bf16.mxu0 %v417
  %435 = vmatpush1.bf16.msra.mxu0 %v416
  %436 = vmatprep.subr.bf16.mxu0 0
  %437 = vmatpush1.bf16.msra.mxu0 0
  %438 = vmatprep.subr.bf16.mxu0 0
  %439 = vmatpush1.bf16.msra.mxu0 0
  %440 = vmatprep.subr.bf16.mxu0 0
  %441 = vmatpush1.bf16.msra.mxu0 0
  %442 = vmatprep.subr.bf16.mxu0 0
  %443 = vmatpush1.bf16.msra.mxu0 0
  %444 = vmatprep.subr.bf16.mxu0 0
  %445 = vmatpush1.bf16.msra.mxu0 0
  %446 = vmatprep.subr.bf16.mxu0 0
  %447 = vmatpush1.bf16.msra.mxu0 0
  %448 = vmatprep.subr.bf16.mxu0 0
  %449 = vmatpush1.bf16.msra.mxu0 0
  %450 = vmatprep.subr.bf16.mxu0 0
  %451 = vmatpush1.bf16.msra.mxu0 0
  %452 = vmatprep.mubr.bf16.mxu0 0
  %453 = vmatmul.mubr.bf16.gmra.mrb[0].mxu0 %v387
  %v454 = vpop.f32.mrb[0].mxu0
  %v455 = vadd.f32 0.0, %v454
  %v456 = vpop.f32.mrb[0].mxu0
  %v457 = vadd.f32 0.0, %v456
  %v458 = vpop.f32.mrb[0].mxu0
  %v459 = vpop.f32.mrb[0].mxu0
  %460 = vdwg.mxu0
  %461 = vmatprep.subr.bf16.mxu0 %v391
  %462 = vmatpush1.bf16.msra.mxu0 %v390
  %463 = vmatprep.subr.bf16.mxu0 %v395
  %464 = vmatpush1.bf16.msra.mxu0 %v394
  %465 = vmatprep.subr.bf16.mxu0 %v399
  %466 = vmatpush1.bf16.msra.mxu0 %v398
  %467 = vmatprep.subr.bf16.mxu0 %v403
  %468 = vmatpush1.bf16.msra.mxu0 %v402
  %469 = vmatprep.subr.bf16.mxu0 %v407
  %470 = vmatpush1.bf16.msra.mxu0 %v406
  %471 = vmatprep.subr.bf16.mxu0 %v411
  %472 = vmatpush1.bf16.msra.mxu0 %v410
  %473 = vmatprep.subr.bf16.mxu0 %v415
  %474 = vmatpush1.bf16.msra.mxu0 %v414
  %475 = vmatprep.subr.bf16.mxu0 %v419
  %476 = vmatpush1.bf16.msra.mxu0 %v418
  %477 = vmatprep.subr.bf16.mxu0 0
  %478 = vmatpush1.bf16.msra.mxu0 0
  %479 = vmatprep.subr.bf16.mxu0 0
  %480 = vmatpush1.bf16.msra.mxu0 0
  %481 = vmatprep.subr.bf16.mxu0 0
  %482 = vmatpush1.bf16.msra.mxu0 0
  %483 = vmatprep.subr.bf16.mxu0 0
  %484 = vmatpush1.bf16.msra.mxu0 0
  %485 = vmatprep.subr.bf16.mxu0 0
  %486 = vmatpush1.bf16.msra.mxu0 0
  %487 = vmatprep.subr.bf16.mxu0 0
  %488 = vmatpush1.bf16.msra.mxu0 0
  %489 = vmatprep.subr.bf16.mxu0 0
  %490 = vmatpush1.bf16.msra.mxu0 0
  %491 = vmatprep.subr.bf16.mxu0 0
  %492 = vmatpush1.bf16.msra.mxu0 0
  %493 = vmatprep.mubr.bf16.mxu0 0
  %494 = vmatmul.mubr.bf16.gmra.mrb[0].mxu0 %v387
  %v495 = vpop.f32.mrb[0].mxu0
  %v496 = vadd.f32 0.0, %v495
  %v497 = vpop.f32.mrb[0].mxu0
  %v498 = vadd.f32 0.0, %v497
  %v499 = vpop.f32.mrb[0].mxu0
  %v500 = vpop.f32.mrb[0].mxu0
  %501 = vdwg.mxu0
  %v502 = vadd.f32 %v383, %v455
  %v503 = vadd.f32 %v384, %v457
  %v504 = vadd.f32 %v385, %v496
  %v505 = vadd.f32 %v386, %v498
  %v506 = vxor.u32 %v502, 2147483648
  %v507 = vmul.f32 %v506, 1.442695
  %v508 = vpow.pop %v507
  %v509 = vadd.f32 %v508, 1.0
  %v510 = vrcp.pop %v509
  %v511 = vmul.f32 1.0, %v510
  %v512 = vxor.u32 %v503, 2147483648
  %v513 = vmul.f32 %v512, 1.442695
  %v514 = vpow.pop %v513
  %v515 = vadd.f32 %v514, 1.0
  %v516 = vrcp.pop %v515
  %v517 = vmul.f32 1.0, %v516
  %v518 = vtanh.pop %v504
  %v519 = vxor.u32 %v505, 2147483648
  %v520 = vmul.f32 %v519, 1.442695
  %v521 = vpow.pop %v520
  %v522 = vadd.f32 %v521, 1.0
  %v523 = vrcp.pop %v522
  %v524 = vmul.f32 1.0, %v523
  %v525 = vmul.f32 %v517, %v379
  %v526 = vmul.f32 %v511, %v518
  %v527 = vadd.f32 %v525, %v526
  %v528 = vtanh.pop %v527
  %v529 = vmul.f32 %v524, %v528
  %530 = vst [vmem:[%s6] sm:$0xff] %v529
  %s531 = smul.u32 1, 4
  %s532 = smul.addr %s531, 8
  %s533 = scalar_lea.vmem [#allocation4], %s532
  %v534 = vld [vmem:[%s533] sm:$0xff]
  %v535 = vld [vmem:[%s533 + $0x8] sm:$0xff]
  %v536 = vld [vmem:[%s533 + $0x10] sm:$0xff]
  %v537 = vld [vmem:[%s533 + $0x18] sm:$0xff]
  %v538 = vpack.c.bf16 %v529, %v529
  %v539 = vld [vmem:[#allocation3] sm:$0xff]
  %v540 = vld [vmem:[#allocation3 + $0x8] sm:$0xff]
  %v541 = vld [vmem:[#allocation3 + $0x10] sm:$0xff]
  %v542 = vld [vmem:[#allocation3 + $0x18] sm:$0xff]
  %v543 = vld [vmem:[#allocation3 + $0x20] sm:$0xff]
  %v544 = vld [vmem:[#allocation3 + $0x28] sm:$0xff]
  %v545 = vld [vmem:[#allocation3 + $0x30] sm:$0xff]
  %v546 = vld [vmem:[#allocation3 + $0x38] sm:$0xff]
  %v547 = vld [vmem:[#allocation3 + $0x40] sm:$0xff]
  %v548 = vld [vmem:[#allocation3 + $0x48] sm:$0xff]
  %v549 = vld [vmem:[#allocation3 + $0x50] sm:$0xff]
  %v550 = vld [vmem:[#allocation3 + $0x58] sm:$0xff]
  %v551 = vld [vmem:[#allocation3 + $0x60] sm:$0xff]
  %v552 = vld [vmem:[#allocation3 + $0x68] sm:$0xff]
  %v553 = vld [vmem:[#allocation3 + $0x70] sm:$0xff]
  %v554 = vld [vmem:[#allocation3 + $0x78] sm:$0xff]
  %v555 = vld [vmem:[#allocation3 + $0x80] sm:$0xff]
  %v556 = vld [vmem:[#allocation3 + $0x88] sm:$0xff]
  %v557 = vld [vmem:[#allocation3 + $0x90] sm:$0xff]
  %v558 = vld [vmem:[#allocation3 + $0x98] sm:$0xff]
  %v559 = vld [vmem:[#allocation3 + $0xa0] sm:$0xff]
  %v560 = vld [vmem:[#allocation3 + $0xa8] sm:$0xff]
  %v561 = vld [vmem:[#allocation3 + $0xb0] sm:$0xff]
  %v562 = vld [vmem:[#allocation3 + $0xb8] sm:$0xff]
  %v563 = vld [vmem:[#allocation3 + $0xc0] sm:$0xff]
  %v564 = vld [vmem:[#allocation3 + $0xc8] sm:$0xff]
  %v565 = vld [vmem:[#allocation3 + $0xd0] sm:$0xff]
  %v566 = vld [vmem:[#allocation3 + $0xd8] sm:$0xff]
  %v567 = vld [vmem:[#allocation3 + $0xe0] sm:$0xff]
  %v568 = vld [vmem:[#allocation3 + $0xe8] sm:$0xff]
  %v569 = vld [vmem:[#allocation3 + $0xf0] sm:$0xff]
  %v570 = vld [vmem:[#allocation3 + $0xf8] sm:$0xff]
  %571 = vmatprep.subr.bf16.mxu0 %v540
  %572 = vmatpush1.bf16.msra.mxu0 %v539
  %573 = vmatprep.subr.bf16.mxu0 %v544
  %574 = vmatpush1.bf16.msra.mxu0 %v543
  %575 = vmatprep.subr.bf16.mxu0 %v548
  %576 = vmatpush1.bf16.msra.mxu0 %v547
  %577 = vmatprep.subr.bf16.mxu0 %v552
  %578 = vmatpush1.bf16.msra.mxu0 %v551
  %579 = vmatprep.subr.bf16.mxu0 %v556
  %580 = vmatpush1.bf16.msra.mxu0 %v555
  %581 = vmatprep.subr.bf16.mxu0 %v560
  %582 = vmatpush1.bf16.msra.mxu0 %v559
  %583 = vmatprep.subr.bf16.mxu0 %v564
  %584 = vmatpush1.bf16.msra.mxu0 %v563
  %585 = vmatprep.subr.bf16.mxu0 %v568
  %586 = vmatpush1.bf16.msra.mxu0 %v567
  %587 = vmatprep.subr.bf16.mxu0 0
  %588 = vmatpush1.bf16.msra.mxu0 0
  %589 = vmatprep.subr.bf16.mxu0 0
  %590 = vmatpush1.bf16.msra.mxu0 0
  %591 = vmatprep.subr.bf16.mxu0 0
  %592 = vmatpush1.bf16.msra.mxu0 0
  %593 = vmatprep.subr.bf16.mxu0 0
  %594 = vmatpush1.bf16.msra.mxu0 0
  %595 = vmatprep.subr.bf16.mxu0 0
  %596 = vmatpush1.bf16.msra.mxu0 0
  %597 = vmatprep.subr.bf16.mxu0 0
  %598 = vmatpush1.bf16.msra.mxu0 0
  %599 = vmatprep.subr.bf16.mxu0 0
  %600 = vmatpush1.bf16.msra.mxu0 0
  %601 = vmatprep.subr.bf16.mxu0 0
  %602 = vmatpush1.bf16.msra.mxu0 0
  %603 = vmatprep.mubr.bf16.mxu0 0
  %604 = vmatmul.mubr.bf16.gmra.mrb[0].mxu0 %v538
  %v605 = vpop.f32.mrb[0].mxu0
  %v606 = vadd.f32 0.0, %v605
  %v607 = vpop.f32.mrb[0].mxu0
  %v608 = vadd.f32 0.0, %v607
  %v609 = vpop.f32.mrb[0].mxu0
  %v610 = vpop.f32.mrb[0].mxu0
  %611 = vdwg.mxu0
  %612 = vmatprep.subr.bf16.mxu0 %v542
  %613 = vmatpush1.bf16.msra.mxu0 %v541
  %614 = vmatprep.subr.bf16.mxu0 %v546
  %615 = vmatpush1.bf16.msra.mxu0 %v545
  %616 = vmatprep.subr.bf16.mxu0 %v550
  %617 = vmatpush1.bf16.msra.mxu0 %v549
  %618 = vmatprep.subr.bf16.mxu0 %v554
  %619 = vmatpush1.bf16.msra.mxu0 %v553
  %620 = vmatprep.subr.bf16.mxu0 %v558
  %621 = vmatpush1.bf16.msra.mxu0 %v557
  %622 = vmatprep.subr.bf16.mxu0 %v562
  %623 = vmatpush1.bf16.msra.mxu0 %v561
  %624 = vmatprep.subr.bf16.mxu0 %v566
  %625 = vmatpush1.bf16.msra.mxu0 %v565
  %626 = vmatprep.subr.bf16.mxu0 %v570
  %627 = vmatpush1.bf16.msra.mxu0 %v569
  %628 = vmatprep.subr.bf16.mxu0 0
  %629 = vmatpush1.bf16.msra.mxu0 0
  %630 = vmatprep.subr.bf16.mxu0 0
  %631 = vmatpush1.bf16.msra.mxu0 0
  %632 = vmatprep.subr.bf16.mxu0 0
  %633 = vmatpush1.bf16.msra.mxu0 0
  %634 = vmatprep.subr.bf16.mxu0 0
  %635 = vmatpush1.bf16.msra.mxu0 0
  %636 = vmatprep.subr.bf16.mxu0 0
  %637 = vmatpush1.bf16.msra.mxu0 0
  %638 = vmatprep.subr.bf16.mxu0 0
  %639 = vmatpush1.bf16.msra.mxu0 0
  %640 = vmatprep.subr.bf16.mxu0 0
  %641 = vmatpush1.bf16.msra.mxu0 0
  %642 = vmatprep.subr.bf16.mxu0 0
  %643 = vmatpush1.bf16.msra.mxu0 0
  %644 = vmatprep.mubr.bf16.mxu0 0
  %645 = vmatmul.mubr.bf16.gmra.mrb[0].mxu0 %v538
  %v646 = vpop.f32.mrb[0].mxu0
  %v647 = vadd.f32 0.0, %v646
  %v648 = vpop.f32.mrb[0].mxu0
  %v649 = vadd.f32 0.0, %v648
  %v650 = vpop.f32.mrb[0].mxu0
  %v651 = vpop.f32.mrb[0].mxu0
  %652 = vdwg.mxu0
  %v653 = vadd.f32 %v534, %v606
  %v654 = vadd.f32 %v535, %v608
  %v655 = vadd.f32 %v536, %v647
  %v656 = vadd.f32 %v537, %v649
  %v657 = vxor.u32 %v653, 2147483648
  %v658 = vmul.f32 %v657, 1.442695
  %v659 = vpow.pop %v658
  %v660 = vadd.f32 %v659, 1.0
  %v661 = vrcp.pop %v660
  %v662 = vmul.f32 1.0, %v661
  %v663 = vxor.u32 %v654, 2147483648
  %v664 = vmul.f32 %v663, 1.442695
  %v665 = vpow.pop %v664
  %v666 = vadd.f32 %v665, 1.0
  %v667 = vrcp.pop %v666
  %v668 = vmul.f32 1.0, %v667
  %v669 = vtanh.pop %v655
  %v670 = vxor.u32 %v656, 2147483648
  %v671 = vmul.f32 %v670, 1.442695
  %v672 = vpow.pop %v671
  %v673 = vadd.f32 %v672, 1.0
  %v674 = vrcp.pop %v673
  %v675 = vmul.f32 1.0, %v674
  %v676 = vmul.f32 %v668, %v527
  %v677 = vmul.f32 %v662, %v669
  %v678 = vadd.f32 %v676, %v677
  %v679 = vtanh.pop %v678
  %v680 = vmul.f32 %v675, %v679
  %s681 = scalar_lea.vmem %s6, 8
  %682 = vst [vmem:[%s681] sm:$0xff] %v680
  %s683 = smul.u32 2, 4
  %s684 = smul.addr %s683, 8
  %s685 = scalar_lea.vmem [#allocation4], %s684
  %v686 = vld [vmem:[%s685] sm:$0xff]
  %v687 = vld [vmem:[%s685 + $0x8] sm:$0xff]
  %v688 = vld [vmem:[%s685 + $0x10] sm:$0xff]
  %v689 = vld [vmem:[%s685 + $0x18] sm:$0xff]
  %v690 = vpack.c.bf16 %v680, %v680
  %v691 = vld [vmem:[#allocation3] sm:$0xff]
  %v692 = vld [vmem:[#allocation3 + $0x8] sm:$0xff]
  %v693 = vld [vmem:[#allocation3 + $0x10] sm:$0xff]
  %v694 = vld [vmem:[#allocation3 + $0x18] sm:$0xff]
  %v695 = vld [vmem:[#allocation3 + $0x20] sm:$0xff]
  %v696 = vld [vmem:[#allocation3 + $0x28] sm:$0xff]
  %v697 = vld [vmem:[#allocation3 + $0x30] sm:$0xff]
  %v698 = vld [vmem:[#allocation3 + $0x38] sm:$0xff]
  %v699 = vld [vmem:[#allocation3 + $0x40] sm:$0xff]
  %v700 = vld [vmem:[#allocation3 + $0x48] sm:$0xff]
  %v701 = vld [vmem:[#allocation3 + $0x50] sm:$0xff]
  %v702 = vld [vmem:[#allocation3 + $0x58] sm:$0xff]
  %v703 = vld [vmem:[#allocation3 + $0x60] sm:$0xff]
  %v704 = vld [vmem:[#allocation3 + $0x68] sm:$0xff]
  %v705 = vld [vmem:[#allocation3 + $0x70] sm:$0xff]
  %v706 = vld [vmem:[#allocation3 + $0x78] sm:$0xff]
  %v707 = vld [vmem:[#allocation3 + $0x80] sm:$0xff]
  %v708 = vld [vmem:[#allocation3 + $0x88] sm:$0xff]
  %v709 = vld [vmem:[#allocation3 + $0x90] sm:$0xff]
  %v710 = vld [vmem:[#allocation3 + $0x98] sm:$0xff]
  %v711 = vld [vmem:[#allocation3 + $0xa0] sm:$0xff]
  %v712 = vld [vmem:[#allocation3 + $0xa8] sm:$0xff]
  %v713 = vld [vmem:[#allocation3 + $0xb0] sm:$0xff]
  %v714 = vld [vmem:[#allocation3 + $0xb8] sm:$0xff]
  %v715 = vld [vmem:[#allocation3 + $0xc0] sm:$0xff]
  %v716 = vld [vmem:[#allocation3 + $0xc8] sm:$0xff]
  %v717 = vld [vmem:[#allocation3 + $0xd0] sm:$0xff]
  %v718 = vld [vmem:[#allocation3 + $0xd8] sm:$0xff]
  %v719 = vld [vmem:[#allocation3 + $0xe0] sm:$0xff]
  %v720 = vld [vmem:[#allocation3 + $0xe8] sm:$0xff]
  %v721 = vld [vmem:[#allocation3 + $0xf0] sm:$0xff]
  %v722 = vld [vmem:[#allocation3 + $0xf8] sm:$0xff]
  %723 = vmatprep.subr.bf16.mxu0 %v692
  %724 = vmatpush1.bf16.msra.mxu0 %v691
  %725 = vmatprep.subr.bf16.mxu0 %v696
  %726 = vmatpush1.bf16.msra.mxu0 %v695
  %727 = vmatprep.subr.bf16.mxu0 %v700
  %728 = vmatpush1.bf16.msra.mxu0 %v699
  %729 = vmatprep.subr.bf16.mxu0 %v704
  %730 = vmatpush1.bf16.msra.mxu0 %v703
  %731 = vmatprep.subr.bf16.mxu0 %v708
  %732 = vmatpush1.bf16.msra.mxu0 %v707
  %733 = vmatprep.subr.bf16.mxu0 %v712
  %734 = vmatpush1.bf16.msra.mxu0 %v711
  %735 = vmatprep.subr.bf16.mxu0 %v716
  %736 = vmatpush1.bf16.msra.mxu0 %v715
  %737 = vmatprep.subr.bf16.mxu0 %v720
  %738 = vmatpush1.bf16.msra.mxu0 %v719
  %739 = vmatprep.subr.bf16.mxu0 0
  %740 = vmatpush1.bf16.msra.mxu0 0
  %741 = vmatprep.subr.bf16.mxu0 0
  %742 = vmatpush1.bf16.msra.mxu0 0
  %743 = vmatprep.subr.bf16.mxu0 0
  %744 = vmatpush1.bf16.msra.mxu0 0
  %745 = vmatprep.subr.bf16.mxu0 0
  %746 = vmatpush1.bf16.msra.mxu0 0
  %747 = vmatprep.subr.bf16.mxu0 0
  %748 = vmatpush1.bf16.msra.mxu0 0
  %749 = vmatprep.subr.bf16.mxu0 0
  %750 = vmatpush1.bf16.msra.mxu0 0
  %751 = vmatprep.subr.bf16.mxu0 0
  %752 = vmatpush1.bf16.msra.mxu0 0
  %753 = vmatprep.subr.bf16.mxu0 0
  %754 = vmatpush1.bf16.msra.mxu0 0
  %755 = vmatprep.mubr.bf16.mxu0 0
  %756 = vmatmul.mubr.bf16.gmra.mrb[0].mxu0 %v690
  %v757 = vpop.f32.mrb[0].mxu0
  %v758 = vadd.f32 0.0, %v757
  %v759 = vpop.f32.mrb[0].mxu0
  %v760 = vadd.f32 0.0, %v759
  %v761 = vpop.f32.mrb[0].mxu0
  %v762 = vpop.f32.mrb[0].mxu0
  %763 = vdwg.mxu0
  %764 = vmatprep.subr.bf16.mxu0 %v694
  %765 = vmatpush1.bf16.msra.mxu0 %v693
  %766 = vmatprep.subr.bf16.mxu0 %v698
  %767 = vmatpush1.bf16.msra.mxu0 %v697
  %768 = vmatprep.subr.bf16.mxu0 %v702
  %769 = vmatpush1.bf16.msra.mxu0 %v701
  %770 = vmatprep.subr.bf16.mxu0 %v706
  %771 = vmatpush1.bf16.msra.mxu0 %v705
  %772 = vmatprep.subr.bf16.mxu0 %v710
  %773 = vmatpush1.bf16.msra.mxu0 %v709
  %774 = vmatprep.subr.bf16.mxu0 %v714
  %775 = vmatpush1.bf16.msra.mxu0 %v713
  %776 = vmatprep.subr.bf16.mxu0 %v718
  %777 = vmatpush1.bf16.msra.mxu0 %v717
  %778 = vmatprep.subr.bf16.mxu0 %v722
  %779 = vmatpush1.bf16.msra.mxu0 %v721
  %780 = vmatprep.subr.bf16.mxu0 0
  %781 = vmatpush1.bf16.msra.mxu0 0
  %782 = vmatprep.subr.bf16.mxu0 0
  %783 = vmatpush1.bf16.msra.mxu0 0
  %784 = vmatprep.subr.bf16.mxu0 0
  %785 = vmatpush1.bf16.msra.mxu0 0
  %786 = vmatprep.subr.bf16.mxu0 0
  %787 = vmatpush1.bf16.msra.mxu0 0
  %788 = vmatprep.subr.bf16.mxu0 0
  %789 = vmatpush1.bf16.msra.mxu0 0
  %790 = vmatprep.subr.bf16.mxu0 0
  %791 = vmatpush1.bf16.msra.mxu0 0
  %792 = vmatprep.subr.bf16.mxu0 0
  %793 = vmatpush1.bf16.msra.mxu0 0
  %794 = vmatprep.subr.bf16.mxu0 0
  %795 = vmatpush1.bf16.msra.mxu0 0
  %796 = vmatprep.mubr.bf16.mxu0 0
  %797 = vmatmul.mubr.bf16.gmra.mrb[0].mxu0 %v690
  %v798 = vpop.f32.mrb[0].mxu0
  %v799 = vadd.f32 0.0, %v798
  %v800 = vpop.f32.mrb[0].mxu0
  %v801 = vadd.f32 0.0, %v800
  %v802 = vpop.f32.mrb[0].mxu0
  %v803 = vpop.f32.mrb[0].mxu0
  %804 = vdwg.mxu0
  %v805 = vadd.f32 %v686, %v758
  %v806 = vadd.f32 %v687, %v760
  %v807 = vadd.f32 %v688, %v799
  %v808 = vadd.f32 %v689, %v801
  %v809 = vxor.u32 %v805, 2147483648
  %v810 = vmul.f32 %v809, 1.442695
  %v811 = vpow.pop %v810
  %v812 = vadd.f32 %v811, 1.0
  %v813 = vrcp.pop %v812
  %v814 = vmul.f32 1.0, %v813
  %v815 = vxor.u32 %v806, 2147483648
  %v816 = vmul.f32 %v815, 1.442695
  %v817 = vpow.pop %v816
  %v818 = vadd.f32 %v817, 1.0
  %v819 = vrcp.pop %v818
  %v820 = vmul.f32 1.0, %v819
  %v821 = vtanh.pop %v807
  %v822 = vxor.u32 %v808, 2147483648
  %v823 = vmul.f32 %v822, 1.442695
  %v824 = vpow.pop %v823
  %v825 = vadd.f32 %v824, 1.0
  %v826 = vrcp.pop %v825
  %v827 = vmul.f32 1.0, %v826
  %v828 = vmul.f32 %v820, %v678
  %v829 = vmul.f32 %v814, %v821
  %v830 = vadd.f32 %v828, %v829
  %v831 = vtanh.pop %v830
  %v832 = vmul.f32 %v827, %v831
  %s833 = scalar_lea.vmem %s6, 16
  %834 = vst [vmem:[%s833] sm:$0xff] %v832
  %s835 = smul.u32 3, 4
  %s836 = smul.addr %s835, 8
  %s837 = scalar_lea.vmem [#allocation4], %s836
  %v838 = vld [vmem:[%s837] sm:$0xff]
  %v839 = vld [vmem:[%s837 + $0x8] sm:$0xff]
  %v840 = vld [vmem:[%s837 + $0x10] sm:$0xff]
  %v841 = vld [vmem:[%s837 + $0x18] sm:$0xff]
  %v842 = vpack.c.bf16 %v832, %v832
  %v843 = vld [vmem:[#allocation3] sm:$0xff]
  %v844 = vld [vmem:[#allocation3 + $0x8] sm:$0xff]
  %v845 = vld [vmem:[#allocation3 + $0x10] sm:$0xff]
  %v846 = vld [vmem:[#allocation3 + $0x18] sm:$0xff]
  %v847 = vld [vmem:[#allocation3 + $0x20] sm:$0xff]
  %v848 = vld [vmem:[#allocation3 + $0x28] sm:$0xff]
  %v849 = vld [vmem:[#allocation3 + $0x30] sm:$0xff]
  %v850 = vld [vmem:[#allocation3 + $0x38] sm:$0xff]
  %v851 = vld [vmem:[#allocation3 + $0x40] sm:$0xff]
  %v852 = vld [vmem:[#allocation3 + $0x48] sm:$0xff]
  %v853 = vld [vmem:[#allocation3 + $0x50] sm:$0xff]
  %v854 = vld [vmem:[#allocation3 + $0x58] sm:$0xff]
  %v855 = vld [vmem:[#allocation3 + $0x60] sm:$0xff]
  %v856 = vld [vmem:[#allocation3 + $0x68] sm:$0xff]
  %v857 = vld [vmem:[#allocation3 + $0x70] sm:$0xff]
  %v858 = vld [vmem:[#allocation3 + $0x78] sm:$0xff]
  %v859 = vld [vmem:[#allocation3 + $0x80] sm:$0xff]
  %v860 = vld [vmem:[#allocation3 + $0x88] sm:$0xff]
  %v861 = vld [vmem:[#allocation3 + $0x90] sm:$0xff]
  %v862 = vld [vmem:[#allocation3 + $0x98] sm:$0xff]
  %v863 = vld [vmem:[#allocation3 + $0xa0] sm:$0xff]
  %v864 = vld [vmem:[#allocation3 + $0xa8] sm:$0xff]
  %v865 = vld [vmem:[#allocation3 + $0xb0] sm:$0xff]
  %v866 = vld [vmem:[#allocation3 + $0xb8] sm:$0xff]
  %v867 = vld [vmem:[#allocation3 + $0xc0] sm:$0xff]
  %v868 = vld [vmem:[#allocation3 + $0xc8] sm:$0xff]
  %v869 = vld [vmem:[#allocation3 + $0xd0] sm:$0xff]
  %v870 = vld [vmem:[#allocation3 + $0xd8] sm:$0xff]
  %v871 = vld [vmem:[#allocation3 + $0xe0] sm:$0xff]
  %v872 = vld [vmem:[#allocation3 + $0xe8] sm:$0xff]
  %v873 = vld [vmem:[#allocation3 + $0xf0] sm:$0xff]
  %v874 = vld [vmem:[#allocation3 + $0xf8] sm:$0xff]
  %875 = vmatprep.subr.bf16.mxu0 %v844
  %876 = vmatpush1.bf16.msra.mxu0 %v843
  %877 = vmatprep.subr.bf16.mxu0 %v848
  %878 = vmatpush1.bf16.msra.mxu0 %v847
  %879 = vmatprep.subr.bf16.mxu0 %v852
  %880 = vmatpush1.bf16.msra.mxu0 %v851
  %881 = vmatprep.subr.bf16.mxu0 %v856
  %882 = vmatpush1.bf16.msra.mxu0 %v855
  %883 = vmatprep.subr.bf16.mxu0 %v860
  %884 = vmatpush1.bf16.msra.mxu0 %v859
  %885 = vmatprep.subr.bf16.mxu0 %v864
  %886 = vmatpush1.bf16.msra.mxu0 %v863
  %887 = vmatprep.subr.bf16.mxu0 %v868
  %888 = vmatpush1.bf16.msra.mxu0 %v867
  %889 = vmatprep.subr.bf16.mxu0 %v872
  %890 = vmatpush1.bf16.msra.mxu0 %v871
  %891 = vmatprep.subr.bf16.mxu0 0
  %892 = vmatpush1.bf16.msra.mxu0 0
  %893 = vmatprep.subr.bf16.mxu0 0
  %894 = vmatpush1.bf16.msra.mxu0 0
  %895 = vmatprep.subr.bf16.mxu0 0
  %896 = vmatpush1.bf16.msra.mxu0 0
  %897 = vmatprep.subr.bf16.mxu0 0
  %898 = vmatpush1.bf16.msra.mxu0 0
  %899 = vmatprep.subr.bf16.mxu0 0
  %900 = vmatpush1.bf16.msra.mxu0 0
  %901 = vmatprep.subr.bf16.mxu0 0
  %902 = vmatpush1.bf16.msra.mxu0 0
  %903 = vmatprep.subr.bf16.mxu0 0
  %904 = vmatpush1.bf16.msra.mxu0 0
  %905 = vmatprep.subr.bf16.mxu0 0
  %906 = vmatpush1.bf16.msra.mxu0 0
  %907 = vmatprep.mubr.bf16.mxu0 0
  %908 = vmatmul.mubr.bf16.gmra.mrb[0].mxu0 %v842
  %v909 = vpop.f32.mrb[0].mxu0
  %v910 = vadd.f32 0.0, %v909
  %v911 = vpop.f32.mrb[0].mxu0
  %v912 = vadd.f32 0.0, %v911
  %v913 = vpop.f32.mrb[0].mxu0
  %v914 = vpop.f32.mrb[0].mxu0
  %915 = vdwg.mxu0
  %916 = vmatprep.subr.bf16.mxu0 %v846
  %917 = vmatpush1.bf16.msra.mxu0 %v845
  %918 = vmatprep.subr.bf16.mxu0 %v850
  %919 = vmatpush1.bf16.msra.mxu0 %v849
  %920 = vmatprep.subr.bf16.mxu0 %v854
  %921 = vmatpush1.bf16.msra.mxu0 %v853
  %922 = vmatprep.subr.bf16.mxu0 %v858
  %923 = vmatpush1.bf16.msra.mxu0 %v857
  %924 = vmatprep.subr.bf16.mxu0 %v862
  %925 = vmatpush1.bf16.msra.mxu0 %v861
  %926 = vmatprep.subr.bf16.mxu0 %v866
  %927 = vmatpush1.bf16.msra.mxu0 %v865
  %928 = vmatprep.subr.bf16.mxu0 %v870
  %929 = vmatpush1.bf16.msra.mxu0 %v869
  %930 = vmatprep.subr.bf16.mxu0 %v874
  %931 = vmatpush1.bf16.msra.mxu0 %v873
  %932 = vmatprep.subr.bf16.mxu0 0
  %933 = vmatpush1.bf16.msra.mxu0 0
  %934 = vmatprep.subr.bf16.mxu0 0
  %935 = vmatpush1.bf16.msra.mxu0 0
  %936 = vmatprep.subr.bf16.mxu0 0
  %937 = vmatpush1.bf16.msra.mxu0 0
  %938 = vmatprep.subr.bf16.mxu0 0
  %939 = vmatpush1.bf16.msra.mxu0 0
  %940 = vmatprep.subr.bf16.mxu0 0
  %941 = vmatpush1.bf16.msra.mxu0 0
  %942 = vmatprep.subr.bf16.mxu0 0
  %943 = vmatpush1.bf16.msra.mxu0 0
  %944 = vmatprep.subr.bf16.mxu0 0
  %945 = vmatpush1.bf16.msra.mxu0 0
  %946 = vmatprep.subr.bf16.mxu0 0
  %947 = vmatpush1.bf16.msra.mxu0 0
  %948 = vmatprep.mubr.bf16.mxu0 0
  %949 = vmatmul.mubr.bf16.gmra.mrb[0].mxu0 %v842
  %v950 = vpop.f32.mrb[0].mxu0
  %v951 = vadd.f32 0.0, %v950
  %v952 = vpop.f32.mrb[0].mxu0
  %v953 = vadd.f32 0.0, %v952
  %v954 = vpop.f32.mrb[0].mxu0
  %v955 = vpop.f32.mrb[0].mxu0
  %956 = vdwg.mxu0
  %v957 = vadd.f32 %v838, %v910
  %v958 = vadd.f32 %v839, %v912
  %v959 = vadd.f32 %v840, %v951
  %v960 = vadd.f32 %v841, %v953
  %v961 = vxor.u32 %v957, 2147483648
  %v962 = vmul.f32 %v961, 1.442695
  %v963 = vpow.pop %v962
  %v964 = vadd.f32 %v963, 1.0
  %v965 = vrcp.pop %v964
  %v966 = vmul.f32 1.0, %v965
  %v967 = vxor.u32 %v958, 2147483648
  %v968 = vmul.f32 %v967, 1.442695
  %v969 = vpow.pop %v968
  %v970 = vadd.f32 %v969, 1.0
  %v971 = vrcp.pop %v970
  %v972 = vmul.f32 1.0, %v971
  %v973 = vtanh.pop %v959
  %v974 = vxor.u32 %v960, 2147483648
  %v975 = vmul.f32 %v974, 1.442695
  %v976 = vpow.pop %v975
  %v977 = vadd.f32 %v976, 1.0
  %v978 = vrcp.pop %v977
  %v979 = vmul.f32 1.0, %v978
  %v980 = vmul.f32 %v972, %v830
  %v981 = vmul.f32 %v966, %v973
  %v982 = vadd.f32 %v980, %v981
  %v983 = vtanh.pop %v982
  %v984 = vmul.f32 %v979, %v983
  %s985 = scalar_lea.vmem %s6, 24
  %986 = vst [vmem:[%s985] sm:$0xff] %v984
  %s987 = smul.u32 4, 4
  %s988 = smul.addr %s987, 8
  %s989 = scalar_lea.vmem [#allocation4], %s988
  %v990 = vld [vmem:[%s989] sm:$0xff]
  %v991 = vld [vmem:[%s989 + $0x8] sm:$0xff]
  %v992 = vld [vmem:[%s989 + $0x10] sm:$0xff]
  %v993 = vld [vmem:[%s989 + $0x18] sm:$0xff]
  %v994 = vpack.c.bf16 %v984, %v984
  %v995 = vld [vmem:[#allocation3] sm:$0xff]
  %v996 = vld [vmem:[#allocation3 + $0x8] sm:$0xff]
  %v997 = vld [vmem:[#allocation3 + $0x10] sm:$0xff]
  %v998 = vld [vmem:[#allocation3 + $0x18] sm:$0xff]
  %v999 = vld [vmem:[#allocation3 + $0x20] sm:$0xff]
  %v1000 = vld [vmem:[#allocation3 + $0x28] sm:$0xff]
  %v1001 = vld [vmem:[#allocation3 + $0x30] sm:$0xff]
  %v1002 = vld [vmem:[#allocation3 + $0x38] sm:$0xff]
  %v1003 = vld [vmem:[#allocation3 + $0x40] sm:$0xff]
  %v1004 = vld [vmem:[#allocation3 + $0x48] sm:$0xff]
  %v1005 = vld [vmem:[#allocation3 + $0x50] sm:$0xff]
  %v1006 = vld [vmem:[#allocation3 + $0x58] sm:$0xff]
  %v1007 = vld [vmem:[#allocation3 + $0x60] sm:$0xff]
  %v1008 = vld [vmem:[#allocation3 + $0x68] sm:$0xff]
  %v1009 = vld [vmem:[#allocation3 + $0x70] sm:$0xff]
  %v1010 = vld [vmem:[#allocation3 + $0x78] sm:$0xff]
  %v1011 = vld [vmem:[#allocation3 + $0x80] sm:$0xff]
  %v1012 = vld [vmem:[#allocation3 + $0x88] sm:$0xff]
  %v1013 = vld [vmem:[#allocation3 + $0x90] sm:$0xff]
  %v1014 = vld [vmem:[#allocation3 + $0x98] sm:$0xff]
  %v1015 = vld [vmem:[#allocation3 + $0xa0] sm:$0xff]
  %v1016 = vld [vmem:[#allocation3 + $0xa8] sm:$0xff]
  %v1017 = vld [vmem:[#allocation3 + $0xb0] sm:$0xff]
  %v1018 = vld [vmem:[#allocation3 + $0xb8] sm:$0xff]
  %v1019 = vld [vmem:[#allocation3 + $0xc0] sm:$0xff]
  %v1020 = vld [vmem:[#allocation3 + $0xc8] sm:$0xff]
  %v1021 = vld [vmem:[#allocation3 + $0xd0] sm:$0xff]
  %v1022 = vld [vmem:[#allocation3 + $0xd8] sm:$0xff]
  %v1023 = vld [vmem:[#allocation3 + $0xe0] sm:$0xff]
  %v1024 = vld [vmem:[#allocation3 + $0xe8] sm:$0xff]
  %v1025 = vld [vmem:[#allocation3 + $0xf0] sm:$0xff]
  %v1026 = vld [vmem:[#allocation3 + $0xf8] sm:$0xff]
  %1027 = vmatprep.subr.bf16.mxu0 %v996
  %1028 = vmatpush1.bf16.msra.mxu0 %v995
  %1029 = vmatprep.subr.bf16.mxu0 %v1000
  %1030 = vmatpush1.bf16.msra.mxu0 %v999
  %1031 = vmatprep.subr.bf16.mxu0 %v1004
  %1032 = vmatpush1.bf16.msra.mxu0 %v1003
  %1033 = vmatprep.subr.bf16.mxu0 %v1008
  %1034 = vmatpush1.bf16.msra.mxu0 %v1007
  %1035 = vmatprep.subr.bf16.mxu0 %v1012
  %1036 = vmatpush1.bf16.msra.mxu0 %v1011
  %1037 = vmatprep.subr.bf16.mxu0 %v1016
  %1038 = vmatpush1.bf16.msra.mxu0 %v1015
  %1039 = vmatprep.subr.bf16.mxu0 %v1020
  %1040 = vmatpush1.bf16.msra.mxu0 %v1019
  %1041 = vmatprep.subr.bf16.mxu0 %v1024
  %1042 = vmatpush1.bf16.msra.mxu0 %v1023
  %1043 = vmatprep.subr.bf16.mxu0 0
  %1044 = vmatpush1.bf16.msra.mxu0 0
  %1045 = vmatprep.subr.bf16.mxu0 0
  %1046 = vmatpush1.bf16.msra.mxu0 0
  %1047 = vmatprep.subr.bf16.mxu0 0
  %1048 = vmatpush1.bf16.msra.mxu0 0
  %1049 = vmatprep.subr.bf16.mxu0 0
  %1050 = vmatpush1.bf16.msra.mxu0 0
  %1051 = vmatprep.subr.bf16.mxu0 0
  %1052 = vmatpush1.bf16.msra.mxu0 0
  %1053 = vmatprep.subr.bf16.mxu0 0
  %1054 = vmatpush1.bf16.msra.mxu0 0
  %1055 = vmatprep.subr.bf16.mxu0 0
  %1056 = vmatpush1.bf16.msra.mxu0 0
  %1057 = vmatprep.subr.bf16.mxu0 0
  %1058 = vmatpush1.bf16.msra.mxu0 0
  %1059 = vmatprep.mubr.bf16.mxu0 0
  %1060 = vmatmul.mubr.bf16.gmra.mrb[0].mxu0 %v994
  %v1061 = vpop.f32.mrb[0].mxu0
  %v1062 = vadd.f32 0.0, %v1061
  %v1063 = vpop.f32.mrb[0].mxu0
  %v1064 = vadd.f32 0.0, %v1063
  %v1065 = vpop.f32.mrb[0].mxu0
  %v1066 = vpop.f32.mrb[0].mxu0
  %1067 = vdwg.mxu0
  %1068 = vmatprep.subr.bf16.mxu0 %v998
  %1069 = vmatpush1.bf16.msra.mxu0 %v997
  %1070 = vmatprep.subr.bf16.mxu0 %v1002
  %1071 = vmatpush1.bf16.msra.mxu0 %v1001
  %1072 = vmatprep.subr.bf16.mxu0 %v1006
  %1073 = vmatpush1.bf16.msra.mxu0 %v1005
  %1074 = vmatprep.subr.bf16.mxu0 %v1010
  %1075 = vmatpush1.bf16.msra.mxu0 %v1009
  %1076 = vmatprep.subr.bf16.mxu0 %v1014
  %1077 = vmatpush1.bf16.msra.mxu0 %v1013
  %1078 = vmatprep.subr.bf16.mxu0 %v1018
  %1079 = vmatpush1.bf16.msra.mxu0 %v1017
  %1080 = vmatprep.subr.bf16.mxu0 %v1022
  %1081 = vmatpush1.bf16.msra.mxu0 %v1021
  %1082 = vmatprep.subr.bf16.mxu0 %v1026
  %1083 = vmatpush1.bf16.msra.mxu0 %v1025
  %1084 = vmatprep.subr.bf16.mxu0 0
  %1085 = vmatpush1.bf16.msra.mxu0 0
  %1086 = vmatprep.subr.bf16.mxu0 0
  %1087 = vmatpush1.bf16.msra.mxu0 0
  %1088 = vmatprep.subr.bf16.mxu0 0
  %1089 = vmatpush1.bf16.msra.mxu0 0
  %1090 = vmatprep.subr.bf16.mxu0 0
  %1091 = vmatpush1.bf16.msra.mxu0 0
  %1092 = vmatprep.subr.bf16.mxu0 0
  %1093 = vmatpush1.bf16.msra.mxu0 0
  %1094 = vmatprep.subr.bf16.mxu0 0
  %1095 = vmatpush1.bf16.msra.mxu0 0
  %1096 = vmatprep.subr.bf16.mxu0 0
  %1097 = vmatpush1.bf16.msra.mxu0 0
  %1098 = vmatprep.subr.bf16.mxu0 0
  %1099 = vmatpush1.bf16.msra.mxu0 0
  %1100 = vmatprep.mubr.bf16.mxu0 0
  %1101 = vmatmul.mubr.bf16.gmra.mrb[0].mxu0 %v994
  %v1102 = vpop.f32.mrb[0].mxu0
  %v1103 = vadd.f32 0.0, %v1102
  %v1104 = vpop.f32.mrb[0].mxu0
  %v1105 = vadd.f32 0.0, %v1104
  %v1106 = vpop.f32.mrb[0].mxu0
  %v1107 = vpop.f32.mrb[0].mxu0
  %1108 = vdwg.mxu0
  %v1109 = vadd.f32 %v990, %v1062
  %v1110 = vadd.f32 %v991, %v1064
  %v1111 = vadd.f32 %v992, %v1103
  %v1112 = vadd.f32 %v993, %v1105
  %v1113 = vxor.u32 %v1109, 2147483648
  %v1114 = vmul.f32 %v1113, 1.442695
  %v1115 = vpow.pop %v1114
  %v1116 = vadd.f32 %v1115, 1.0
  %v1117 = vrcp.pop %v1116
  %v1118 = vmul.f32 1.0, %v1117
  %v1119 = vxor.u32 %v1110, 2147483648
  %v1120 = vmul.f32 %v1119, 1.442695
  %v1121 = vpow.pop %v1120
  %v1122 = vadd.f32 %v1121, 1.0
  %v1123 = vrcp.pop %v1122
  %v1124 = vmul.f32 1.0, %v1123
  %v1125 = vtanh.pop %v1111
  %v1126 = vxor.u32 %v1112, 2147483648
  %v1127 = vmul.f32 %v1126, 1.442695
  %v1128 = vpow.pop %v1127
  %v1129 = vadd.f32 %v1128, 1.0
  %v1130 = vrcp.pop %v1129
  %v1131 = vmul.f32 1.0, %v1130
  %v1132 = vmul.f32 %v1124, %v982
  %v1133 = vmul.f32 %v1118, %v1125
  %v1134 = vadd.f32 %v1132, %v1133
  %v1135 = vtanh.pop %v1134
  %v1136 = vmul.f32 %v1131, %v1135
  %s1137 = scalar_lea.vmem %s6, 32
  %1138 = vst [vmem:[%s1137] sm:$0xff] %v1136
  %s1139 = smul.u32 5, 4
  %s1140 = smul.addr %s1139, 8
  %s1141 = scalar_lea.vmem [#allocation4], %s1140
  %v1142 = vld [vmem:[%s1141] sm:$0xff]
  %v1143 = vld [vmem:[%s1141 + $0x8] sm:$0xff]
  %v1144 = vld [vmem:[%s1141 + $0x10] sm:$0xff]
  %v1145 = vld [vmem:[%s1141 + $0x18] sm:$0xff]
  %v1146 = vpack.c.bf16 %v1136, %v1136
  %v1147 = vld [vmem:[#allocation3] sm:$0xff]
  %v1148 = vld [vmem:[#allocation3 + $0x8] sm:$0xff]
  %v1149 = vld [vmem:[#allocation3 + $0x10] sm:$0xff]
  %v1150 = vld [vmem:[#allocation3 + $0x18] sm:$0xff]
  %v1151 = vld [vmem:[#allocation3 + $0x20] sm:$0xff]
  %v1152 = vld [vmem:[#allocation3 + $0x28] sm:$0xff]
  %v1153 = vld [vmem:[#allocation3 + $0x30] sm:$0xff]
  %v1154 = vld [vmem:[#allocation3 + $0x38] sm:$0xff]
  %v1155 = vld [vmem:[#allocation3 + $0x40] sm:$0xff]
  %v1156 = vld [vmem:[#allocation3 + $0x48] sm:$0xff]
  %v1157 = vld [vmem:[#allocation3 + $0x50] sm:$0xff]
  %v1158 = vld [vmem:[#allocation3 + $0x58] sm:$0xff]
  %v1159 = vld [vmem:[#allocation3 + $0x60] sm:$0xff]
  %v1160 = vld [vmem:[#allocation3 + $0x68] sm:$0xff]
  %v1161 = vld [vmem:[#allocation3 + $0x70] sm:$0xff]
  %v1162 = vld [vmem:[#allocation3 + $0x78] sm:$0xff]
  %v1163 = vld [vmem:[#allocation3 + $0x80] sm:$0xff]
  %v1164 = vld [vmem:[#allocation3 + $0x88] sm:$0xff]
  %v1165 = vld [vmem:[#allocation3 + $0x90] sm:$0xff]
  %v1166 = vld [vmem:[#allocation3 + $0x98] sm:$0xff]
  %v1167 = vld [vmem:[#allocation3 + $0xa0] sm:$0xff]
  %v1168 = vld [vmem:[#allocation3 + $0xa8] sm:$0xff]
  %v1169 = vld [vmem:[#allocation3 + $0xb0] sm:$0xff]
  %v1170 = vld [vmem:[#allocation3 + $0xb8] sm:$0xff]
  %v1171 = vld [vmem:[#allocation3 + $0xc0] sm:$0xff]
  %v1172 = vld [vmem:[#allocation3 + $0xc8] sm:$0xff]
  %v1173 = vld [vmem:[#allocation3 + $0xd0] sm:$0xff]
  %v1174 = vld [vmem:[#allocation3 + $0xd8] sm:$0xff]
  %v1175 = vld [vmem:[#allocation3 + $0xe0] sm:$0xff]
  %v1176 = vld [vmem:[#allocation3 + $0xe8] sm:$0xff]
  %v1177 = vld [vmem:[#allocation3 + $0xf0] sm:$0xff]
  %v1178 = vld [vmem:[#allocation3 + $0xf8] sm:$0xff]
  %1179 = vmatprep.subr.bf16.mxu0 %v1148
  %1180 = vmatpush1.bf16.msra.mxu0 %v1147
  %1181 = vmatprep.subr.bf16.mxu0 %v1152
  %1182 = vmatpush1.bf16.msra.mxu0 %v1151
  %1183 = vmatprep.subr.bf16.mxu0 %v1156
  %1184 = vmatpush1.bf16.msra.mxu0 %v1155
  %1185 = vmatprep.subr.bf16.mxu0 %v1160
  %1186 = vmatpush1.bf16.msra.mxu0 %v1159
  %1187 = vmatprep.subr.bf16.mxu0 %v1164
  %1188 = vmatpush1.bf16.msra.mxu0 %v1163
  %1189 = vmatprep.subr.bf16.mxu0 %v1168
  %1190 = vmatpush1.bf16.msra.mxu0 %v1167
  %1191 = vmatprep.subr.bf16.mxu0 %v1172
  %1192 = vmatpush1.bf16.msra.mxu0 %v1171
  %1193 = vmatprep.subr.bf16.mxu0 %v1176
  %1194 = vmatpush1.bf16.msra.mxu0 %v1175
  %1195 = vmatprep.subr.bf16.mxu0 0
  %1196 = vmatpush1.bf16.msra.mxu0 0
  %1197 = vmatprep.subr.bf16.mxu0 0
  %1198 = vmatpush1.bf16.msra.mxu0 0
  %1199 = vmatprep.subr.bf16.mxu0 0
  %1200 = vmatpush1.bf16.msra.mxu0 0
  %1201 = vmatprep.subr.bf16.mxu0 0
  %1202 = vmatpush1.bf16.msra.mxu0 0
  %1203 = vmatprep.subr.bf16.mxu0 0
  %1204 = vmatpush1.bf16.msra.mxu0 0
  %1205 = vmatprep.subr.bf16.mxu0 0
  %1206 = vmatpush1.bf16.msra.mxu0 0
  %1207 = vmatprep.subr.bf16.mxu0 0
  %1208 = vmatpush1.bf16.msra.mxu0 0
  %1209 = vmatprep.subr.bf16.mxu0 0
  %1210 = vmatpush1.bf16.msra.mxu0 0
  %1211 = vmatprep.mubr.bf16.mxu0 0
  %1212 = vmatmul.mubr.bf16.gmra.mrb[0].mxu0 %v1146
  %v1213 = vpop.f32.mrb[0].mxu0
  %v1214 = vadd.f32 0.0, %v1213
  %v1215 = vpop.f32.mrb[0].mxu0
  %v1216 = vadd.f32 0.0, %v1215
  %v1217 = vpop.f32.mrb[0].mxu0
  %v1218 = vpop.f32.mrb[0].mxu0
  %1219 = vdwg.mxu0
  %1220 = vmatprep.subr.bf16.mxu0 %v1150
  %1221 = vmatpush1.bf16.msra.mxu0 %v1149
  %1222 = vmatprep.subr.bf16.mxu0 %v1154
  %1223 = vmatpush1.bf16.msra.mxu0 %v1153
  %1224 = vmatprep.subr.bf16.mxu0 %v1158
  %1225 = vmatpush1.bf16.msra.mxu0 %v1157
  %1226 = vmatprep.subr.bf16.mxu0 %v1162
  %1227 = vmatpush1.bf16.msra.mxu0 %v1161
  %1228 = vmatprep.subr.bf16.mxu0 %v1166
  %1229 = vmatpush1.bf16.msra.mxu0 %v1165
  %1230 = vmatprep.subr.bf16.mxu0 %v1170
  %1231 = vmatpush1.bf16.msra.mxu0 %v1169
  %1232 = vmatprep.subr.bf16.mxu0 %v1174
  %1233 = vmatpush1.bf16.msra.mxu0 %v1173
  %1234 = vmatprep.subr.bf16.mxu0 %v1178
  %1235 = vmatpush1.bf16.msra.mxu0 %v1177
  %1236 = vmatprep.subr.bf16.mxu0 0
  %1237 = vmatpush1.bf16.msra.mxu0 0
  %1238 = vmatprep.subr.bf16.mxu0 0
  %1239 = vmatpush1.bf16.msra.mxu0 0
  %1240 = vmatprep.subr.bf16.mxu0 0
  %1241 = vmatpush1.bf16.msra.mxu0 0
  %1242 = vmatprep.subr.bf16.mxu0 0
  %1243 = vmatpush1.bf16.msra.mxu0 0
  %1244 = vmatprep.subr.bf16.mxu0 0
  %1245 = vmatpush1.bf16.msra.mxu0 0
  %1246 = vmatprep.subr.bf16.mxu0 0
  %1247 = vmatpush1.bf16.msra.mxu0 0
  %1248 = vmatprep.subr.bf16.mxu0 0
  %1249 = vmatpush1.bf16.msra.mxu0 0
  %1250 = vmatprep.subr.bf16.mxu0 0
  %1251 = vmatpush1.bf16.msra.mxu0 0
  %1252 = vmatprep.mubr.bf16.mxu0 0
  %1253 = vmatmul.mubr.bf16.gmra.mrb[0].mxu0 %v1146
  %v1254 = vpop.f32.mrb[0].mxu0
  %v1255 = vadd.f32 0.0, %v1254
  %v1256 = vpop.f32.mrb[0].mxu0
  %v1257 = vadd.f32 0.0, %v1256
  %v1258 = vpop.f32.mrb[0].mxu0
  %v1259 = vpop.f32.mrb[0].mxu0
  %1260 = vdwg.mxu0
  %v1261 = vadd.f32 %v1142, %v1214
  %v1262 = vadd.f32 %v1143, %v1216
  %v1263 = vadd.f32 %v1144, %v1255
  %v1264 = vadd.f32 %v1145, %v1257
  %v1265 = vxor.u32 %v1261, 2147483648
  %v1266 = vmul.f32 %v1265, 1.442695
  %v1267 = vpow.pop %v1266
  %v1268 = vadd.f32 %v1267, 1.0
  %v1269 = vrcp.pop %v1268
  %v1270 = vmul.f32 1.0, %v1269
  %v1271 = vxor.u32 %v1262, 2147483648
  %v1272 = vmul.f32 %v1271, 1.442695
  %v1273 = vpow.pop %v1272
  %v1274 = vadd.f32 %v1273, 1.0
  %v1275 = vrcp.pop %v1274
  %v1276 = vmul.f32 1.0, %v1275
  %v1277 = vtanh.pop %v1263
  %v1278 = vxor.u32 %v1264, 2147483648
  %v1279 = vmul.f32 %v1278, 1.442695
  %v1280 = vpow.pop %v1279
  %v1281 = vadd.f32 %v1280, 1.0
  %v1282 = vrcp.pop %v1281
  %v1283 = vmul.f32 1.0, %v1282
  %v1284 = vmul.f32 %v1276, %v1134
  %v1285 = vmul.f32 %v1270, %v1277
  %v1286 = vadd.f32 %v1284, %v1285
  %v1287 = vtanh.pop %v1286
  %v1288 = vmul.f32 %v1283, %v1287
  %s1289 = scalar_lea.vmem %s6, 40
  %1290 = vst [vmem:[%s1289] sm:$0xff] %v1288
  %s1291 = smul.u32 6, 4
  %s1292 = smul.addr %s1291, 8
  %s1293 = scalar_lea.vmem [#allocation4], %s1292
  %v1294 = vld [vmem:[%s1293] sm:$0xff]
  %v1295 = vld [vmem:[%s1293 + $0x8] sm:$0xff]
  %v1296 = vld [vmem:[%s1293 + $0x10] sm:$0xff]
  %v1297 = vld [vmem:[%s1293 + $0x18] sm:$0xff]
  %v1298 = vpack.c.bf16 %v1288, %v1288
  %v1299 = vld [vmem:[#allocation3] sm:$0xff]
  %v1300 = vld [vmem:[#allocation3 + $0x8] sm:$0xff]
  %v1301 = vld [vmem:[#allocation3 + $0x10] sm:$0xff]
  %v1302 = vld [vmem:[#allocation3 + $0x18] sm:$0xff]
  %v1303 = vld [vmem:[#allocation3 + $0x20] sm:$0xff]
  %v1304 = vld [vmem:[#allocation3 + $0x28] sm:$0xff]
  %v1305 = vld [vmem:[#allocation3 + $0x30] sm:$0xff]
  %v1306 = vld [vmem:[#allocation3 + $0x38] sm:$0xff]
  %v1307 = vld [vmem:[#allocation3 + $0x40] sm:$0xff]
  %v1308 = vld [vmem:[#allocation3 + $0x48] sm:$0xff]
  %v1309 = vld [vmem:[#allocation3 + $0x50] sm:$0xff]
  %v1310 = vld [vmem:[#allocation3 + $0x58] sm:$0xff]
  %v1311 = vld [vmem:[#allocation3 + $0x60] sm:$0xff]
  %v1312 = vld [vmem:[#allocation3 + $0x68] sm:$0xff]
  %v1313 = vld [vmem:[#allocation3 + $0x70] sm:$0xff]
  %v1314 = vld [vmem:[#allocation3 + $0x78] sm:$0xff]
  %v1315 = vld [vmem:[#allocation3 + $0x80] sm:$0xff]
  %v1316 = vld [vmem:[#allocation3 + $0x88] sm:$0xff]
  %v1317 = vld [vmem:[#allocation3 + $0x90] sm:$0xff]
  %v1318 = vld [vmem:[#allocation3 + $0x98] sm:$0xff]
  %v1319 = vld [vmem:[#allocation3 + $0xa0] sm:$0xff]
  %v1320 = vld [vmem:[#allocation3 + $0xa8] sm:$0xff]
  %v1321 = vld [vmem:[#allocation3 + $0xb0] sm:$0xff]
  %v1322 = vld [vmem:[#allocation3 + $0xb8] sm:$0xff]
  %v1323 = vld [vmem:[#allocation3 + $0xc0] sm:$0xff]
  %v1324 = vld [vmem:[#allocation3 + $0xc8] sm:$0xff]
  %v1325 = vld [vmem:[#allocation3 + $0xd0] sm:$0xff]
  %v1326 = vld [vmem:[#allocation3 + $0xd8] sm:$0xff]
  %v1327 = vld [vmem:[#allocation3 + $0xe0] sm:$0xff]
  %v1328 = vld [vmem:[#allocation3 + $0xe8] sm:$0xff]
  %v1329 = vld [vmem:[#allocation3 + $0xf0] sm:$0xff]
  %v1330 = vld [vmem:[#allocation3 + $0xf8] sm:$0xff]
  %1331 = vmatprep.subr.bf16.mxu0 %v1300
  %1332 = vmatpush1.bf16.msra.mxu0 %v1299
  %1333 = vmatprep.subr.bf16.mxu0 %v1304
  %1334 = vmatpush1.bf16.msra.mxu0 %v1303
  %1335 = vmatprep.subr.bf16.mxu0 %v1308
  %1336 = vmatpush1.bf16.msra.mxu0 %v1307
  %1337 = vmatprep.subr.bf16.mxu0 %v1312
  %1338 = vmatpush1.bf16.msra.mxu0 %v1311
  %1339 = vmatprep.subr.bf16.mxu0 %v1316
  %1340 = vmatpush1.bf16.msra.mxu0 %v1315
  %1341 = vmatprep.subr.bf16.mxu0 %v1320
  %1342 = vmatpush1.bf16.msra.mxu0 %v1319
  %1343 = vmatprep.subr.bf16.mxu0 %v1324
  %1344 = vmatpush1.bf16.msra.mxu0 %v1323
  %1345 = vmatprep.subr.bf16.mxu0 %v1328
  %1346 = vmatpush1.bf16.msra.mxu0 %v1327
  %1347 = vmatprep.subr.bf16.mxu0 0
  %1348 = vmatpush1.bf16.msra.mxu0 0
  %1349 = vmatprep.subr.bf16.mxu0 0
  %1350 = vmatpush1.bf16.msra.mxu0 0
  %1351 = vmatprep.subr.bf16.mxu0 0
  %1352 = vmatpush1.bf16.msra.mxu0 0
  %1353 = vmatprep.subr.bf16.mxu0 0
  %1354 = vmatpush1.bf16.msra.mxu0 0
  %1355 = vmatprep.subr.bf16.mxu0 0
  %1356 = vmatpush1.bf16.msra.mxu0 0
  %1357 = vmatprep.subr.bf16.mxu0 0
  %1358 = vmatpush1.bf16.msra.mxu0 0
  %1359 = vmatprep.subr.bf16.mxu0 0
  %1360 = vmatpush1.bf16.msra.mxu0 0
  %1361 = vmatprep.subr.bf16.mxu0 0
  %1362 = vmatpush1.bf16.msra.mxu0 0
  %1363 = vmatprep.mubr.bf16.mxu0 0
  %1364 = vmatmul.mubr.bf16.gmra.mrb[0].mxu0 %v1298
  %v1365 = vpop.f32.mrb[0].mxu0
  %v1366 = vadd.f32 0.0, %v1365
  %v1367 = vpop.f32.mrb[0].mxu0
  %v1368 = vadd.f32 0.0, %v1367
  %v1369 = vpop.f32.mrb[0].mxu0
  %v1370 = vpop.f32.mrb[0].mxu0
  %1371 = vdwg.mxu0
  %1372 = vmatprep.subr.bf16.mxu0 %v1302
  %1373 = vmatpush1.bf16.msra.mxu0 %v1301
  %1374 = vmatprep.subr.bf16.mxu0 %v1306
  %1375 = vmatpush1.bf16.msra.mxu0 %v1305
  %1376 = vmatprep.subr.bf16.mxu0 %v1310
  %1377 = vmatpush1.bf16.msra.mxu0 %v1309
  %1378 = vmatprep.subr.bf16.mxu0 %v1314
  %1379 = vmatpush1.bf16.msra.mxu0 %v1313
  %1380 = vmatprep.subr.bf16.mxu0 %v1318
  %1381 = vmatpush1.bf16.msra.mxu0 %v1317
  %1382 = vmatprep.subr.bf16.mxu0 %v1322
  %1383 = vmatpush1.bf16.msra.mxu0 %v1321
  %1384 = vmatprep.subr.bf16.mxu0 %v1326
  %1385 = vmatpush1.bf16.msra.mxu0 %v1325
  %1386 = vmatprep.subr.bf16.mxu0 %v1330
  %1387 = vmatpush1.bf16.msra.mxu0 %v1329
  %1388 = vmatprep.subr.bf16.mxu0 0
  %1389 = vmatpush1.bf16.msra.mxu0 0
  %1390 = vmatprep.subr.bf16.mxu0 0
  %1391 = vmatpush1.bf16.msra.mxu0 0
  %1392 = vmatprep.subr.bf16.mxu0 0
  %1393 = vmatpush1.bf16.msra.mxu0 0
  %1394 = vmatprep.subr.bf16.mxu0 0
  %1395 = vmatpush1.bf16.msra.mxu0 0
  %1396 = vmatprep.subr.bf16.mxu0 0
  %1397 = vmatpush1.bf16.msra.mxu0 0
  %1398 = vmatprep.subr.bf16.mxu0 0
  %1399 = vmatpush1.bf16.msra.mxu0 0
  %1400 = vmatprep.subr.bf16.mxu0 0
  %1401 = vmatpush1.bf16.msra.mxu0 0
  %1402 = vmatprep.subr.bf16.mxu0 0
  %1403 = vmatpush1.bf16.msra.mxu0 0
  %1404 = vmatprep.mubr.bf16.mxu0 0
  %1405 = vmatmul.mubr.bf16.gmra.mrb[0].mxu0 %v1298
  %v1406 = vpop.f32.mrb[0].mxu0
  %v1407 = vadd.f32 0.0, %v1406
  %v1408 = vpop.f32.mrb[0].mxu0
  %v1409 = vadd.f32 0.0, %v1408
  %v1410 = vpop.f32.mrb[0].mxu0
  %v1411 = vpop.f32.mrb[0].mxu0
  %1412 = vdwg.mxu0
  %v1413 = vadd.f32 %v1294, %v1366
  %v1414 = vadd.f32 %v1295, %v1368
  %v1415 = vadd.f32 %v1296, %v1407
  %v1416 = vadd.f32 %v1297, %v1409
  %v1417 = vxor.u32 %v1413, 2147483648
  %v1418 = vmul.f32 %v1417, 1.442695
  %v1419 = vpow.pop %v1418
  %v1420 = vadd.f32 %v1419, 1.0
  %v1421 = vrcp.pop %v1420
  %v1422 = vmul.f32 1.0, %v1421
  %v1423 = vxor.u32 %v1414, 2147483648
  %v1424 = vmul.f32 %v1423, 1.442695
  %v1425 = vpow.pop %v1424
  %v1426 = vadd.f32 %v1425, 1.0
  %v1427 = vrcp.pop %v1426
  %v1428 = vmul.f32 1.0, %v1427
  %v1429 = vtanh.pop %v1415
  %v1430 = vxor.u32 %v1416, 2147483648
  %v1431 = vmul.f32 %v1430, 1.442695
  %v1432 = vpow.pop %v1431
  %v1433 = vadd.f32 %v1432, 1.0
  %v1434 = vrcp.pop %v1433
  %v1435 = vmul.f32 1.0, %v1434
  %v1436 = vmul.f32 %v1428, %v1286
  %v1437 = vmul.f32 %v1422, %v1429
  %v1438 = vadd.f32 %v1436, %v1437
  %v1439 = vtanh.pop %v1438
  %v1440 = vmul.f32 %v1435, %v1439
  %s1441 = scalar_lea.vmem %s6, 48
  %1442 = vst [vmem:[%s1441] sm:$0xff] %v1440
  %s1443 = smul.u32 7, 4
  %s1444 = smul.addr %s1443, 8
  %s1445 = scalar_lea.vmem [#allocation4], %s1444
  %v1446 = vld [vmem:[%s1445] sm:$0xff]
  %v1447 = vld [vmem:[%s1445 + $0x8] sm:$0xff]
  %v1448 = vld [vmem:[%s1445 + $0x10] sm:$0xff]
  %v1449 = vld [vmem:[%s1445 + $0x18] sm:$0xff]
  %v1450 = vpack.c.bf16 %v1440, %v1440
  %v1451 = vld [vmem:[#allocation3] sm:$0xff]
  %v1452 = vld [vmem:[#allocation3 + $0x8] sm:$0xff]
  %v1453 = vld [vmem:[#allocation3 + $0x10] sm:$0xff]
  %v1454 = vld [vmem:[#allocation3 + $0x18] sm:$0xff]
  %v1455 = vld [vmem:[#allocation3 + $0x20] sm:$0xff]
  %v1456 = vld [vmem:[#allocation3 + $0x28] sm:$0xff]
  %v1457 = vld [vmem:[#allocation3 + $0x30] sm:$0xff]
  %v1458 = vld [vmem:[#allocation3 + $0x38] sm:$0xff]
  %v1459 = vld [vmem:[#allocation3 + $0x40] sm:$0xff]
  %v1460 = vld [vmem:[#allocation3 + $0x48] sm:$0xff]
  %v1461 = vld [vmem:[#allocation3 + $0x50] sm:$0xff]
  %v1462 = vld [vmem:[#allocation3 + $0x58] sm:$0xff]
  %v1463 = vld [vmem:[#allocation3 + $0x60] sm:$0xff]
  %v1464 = vld [vmem:[#allocation3 + $0x68] sm:$0xff]
  %v1465 = vld [vmem:[#allocation3 + $0x70] sm:$0xff]
  %v1466 = vld [vmem:[#allocation3 + $0x78] sm:$0xff]
  %v1467 = vld [vmem:[#allocation3 + $0x80] sm:$0xff]
  %v1468 = vld [vmem:[#allocation3 + $0x88] sm:$0xff]
  %v1469 = vld [vmem:[#allocation3 + $0x90] sm:$0xff]
  %v1470 = vld [vmem:[#allocation3 + $0x98] sm:$0xff]
  %v1471 = vld [vmem:[#allocation3 + $0xa0] sm:$0xff]
  %v1472 = vld [vmem:[#allocation3 + $0xa8] sm:$0xff]
  %v1473 = vld [vmem:[#allocation3 + $0xb0] sm:$0xff]
  %v1474 = vld [vmem:[#allocation3 + $0xb8] sm:$0xff]
  %v1475 = vld [vmem:[#allocation3 + $0xc0] sm:$0xff]
  %v1476 = vld [vmem:[#allocation3 + $0xc8] sm:$0xff]
  %v1477 = vld [vmem:[#allocation3 + $0xd0] sm:$0xff]
  %v1478 = vld [vmem:[#allocation3 + $0xd8] sm:$0xff]
  %v1479 = vld [vmem:[#allocation3 + $0xe0] sm:$0xff]
  %v1480 = vld [vmem:[#allocation3 + $0xe8] sm:$0xff]
  %v1481 = vld [vmem:[#allocation3 + $0xf0] sm:$0xff]
  %v1482 = vld [vmem:[#allocation3 + $0xf8] sm:$0xff]
  %1483 = vmatprep.subr.bf16.mxu0 %v1452
  %1484 = vmatpush1.bf16.msra.mxu0 %v1451
  %1485 = vmatprep.subr.bf16.mxu0 %v1456
  %1486 = vmatpush1.bf16.msra.mxu0 %v1455
  %1487 = vmatprep.subr.bf16.mxu0 %v1460
  %1488 = vmatpush1.bf16.msra.mxu0 %v1459
  %1489 = vmatprep.subr.bf16.mxu0 %v1464
  %1490 = vmatpush1.bf16.msra.mxu0 %v1463
  %1491 = vmatprep.subr.bf16.mxu0 %v1468
  %1492 = vmatpush1.bf16.msra.mxu0 %v1467
  %1493 = vmatprep.subr.bf16.mxu0 %v1472
  %1494 = vmatpush1.bf16.msra.mxu0 %v1471
  %1495 = vmatprep.subr.bf16.mxu0 %v1476
  %1496 = vmatpush1.bf16.msra.mxu0 %v1475
  %1497 = vmatprep.subr.bf16.mxu0 %v1480
  %1498 = vmatpush1.bf16.msra.mxu0 %v1479
  %1499 = vmatprep.subr.bf16.mxu0 0
  %1500 = vmatpush1.bf16.msra.mxu0 0
  %1501 = vmatprep.subr.bf16.mxu0 0
  %1502 = vmatpush1.bf16.msra.mxu0 0
  %1503 = vmatprep.subr.bf16.mxu0 0
  %1504 = vmatpush1.bf16.msra.mxu0 0
  %1505 = vmatprep.subr.bf16.mxu0 0
  %1506 = vmatpush1.bf16.msra.mxu0 0
  %1507 = vmatprep.subr.bf16.mxu0 0
  %1508 = vmatpush1.bf16.msra.mxu0 0
  %1509 = vmatprep.subr.bf16.mxu0 0
  %1510 = vmatpush1.bf16.msra.mxu0 0
  %1511 = vmatprep.subr.bf16.mxu0 0
  %1512 = vmatpush1.bf16.msra.mxu0 0
  %1513 = vmatprep.subr.bf16.mxu0 0
  %1514 = vmatpush1.bf16.msra.mxu0 0
  %1515 = vmatprep.mubr.bf16.mxu0 0
  %1516 = vmatmul.mubr.bf16.gmra.mrb[0].mxu0 %v1450
  %v1517 = vpop.f32.mrb[0].mxu0
  %v1518 = vadd.f32 0.0, %v1517
  %v1519 = vpop.f32.mrb[0].mxu0
  %v1520 = vadd.f32 0.0, %v1519
  %v1521 = vpop.f32.mrb[0].mxu0
  %v1522 = vpop.f32.mrb[0].mxu0
  %1523 = vdwg.mxu0
  %1524 = vmatprep.subr.bf16.mxu0 %v1454
  %1525 = vmatpush1.bf16.msra.mxu0 %v1453
  %1526 = vmatprep.subr.bf16.mxu0 %v1458
  %1527 = vmatpush1.bf16.msra.mxu0 %v1457
  %1528 = vmatprep.subr.bf16.mxu0 %v1462
  %1529 = vmatpush1.bf16.msra.mxu0 %v1461
  %1530 = vmatprep.subr.bf16.mxu0 %v1466
  %1531 = vmatpush1.bf16.msra.mxu0 %v1465
  %1532 = vmatprep.subr.bf16.mxu0 %v1470
  %1533 = vmatpush1.bf16.msra.mxu0 %v1469
  %1534 = vmatprep.subr.bf16.mxu0 %v1474
  %1535 = vmatpush1.bf16.msra.mxu0 %v1473
  %1536 = vmatprep.subr.bf16.mxu0 %v1478
  %1537 = vmatpush1.bf16.msra.mxu0 %v1477
  %1538 = vmatprep.subr.bf16.mxu0 %v1482
  %1539 = vmatpush1.bf16.msra.mxu0 %v1481
  %1540 = vmatprep.subr.bf16.mxu0 0
  %1541 = vmatpush1.bf16.msra.mxu0 0
  %1542 = vmatprep.subr.bf16.mxu0 0
  %1543 = vmatpush1.bf16.msra.mxu0 0
  %1544 = vmatprep.subr.bf16.mxu0 0
  %1545 = vmatpush1.bf16.msra.mxu0 0
  %1546 = vmatprep.subr.bf16.mxu0 0
  %1547 = vmatpush1.bf16.msra.mxu0 0
  %1548 = vmatprep.subr.bf16.mxu0 0
  %1549 = vmatpush1.bf16.msra.mxu0 0
  %1550 = vmatprep.subr.bf16.mxu0 0
  %1551 = vmatpush1.bf16.msra.mxu0 0
  %1552 = vmatprep.subr.bf16.mxu0 0
  %1553 = vmatpush1.bf16.msra.mxu0 0
  %1554 = vmatprep.subr.bf16.mxu0 0
  %1555 = vmatpush1.bf16.msra.mxu0 0
  %1556 = vmatprep.mubr.bf16.mxu0 0
  %1557 = vmatmul.mubr.bf16.gmra.mrb[0].mxu0 %v1450
  %v1558 = vpop.f32.mrb[0].mxu0
  %v1559 = vadd.f32 0.0, %v1558
  %v1560 = vpop.f32.mrb[0].mxu0
  %v1561 = vadd.f32 0.0, %v1560
  %v1562 = vpop.f32.mrb[0].mxu0
  %v1563 = vpop.f32.mrb[0].mxu0
  %1564 = vdwg.mxu0
  %v1565 = vadd.f32 %v1446, %v1518
  %v1566 = vadd.f32 %v1447, %v1520
  %v1567 = vadd.f32 %v1448, %v1559
  %v1568 = vadd.f32 %v1449, %v1561
  %v1569 = vxor.u32 %v1565, 2147483648
  %v1570 = vmul.f32 %v1569, 1.442695
  %v1571 = vpow.pop %v1570
  %v1572 = vadd.f32 %v1571, 1.0
  %v1573 = vrcp.pop %v1572
  %v1574 = vmul.f32 1.0, %v1573
  %v1575 = vxor.u32 %v1566, 2147483648
  %v1576 = vmul.f32 %v1575, 1.442695
  %v1577 = vpow.pop %v1576
  %v1578 = vadd.f32 %v1577, 1.0
  %v1579 = vrcp.pop %v1578
  %v1580 = vmul.f32 1.0, %v1579
  %v1581 = vtanh.pop %v1567
  %v1582 = vxor.u32 %v1568, 2147483648
  %v1583 = vmul.f32 %v1582, 1.442695
  %v1584 = vpow.pop %v1583
  %v1585 = vadd.f32 %v1584, 1.0
  %v1586 = vrcp.pop %v1585
  %v1587 = vmul.f32 1.0, %v1586
  %v1588 = vmul.f32 %v1580, %v1438
  %v1589 = vmul.f32 %v1574, %v1581
  %v1590 = vadd.f32 %v1588, %v1589
  %v1591 = vtanh.pop %v1590
  %v1592 = vmul.f32 %v1587, %v1591
  %s1593 = scalar_lea.vmem %s6, 56
  %1594 = vst [vmem:[%s1593] sm:$0xff] %v1592
  %1595 = vst [vmem:[#allocation5] sm:$0xff] %v1592
  %1596 = vst [vmem:[#allocation6] sm:$0xff] %v1590
  // Predicated region
  $region60: #{lstm_decoder_forward.2} parent=0 // pred_check
    %p1597 = pneg %p23
  $region61: #{lstm_decoder_forward.2} parent=0 // pred_check_branch
    %1599 = sbr.rel (%p1597) target = $region63
  $region62: #{lstm_decoder_forward.2} parent=0 // pred_region
    %1600 = vst [vmem:[%s7] sm:$0xff] %v1592
    %1601 = vst [vmem:[%s8] sm:$0xff] %v1590
  $region63: #{lstm_decoder_forward.2} parent=0 // pred_fallthru
    _
  // Predicated region
  $region64: #{lstm_decoder_forward.2} parent=0 // pred_check
    _
  $region65: #{lstm_decoder_forward.2} parent=0 // pred_check_branch
    %1603 = sbr.rel (0) target = $region67
  $region66: #{lstm_decoder_forward.2} parent=0 // pred_region
    _
  $region67: #{lstm_decoder_forward.2} parent=0 // pred_fallthru
    _
  // Predicated region
  $region68: #{lstm_decoder_forward.2} parent=0 // pred_check
    _
  $region69: #{lstm_decoder_forward.2} parent=0 // pred_check_branch
    %1605 = sbr.rel (0) target = $region71
  $region70: #{lstm_decoder_forward.2} parent=0 // pred_region
    _
  $region71: #{lstm_decoder_forward.2} parent=0 // pred_fallthru
    _
  // Predicated region
  $region72: #{lstm_decoder_forward.2} parent=0 // pred_check
    _
  $region73: #{lstm_decoder_forward.2} parent=0 // pred_check_branch
    %1607 = sbr.rel (0) target = $region75
  $region74: #{lstm_decoder_forward.2} parent=0 // pred_region
    _
  $region75: #{lstm_decoder_forward.2} parent=0 // pred_fallthru
    _
  // Predicated region
  $region76: #{lstm_decoder_forward.2} parent=0 // pred_check
    _
  $region77: #{lstm_decoder_forward.2} parent=0 // pred_check_branch
    %1609 = sbr.rel (0) target = $region79
  $region78: #{lstm_decoder_forward.2} parent=0 // pred_region
    _
  $region79: #{lstm_decoder_forward.2} parent=0 // pred_fallthru
    _
  // Predicated region
  $region80: #{lstm_decoder_forward.2} parent=0 // pred_check
    _
  $region81: #{lstm_decoder_forward.2} parent=0 // pred_check_branch
    %1611 = sbr.rel (0) target = $region83
  $region82: #{lstm_decoder_forward.2} parent=0 // pred_region
    _
  $region83: #{lstm_decoder_forward.2} parent=0 // pred_fallthru
    _
  // Predicated region
  $region84: #{lstm_decoder_forward.2} parent=0 // pred_check
    _
  $region85: #{lstm_decoder_forward.2} parent=0 // pred_check_branch
    %1613 = sbr.rel (0) target = $region87
  $region86: #{lstm_decoder_forward.2} parent=0 // pred_region
    _
  $region87: #{lstm_decoder_forward.2} parent=0 // pred_fallthru
    _
  %1614 = vsyncmov [#allocation7]
  %s1615 = vpop.sfrf %1614
  %p1616 = scmp.eq.s32.totalorder %s1615, 0
  %p1617 = pneg %p1616
  %1619 = shalt.err (%p1617)
  %s1620 = scalar_lea.sflag [#allocation7], 1
  %1621 = vsyncmov %s1620
  %s1622 = vpop.sfrf %1621
  %p1623 = scmp.eq.s32.totalorder %s1622, 0
  %p1624 = pneg %p1623
  %1626 = shalt.err (%p1624)

// kernel: lstm_decoder_forward.3
$region0: #{lstm_decoder_forward.3}
  #allocation0 [shape = 'u32[]', space=smem, size = 0x4, offset = 0x4, fixed_abs, tag = 'smem constant byte address 0x4 - core index']
  #allocation1 [shape = 'u32[144,128]{1,0:T(1,128)}', space=vmem, size = 0x12000, scoped, tag = 'internal scratch']
  #allocation2 [shape = 'bf16[128,512]{1,0:T(16,128)(2,1)}', space=vmem, size = 0x20000, scoped, tag = 'scratch operand']
  #allocation3 [shape = 'bf16[128,512]{1,0:T(16,128)(2,1)}', space=vmem, size = 0x20000, scoped, tag = 'scratch operand']
  #allocation4 [shape = 'bf16[128,128]{1,0:T(16,128)(2,1)}', space=vmem, size = 0x8000, scoped, tag = 'scratch operand']
  #allocation5 [shape = 'f32[64,512]{1,0:T(8,128)}', space=vmem, size = 0x20000, scoped, tag = 'scratch operand']
  #allocation6 [shape = 'f32[64,128]{1,0:T(8,128)}', space=vmem, size = 0x8000, scoped, tag = 'scratch operand']
  #allocation7 [shape = 'f32[8,128]{1,0:T(8,128)}', space=vmem, size = 0x1000, scoped, tag = 'scratch operand']
  #allocation8 [shape = 'f32[8,128]{1,0:T(8,128)}', space=vmem, size = 0x1000, scoped, tag = 'scratch operand']
  #allocation9 [shape = 's32[3]{0}', space=sflag, size = 0xc, scoped, tag = 'scratch operand']
  #allocation10 [shape = 's32[]', space=sflag, size = 0x4, offset = 0, fixed_abs, tag = 'sflag constant byte address 0x0 - dummy sync flag']
  #allocation11 [shape = 's32[]', space=sflag, size = 0x4, offset = 0, fixed_abs, tag = 'sflag constant byte address 0x0 - dummy sync flag']
  #allocation12 [shape = 's32[]', space=sflag, size = 0x4, offset = 0, fixed_abs, tag = 'sflag constant byte address 0x0 - dummy sync flag']
  #allocation13 [shape = 's32[]', space=sflag, size = 0x4, offset = 0, fixed_abs, tag = 'sflag constant byte address 0x0 - dummy sync flag']
  #allocation14 [shape = 'u32[]', space=smem, size = 0x4, offset = 0x44, fixed_abs, tag = 'smem constant byte address 0x44 - assertion arg 0']
  #allocation15 [shape = 'u32[]', space=smem, size = 0x4, offset = 0x48, fixed_abs, tag = 'smem constant byte address 0x48 - assertion arg 1']
  %s0 = inlined_call_operand.vmem [shape: f32[64,128], index: 0, kind: input, shape index: {}]
  %s1 = inlined_call_operand.vmem [shape: f32[8,128], index: 1, kind: input, shape index: {}]
  %s2 = inlined_call_operand.vmem [shape: f32[8,128], index: 2, kind: input, shape index: {}]
  %s3 = inlined_call_operand.vmem [shape: f32[1,512], index: 3, kind: input, shape index: {}]
  %s4 = inlined_call_operand.vmem [shape: f32[1,128], index: 4, kind: input, shape index: {}]
  %s5 = inlined_call_operand.vmem [shape: bf16[128,512], index: 5, kind: input, shape index: {}]
  %s6 = inlined_call_operand.vmem [shape: bf16[128,512], index: 6, kind: input, shape index: {}]
  %s7 = inlined_call_operand.hbm [shape: bf16[128,128], index: 7, kind: input, shape index: {}]
  %s8 = inlined_call_operand.vmem [shape: f32[64,128], index: 8, kind: output, shape index: {0}]
  %s9 = inlined_call_operand.vmem [shape: f32[8,128], index: 9, kind: output, shape index: {1}]
  %s10 = inlined_call_operand.vmem [shape: f32[8,128], index: 10, kind: output, shape index: {2}]
  %11 = xla_tuple %s8, %s9, %s10
  %s12 = sld [smem:[#allocation0]]
  $region140: #{lstm_decoder_forward.3} parent=0
    _
  %s14 = ssub.s32 1, %s12
  %s15 = scalar_select 0, %s14, %s12
  // Predicated region
  $region2: #{lstm_decoder_forward.3} parent=0 // pred_check
    _
  $region3: #{lstm_decoder_forward.3} parent=0 // pred_check_branch
    %17 = sbr.rel (0) target = $region5
  $region4: #{lstm_decoder_forward.3} parent=0 // pred_region
    _
  $region5: #{lstm_decoder_forward.3} parent=0 // pred_fallthru
    _
  // Predicated region
  $region6: #{lstm_decoder_forward.3} parent=0 // pred_check
    _
  $region7: #{lstm_decoder_forward.3} parent=0 // pred_check_branch
    %19 = sbr.rel (0) target = $region9
  $region8: #{lstm_decoder_forward.3} parent=0 // pred_region
    _
  $region9: #{lstm_decoder_forward.3} parent=0 // pred_fallthru
    _
  // Predicated region
  $region10: #{lstm_decoder_forward.3} parent=0 // pred_check
    _
  $region11: #{lstm_decoder_forward.3} parent=0 // pred_check_branch
    %21 = sbr.rel (0) target = $region13
  $region12: #{lstm_decoder_forward.3} parent=0 // pred_region
    _
  $region13: #{lstm_decoder_forward.3} parent=0 // pred_fallthru
    _
  // Predicated region
  $region14: #{lstm_decoder_forward.3} parent=0 // pred_check
    _
  $region15: #{lstm_decoder_forward.3} parent=0 // pred_check_branch
    %23 = sbr.rel (0) target = $region17
  $region16: #{lstm_decoder_forward.3} parent=0 // pred_region
    _
  $region17: #{lstm_decoder_forward.3} parent=0 // pred_fallthru
    _
  // Predicated region
  $region18: #{lstm_decoder_forward.3} parent=0 // pred_check
    _
  $region19: #{lstm_decoder_forward.3} parent=0 // pred_check_branch
    %25 = sbr.rel (0) target = $region21
  $region20: #{lstm_decoder_forward.3} parent=0 // pred_region
    _
  $region21: #{lstm_decoder_forward.3} parent=0 // pred_fallthru
    _
  %p27 = scmp.eq.s32.totalorder 0, 0
  // Predicated region
  $region22: #{lstm_decoder_forward.3} parent=0 // pred_check
    %p28 = pneg %p27
  $region23: #{lstm_decoder_forward.3} parent=0 // pred_check_branch
    %30 = sbr.rel (%p28) target = $region25
  $region24: #{lstm_decoder_forward.3} parent=0 // pred_region
    %p32 = scmp.lt.u32.totalorder 4, 8
    %p33 = pneg %p32
    // Predicated region
    $region26: #{lstm_decoder_forward.3} parent=24 // pred_check
      _
    $region27: #{lstm_decoder_forward.3} parent=24 // pred_check_branch
      %35 = sbr.rel (%p32) target = $region29
    $region28: #{lstm_decoder_forward.3} parent=24 // pred_region
      %s176 = sand.u32 4, 7
      %p177 = scmp.eq.s32.totalorder %s176, 0
      %p178 = pneg %p177
      // Predicated region
      $region41: #{lstm_decoder_forward.3} parent=28 // pred_check
        _
      $region42: #{lstm_decoder_forward.3} parent=28 // pred_check_branch
        %180 = sbr.rel (%p177) target = $region44
      $region43: #{lstm_decoder_forward.3} parent=28 // pred_region
        %s181 = sand.u32 4, 7
        %s182 = ssub.s32 4, %s181
        %s183 = scalar_lea.vmem %s5, %s182
        %s184 = ssub.s32 4, %s181
        %s185 = scalar_lea.vmem [#allocation2], %s184
        loop: start=0, step=1, limit=1
        $region45: #{lstm_decoder_forward.3} parent=43 // loop_pre_header
          _
        $region46: #{lstm_decoder_forward.3} parent=43 // loop_header
          %s187 = sphi 0, %s191
          %p188 = scmp.ge.s32.totalorder %s187, 1
          %s192 = sphi %s5, %s5
          %s193 = sphi [#allocation2], [#allocation2]
        $region47: #{lstm_decoder_forward.3} parent=43 // loop_header_branch
          %190 = sbr.rel (%p188) target = $region51
        $region48: #{lstm_decoder_forward.3} parent=43 // loop_body
          _
        $region49: #{lstm_decoder_forward.3} parent=43 // loop_footer
          %s191 = sadd.s32 1, %s187
        $region50: #{lstm_decoder_forward.3} parent=43 // loop_footer_branch
          %186 = sbr.rel target = $region46
        $region51: #{lstm_decoder_forward.3} parent=43 // loop_exit
          _
        %s194 = sshllo.u32 0, %s181
        loop: start=0, step=1, limit=1
        $region52: #{lstm_decoder_forward.3} parent=43 // loop_pre_header
          _
        $region53: #{lstm_decoder_forward.3} parent=43 // loop_header
          %s196 = sphi 0, %s200
          %p197 = scmp.ge.s32.totalorder %s196, 1
          %s201 = sphi %s183, %s183
          %s202 = sphi %s185, %s185
        $region54: #{lstm_decoder_forward.3} parent=43 // loop_header_branch
          %199 = sbr.rel (%p197) target = $region58
        $region55: #{lstm_decoder_forward.3} parent=43 // loop_body
          %v203 = vld [vmem:[%s201] sm:%s194]
          %204 = vst [vmem:[%s202] sm:%s194] %v203
          %v205 = vld [vmem:[%s201 + $0x10] sm:%s194]
          %206 = vst [vmem:[%s202 + $0x4] sm:%s194] %v205
          %v207 = vld [vmem:[%s201 + $0x4] sm:%s194]
          %208 = vst [vmem:[%s202 + $0x8] sm:%s194] %v207
          %v209 = vld [vmem:[%s201 + $0x14] sm:%s194]
          %210 = vst [vmem:[%s202 + $0xc] sm:%s194] %v209
          %v211 = vld [vmem:[%s201 + $0x8] sm:%s194]
          %212 = vst [vmem:[%s202 + $0x10] sm:%s194] %v211
          %v213 = vld [vmem:[%s201 + $0x18] sm:%s194]
          %214 = vst [vmem:[%s202 + $0x14] sm:%s194] %v213
          %v215 = vld [vmem:[%s201 + $0xc] sm:%s194]
          %216 = vst [vmem:[%s202 + $0x18] sm:%s194] %v215
          %v217 = vld [vmem:[%s201 + $0x1c] sm:%s194]
          %218 = vst [vmem:[%s202 + $0x1c] sm:%s194] %v217
          %v219 = vld [vmem:[%s201 + $0x20] sm:%s194]
          %220 = vst [vmem:[%s202 + $0x20] sm:%s194] %v219
          %v221 = vld [vmem:[%s201 + $0x30] sm:%s194]
          %222 = vst [vmem:[%s202 + $0x24] sm:%s194] %v221
          %v223 = vld [vmem:[%s201 + $0x24] sm:%s194]
          %224 = vst [vmem:[%s202 + $0x28] sm:%s194] %v223
          %v225 = vld [vmem:[%s201 + $0x34] sm:%s194]
          %226 = vst [vmem:[%s202 + $0x2c] sm:%s194] %v225
          %v227 = vld [vmem:[%s201 + $0x28] sm:%s194]
          %228 = vst [vmem:[%s202 + $0x30] sm:%s194] %v227
          %v229 = vld [vmem:[%s201 + $0x38] sm:%s194]
          %230 = vst [vmem:[%s202 + $0x34] sm:%s194] %v229
          %v231 = vld [vmem:[%s201 + $0x2c] sm:%s194]
          %232 = vst [vmem:[%s202 + $0x38] sm:%s194] %v231
          %v233 = vld [vmem:[%s201 + $0x3c] sm:%s194]
          %234 = vst [vmem:[%s202 + $0x3c] sm:%s194] %v233
          %v235 = vld [vmem:[%s201 + $0x40] sm:%s194]
          %236 = vst [vmem:[%s202 + $0x40] sm:%s194] %v235
          %v237 = vld [vmem:[%s201 + $0x50] sm:%s194]
          %238 = vst [vmem:[%s202 + $0x44] sm:%s194] %v237
          %v239 = vld [vmem:[%s201 + $0x44] sm:%s194]
          %240 = vst [vmem:[%s202 + $0x48] sm:%s194] %v239
          %v241 = vld [vmem:[%s201 + $0x54] sm:%s194]
          %242 = vst [vmem:[%s202 + $0x4c] sm:%s194] %v241
          %v243 = vld [vmem:[%s201 + $0x48] sm:%s194]
          %244 = vst [vmem:[%s202 + $0x50] sm:%s194] %v243
          %v245 = vld [vmem:[%s201 + $0x58] sm:%s194]
          %246 = vst [vmem:[%s202 + $0x54] sm:%s194] %v245
          %v247 = vld [vmem:[%s201 + $0x4c] sm:%s194]
          %248 = vst [vmem:[%s202 + $0x58] sm:%s194] %v247
          %v249 = vld [vmem:[%s201 + $0x5c] sm:%s194]
          %250 = vst [vmem:[%s202 + $0x5c] sm:%s194] %v249
          %v251 = vld [vmem:[%s201 + $0x60] sm:%s194]
          %252 = vst [vmem:[%s202 + $0x60] sm:%s194] %v251
          %v253 = vld [vmem:[%s201 + $0x70] sm:%s194]
          %254 = vst [vmem:[%s202 + $0x64] sm:%s194] %v253
          %v255 = vld [vmem:[%s201 + $0x64] sm:%s194]
          %256 = vst [vmem:[%s202 + $0x68] sm:%s194] %v255
          %v257 = vld [vmem:[%s201 + $0x74] sm:%s194]
          %258 = vst [vmem:[%s202 + $0x6c] sm:%s194] %v257
          %v259 = vld [vmem:[%s201 + $0x68] sm:%s194]
          %260 = vst [vmem:[%s202 + $0x70] sm:%s194] %v259
          %v261 = vld [vmem:[%s201 + $0x78] sm:%s194]
          %262 = vst [vmem:[%s202 + $0x74] sm:%s194] %v261
          %v263 = vld [vmem:[%s201 + $0x6c] sm:%s194]
          %264 = vst [vmem:[%s202 + $0x78] sm:%s194] %v263
          %v265 = vld [vmem:[%s201 + $0x7c] sm:%s194]
          %266 = vst [vmem:[%s202 + $0x7c] sm:%s194] %v265
          %v267 = vld [vmem:[%s201 + $0x80] sm:%s194]
          %268 = vst [vmem:[%s202 + $0x80] sm:%s194] %v267
          %v269 = vld [vmem:[%s201 + $0x90] sm:%s194]
          %270 = vst [vmem:[%s202 + $0x84] sm:%s194] %v269
          %v271 = vld [vmem:[%s201 + $0x84] sm:%s194]
          %272 = vst [vmem:[%s202 + $0x88] sm:%s194] %v271
          %v273 = vld [vmem:[%s201 + $0x94] sm:%s194]
          %274 = vst [vmem:[%s202 + $0x8c] sm:%s194] %v273
          %v275 = vld [vmem:[%s201 + $0x88] sm:%s194]
          %276 = vst [vmem:[%s202 + $0x90] sm:%s194] %v275
          %v277 = vld [vmem:[%s201 + $0x98] sm:%s194]
          %278 = vst [vmem:[%s202 + $0x94] sm:%s194] %v277
          %v279 = vld [vmem:[%s201 + $0x8c] sm:%s194]
          %280 = vst [vmem:[%s202 + $0x98] sm:%s194] %v279
          %v281 = vld [vmem:[%s201 + $0x9c] sm:%s194]
          %282 = vst [vmem:[%s202 + $0x9c] sm:%s194] %v281
          %v283 = vld [vmem:[%s201 + $0xa0] sm:%s194]
          %284 = vst [vmem:[%s202 + $0xa0] sm:%s194] %v283
          %v285 = vld [vmem:[%s201 + $0xb0] sm:%s194]
          %286 = vst [vmem:[%s202 + $0xa4] sm:%s194] %v285
          %v287 = vld [vmem:[%s201 + $0xa4] sm:%s194]
          %288 = vst [vmem:[%s202 + $0xa8] sm:%s194] %v287
          %v289 = vld [vmem:[%s201 + $0xb4] sm:%s194]
          %290 = vst [vmem:[%s202 + $0xac] sm:%s194] %v289
          %v291 = vld [vmem:[%s201 + $0xa8] sm:%s194]
          %292 = vst [vmem:[%s202 + $0xb0] sm:%s194] %v291
          %v293 = vld [vmem:[%s201 + $0xb8] sm:%s194]
          %294 = vst [vmem:[%s202 + $0xb4] sm:%s194] %v293
          %v295 = vld [vmem:[%s201 + $0xac] sm:%s194]
          %296 = vst [vmem:[%s202 + $0xb8] sm:%s194] %v295
          %v297 = vld [vmem:[%s201 + $0xbc] sm:%s194]
          %298 = vst [vmem:[%s202 + $0xbc] sm:%s194] %v297
          %v299 = vld [vmem:[%s201 + $0xc0] sm:%s194]
          %300 = vst [vmem:[%s202 + $0xc0] sm:%s194] %v299
          %v301 = vld [vmem:[%s201 + $0xd0] sm:%s194]
          %302 = vst [vmem:[%s202 + $0xc4] sm:%s194] %v301
          %v303 = vld [vmem:[%s201 + $0xc4] sm:%s194]
          %304 = vst [vmem:[%s202 + $0xc8] sm:%s194] %v303
          %v305 = vld [vmem:[%s201 + $0xd4] sm:%s194]
          %306 = vst [vmem:[%s202 + $0xcc] sm:%s194] %v305
          %v307 = vld [vmem:[%s201 + $0xc8] sm:%s194]
          %308 = vst [vmem:[%s202 + $0xd0] sm:%s194] %v307
          %v309 = vld [vmem:[%s201 + $0xd8] sm:%s194]
          %310 = vst [vmem:[%s202 + $0xd4] sm:%s194] %v309
          %v311 = vld [vmem:[%s201 + $0xcc] sm:%s194]
          %312 = vst [vmem:[%s202 + $0xd8] sm:%s194] %v311
          %v313 = vld [vmem:[%s201 + $0xdc] sm:%s194]
          %314 = vst [vmem:[%s202 + $0xdc] sm:%s194] %v313
          %v315 = vld [vmem:[%s201 + $0xe0] sm:%s194]
          %316 = vst [vmem:[%s202 + $0xe0] sm:%s194] %v315
          %v317 = vld [vmem:[%s201 + $0xf0] sm:%s194]
          %318 = vst [vmem:[%s202 + $0xe4] sm:%s194] %v317
          %v319 = vld [vmem:[%s201 + $0xe4] sm:%s194]
          %320 = vst [vmem:[%s202 + $0xe8] sm:%s194] %v319
          %v321 = vld [vmem:[%s201 + $0xf4] sm:%s194]
          %322 = vst [vmem:[%s202 + $0xec] sm:%s194] %v321
          %v323 = vld [vmem:[%s201 + $0xe8] sm:%s194]
          %324 = vst [vmem:[%s202 + $0xf0] sm:%s194] %v323
          %v325 = vld [vmem:[%s201 + $0xf8] sm:%s194]
          %326 = vst [vmem:[%s202 + $0xf4] sm:%s194] %v325
          %v327 = vld [vmem:[%s201 + $0xec] sm:%s194]
          %328 = vst [vmem:[%s202 + $0xf8] sm:%s194] %v327
          %v329 = vld [vmem:[%s201 + $0xfc] sm:%s194]
          %330 = vst [vmem:[%s202 + $0xfc] sm:%s194] %v329
        $region56: #{lstm_decoder_forward.3} parent=43 // loop_footer
          %s200 = sadd.s32 1, %s196
        $region57: #{lstm_decoder_forward.3} parent=43 // loop_footer_branch
          %195 = sbr.rel target = $region53
        $region58: #{lstm_decoder_forward.3} parent=43 // loop_exit
          _
      $region44: #{lstm_decoder_forward.3} parent=28 // pred_fallthru
        _
    $region29: #{lstm_decoder_forward.3} parent=24 // pred_fallthru
      _
    // Predicated region
    $region30: #{lstm_decoder_forward.3} parent=24 // pred_check
      %p36 = pneg %p32
    $region31: #{lstm_decoder_forward.3} parent=24 // pred_check_branch
      %38 = sbr.rel (%p36) target = $region33
    $region32: #{lstm_decoder_forward.3} parent=24 // pred_region
      %s39 = sshllo.u32 0, 4
      loop: start=0, step=1, limit=1
      $region34: #{lstm_decoder_forward.3} parent=32 // loop_pre_header
        _
      $region35: #{lstm_decoder_forward.3} parent=32 // loop_header
        %s41 = sphi 0, %s45
        %p42 = scmp.ge.s32.totalorder %s41, 1
        %s46 = sphi %s5, %s5
        %s47 = sphi [#allocation2], [#allocation2]
      $region36: #{lstm_decoder_forward.3} parent=32 // loop_header_branch
        %44 = sbr.rel (%p42) target = $region40
      $region37: #{lstm_decoder_forward.3} parent=32 // loop_body
        %v48 = vld [vmem:[%s46] sm:%s39]
        %49 = vst [vmem:[%s47] sm:%s39] %v48
        %v50 = vld [vmem:[%s46 + $0x10] sm:%s39]
        %51 = vst [vmem:[%s47 + $0x4] sm:%s39] %v50
        %v52 = vld [vmem:[%s46 + $0x4] sm:%s39]
        %53 = vst [vmem:[%s47 + $0x8] sm:%s39] %v52
        %v54 = vld [vmem:[%s46 + $0x14] sm:%s39]
        %55 = vst [vmem:[%s47 + $0xc] sm:%s39] %v54
        %v56 = vld [vmem:[%s46 + $0x8] sm:%s39]
        %57 = vst [vmem:[%s47 + $0x10] sm:%s39] %v56
        %v58 = vld [vmem:[%s46 + $0x18] sm:%s39]
        %59 = vst [vmem:[%s47 + $0x14] sm:%s39] %v58
        %v60 = vld [vmem:[%s46 + $0xc] sm:%s39]
        %61 = vst [vmem:[%s47 + $0x18] sm:%s39] %v60
        %v62 = vld [vmem:[%s46 + $0x1c] sm:%s39]
        %63 = vst [vmem:[%s47 + $0x1c] sm:%s39] %v62
        %v64 = vld [vmem:[%s46 + $0x20] sm:%s39]
        %65 = vst [vmem:[%s47 + $0x20] sm:%s39] %v64
        %v66 = vld [vmem:[%s46 + $0x30] sm:%s39]
        %67 = vst [vmem:[%s47 + $0x24] sm:%s39] %v66
        %v68 = vld [vmem:[%s46 + $0x24] sm:%s39]
        %69 = vst [vmem:[%s47 + $0x28] sm:%s39] %v68
        %v70 = vld [vmem:[%s46 + $0x34] sm:%s39]
        %71 = vst [vmem:[%s47 + $0x2c] sm:%s39] %v70
        %v72 = vld [vmem:[%s46 + $0x28] sm:%s39]
        %73 = vst [vmem:[%s47 + $0x30] sm:%s39] %v72
        %v74 = vld [vmem:[%s46 + $0x38] sm:%s39]
        %75 = vst [vmem:[%s47 + $0x34] sm:%s39] %v74
        %v76 = vld [vmem:[%s46 + $0x2c] sm:%s39]
        %77 = vst [vmem:[%s47 + $0x38] sm:%s39] %v76
        %v78 = vld [vmem:[%s46 + $0x3c] sm:%s39]
        %79 = vst [vmem:[%s47 + $0x3c] sm:%s39] %v78
        %v80 = vld [vmem:[%s46 + $0x40] sm:%s39]
        %81 = vst [vmem:[%s47 + $0x40] sm:%s39] %v80
        %v82 = vld [vmem:[%s46 + $0x50] sm:%s39]
        %83 = vst [vmem:[%s47 + $0x44] sm:%s39] %v82
        %v84 = vld [vmem:[%s46 + $0x44] sm:%s39]
        %85 = vst [vmem:[%s47 + $0x48] sm:%s39] %v84
        %v86 = vld [vmem:[%s46 + $0x54] sm:%s39]
        %87 = vst [vmem:[%s47 + $0x4c] sm:%s39] %v86
        %v88 = vld [vmem:[%s46 + $0x48] sm:%s39]
        %89 = vst [vmem:[%s47 + $0x50] sm:%s39] %v88
        %v90 = vld [vmem:[%s46 + $0x58] sm:%s39]
        %91 = vst [vmem:[%s47 + $0x54] sm:%s39] %v90
        %v92 = vld [vmem:[%s46 + $0x4c] sm:%s39]
        %93 = vst [vmem:[%s47 + $0x58] sm:%s39] %v92
        %v94 = vld [vmem:[%s46 + $0x5c] sm:%s39]
        %95 = vst [vmem:[%s47 + $0x5c] sm:%s39] %v94
        %v96 = vld [vmem:[%s46 + $0x60] sm:%s39]
        %97 = vst [vmem:[%s47 + $0x60] sm:%s39] %v96
        %v98 = vld [vmem:[%s46 + $0x70] sm:%s39]
        %99 = vst [vmem:[%s47 + $0x64] sm:%s39] %v98
        %v100 = vld [vmem:[%s46 + $0x64] sm:%s39]
        %101 = vst [vmem:[%s47 + $0x68] sm:%s39] %v100
        %v102 = vld [vmem:[%s46 + $0x74] sm:%s39]
        %103 = vst [vmem:[%s47 + $0x6c] sm:%s39] %v102
        %v104 = vld [vmem:[%s46 + $0x68] sm:%s39]
        %105 = vst [vmem:[%s47 + $0x70] sm:%s39] %v104
        %v106 = vld [vmem:[%s46 + $0x78] sm:%s39]
        %107 = vst [vmem:[%s47 + $0x74] sm:%s39] %v106
        %v108 = vld [vmem:[%s46 + $0x6c] sm:%s39]
        %109 = vst [vmem:[%s47 + $0x78] sm:%s39] %v108
        %v110 = vld [vmem:[%s46 + $0x7c] sm:%s39]
        %111 = vst [vmem:[%s47 + $0x7c] sm:%s39] %v110
        %v112 = vld [vmem:[%s46 + $0x80] sm:%s39]
        %113 = vst [vmem:[%s47 + $0x80] sm:%s39] %v112
        %v114 = vld [vmem:[%s46 + $0x90] sm:%s39]
        %115 = vst [vmem:[%s47 + $0x84] sm:%s39] %v114
        %v116 = vld [vmem:[%s46 + $0x84] sm:%s39]
        %117 = vst [vmem:[%s47 + $0x88] sm:%s39] %v116
        %v118 = vld [vmem:[%s46 + $0x94] sm:%s39]
        %119 = vst [vmem:[%s47 + $0x8c] sm:%s39] %v118
        %v120 = vld [vmem:[%s46 + $0x88] sm:%s39]
        %121 = vst [vmem:[%s47 + $0x90] sm:%s39] %v120
        %v122 = vld [vmem:[%s46 + $0x98] sm:%s39]
        %123 = vst [vmem:[%s47 + $0x94] sm:%s39] %v122
        %v124 = vld [vmem:[%s46 + $0x8c] sm:%s39]
        %125 = vst [vmem:[%s47 + $0x98] sm:%s39] %v124
        %v126 = vld [vmem:[%s46 + $0x9c] sm:%s39]
        %127 = vst [vmem:[%s47 + $0x9c] sm:%s39] %v126
        %v128 = vld [vmem:[%s46 + $0xa0] sm:%s39]
        %129 = vst [vmem:[%s47 + $0xa0] sm:%s39] %v128
        %v130 = vld [vmem:[%s46 + $0xb0] sm:%s39]
        %131 = vst [vmem:[%s47 + $0xa4] sm:%s39] %v130
        %v132 = vld [vmem:[%s46 + $0xa4] sm:%s39]
        %133 = vst [vmem:[%s47 + $0xa8] sm:%s39] %v132
        %v134 = vld [vmem:[%s46 + $0xb4] sm:%s39]
        %135 = vst [vmem:[%s47 + $0xac] sm:%s39] %v134
        %v136 = vld [vmem:[%s46 + $0xa8] sm:%s39]
        %137 = vst [vmem:[%s47 + $0xb0] sm:%s39] %v136
        %v138 = vld [vmem:[%s46 + $0xb8] sm:%s39]
        %139 = vst [vmem:[%s47 + $0xb4] sm:%s39] %v138
        %v140 = vld [vmem:[%s46 + $0xac] sm:%s39]
        %141 = vst [vmem:[%s47 + $0xb8] sm:%s39] %v140
        %v142 = vld [vmem:[%s46 + $0xbc] sm:%s39]
        %143 = vst [vmem:[%s47 + $0xbc] sm:%s39] %v142
        %v144 = vld [vmem:[%s46 + $0xc0] sm:%s39]
        %145 = vst [vmem:[%s47 + $0xc0] sm:%s39] %v144
        %v146 = vld [vmem:[%s46 + $0xd0] sm:%s39]
        %147 = vst [vmem:[%s47 + $0xc4] sm:%s39] %v146
        %v148 = vld [vmem:[%s46 + $0xc4] sm:%s39]
        %149 = vst [vmem:[%s47 + $0xc8] sm:%s39] %v148
        %v150 = vld [vmem:[%s46 + $0xd4] sm:%s39]
        %151 = vst [vmem:[%s47 + $0xcc] sm:%s39] %v150
        %v152 = vld [vmem:[%s46 + $0xc8] sm:%s39]
        %153 = vst [vmem:[%s47 + $0xd0] sm:%s39] %v152
        %v154 = vld [vmem:[%s46 + $0xd8] sm:%s39]
        %155 = vst [vmem:[%s47 + $0xd4] sm:%s39] %v154
        %v156 = vld [vmem:[%s46 + $0xcc] sm:%s39]
        %157 = vst [vmem:[%s47 + $0xd8] sm:%s39] %v156
        %v158 = vld [vmem:[%s46 + $0xdc] sm:%s39]
        %159 = vst [vmem:[%s47 + $0xdc] sm:%s39] %v158
        %v160 = vld [vmem:[%s46 + $0xe0] sm:%s39]
        %161 = vst [vmem:[%s47 + $0xe0] sm:%s39] %v160
        %v162 = vld [vmem:[%s46 + $0xf0] sm:%s39]
        %163 = vst [vmem:[%s47 + $0xe4] sm:%s39] %v162
        %v164 = vld [vmem:[%s46 + $0xe4] sm:%s39]
        %165 = vst [vmem:[%s47 + $0xe8] sm:%s39] %v164
        %v166 = vld [vmem:[%s46 + $0xf4] sm:%s39]
        %167 = vst [vmem:[%s47 + $0xec] sm:%s39] %v166
        %v168 = vld [vmem:[%s46 + $0xe8] sm:%s39]
        %169 = vst [vmem:[%s47 + $0xf0] sm:%s39] %v168
        %v170 = vld [vmem:[%s46 + $0xf8] sm:%s39]
        %171 = vst [vmem:[%s47 + $0xf4] sm:%s39] %v170
        %v172 = vld [vmem:[%s46 + $0xec] sm:%s39]
        %173 = vst [vmem:[%s47 + $0xf8] sm:%s39] %v172
        %v174 = vld [vmem:[%s46 + $0xfc] sm:%s39]
        %175 = vst [vmem:[%s47 + $0xfc] sm:%s39] %v174
      $region38: #{lstm_decoder_forward.3} parent=32 // loop_footer
        %s45 = sadd.s32 1, %s41
      $region39: #{lstm_decoder_forward.3} parent=32 // loop_footer_branch
        %40 = sbr.rel target = $region35
      $region40: #{lstm_decoder_forward.3} parent=32 // loop_exit
        _
    $region33: #{lstm_decoder_forward.3} parent=24 // pred_fallthru
      _
    // Predicated region
    $region59: #{lstm_decoder_forward.3} parent=24 // pred_check
      _
    $region60: #{lstm_decoder_forward.3} parent=24 // pred_check_branch
      %333 = sbr.rel (0) target = $region62
    $region61: #{lstm_decoder_forward.3} parent=24 // pred_region
      %334 = vsyncadd [#allocation9], 4096
    $region62: #{lstm_decoder_forward.3} parent=24 // pred_fallthru
      _
    %s335 = scalar_lea.sflag [#allocation9], 1
    %p337 = scmp.lt.u32.totalorder 4, 8
    %p338 = pneg %p337
    // Predicated region
    $region63: #{lstm_decoder_forward.3} parent=24 // pred_check
      _
    $region64: #{lstm_decoder_forward.3} parent=24 // pred_check_branch
      %340 = sbr.rel (%p337) target = $region66
    $region65: #{lstm_decoder_forward.3} parent=24 // pred_region
      %s481 = sand.u32 4, 7
      %p482 = scmp.eq.s32.totalorder %s481, 0
      %p483 = pneg %p482
      // Predicated region
      $region78: #{lstm_decoder_forward.3} parent=65 // pred_check
        _
      $region79: #{lstm_decoder_forward.3} parent=65 // pred_check_branch
        %485 = sbr.rel (%p482) target = $region81
      $region80: #{lstm_decoder_forward.3} parent=65 // pred_region
        %s486 = sand.u32 4, 7
        %s487 = ssub.s32 4, %s486
        %s488 = scalar_lea.vmem %s6, %s487
        %s489 = ssub.s32 4, %s486
        %s490 = scalar_lea.vmem [#allocation3], %s489
        loop: start=0, step=1, limit=1
        $region82: #{lstm_decoder_forward.3} parent=80 // loop_pre_header
          _
        $region83: #{lstm_decoder_forward.3} parent=80 // loop_header
          %s492 = sphi 0, %s496
          %p493 = scmp.ge.s32.totalorder %s492, 1
          %s497 = sphi %s6, %s6
          %s498 = sphi [#allocation3], [#allocation3]
        $region84: #{lstm_decoder_forward.3} parent=80 // loop_header_branch
          %495 = sbr.rel (%p493) target = $region88
        $region85: #{lstm_decoder_forward.3} parent=80 // loop_body
          _
        $region86: #{lstm_decoder_forward.3} parent=80 // loop_footer
          %s496 = sadd.s32 1, %s492
        $region87: #{lstm_decoder_forward.3} parent=80 // loop_footer_branch
          %491 = sbr.rel target = $region83
        $region88: #{lstm_decoder_forward.3} parent=80 // loop_exit
          _
        %s499 = sshllo.u32 0, %s486
        loop: start=0, step=1, limit=1
        $region89: #{lstm_decoder_forward.3} parent=80 // loop_pre_header
          _
        $region90: #{lstm_decoder_forward.3} parent=80 // loop_header
          %s501 = sphi 0, %s505
          %p502 = scmp.ge.s32.totalorder %s501, 1
          %s506 = sphi %s488, %s488
          %s507 = sphi %s490, %s490
        $region91: #{lstm_decoder_forward.3} parent=80 // loop_header_branch
          %504 = sbr.rel (%p502) target = $region95
        $region92: #{lstm_decoder_forward.3} parent=80 // loop_body
          %v508 = vld [vmem:[%s506] sm:%s499]
          %509 = vst [vmem:[%s507] sm:%s499] %v508
          %v510 = vld [vmem:[%s506 + $0x10] sm:%s499]
          %511 = vst [vmem:[%s507 + $0x4] sm:%s499] %v510
          %v512 = vld [vmem:[%s506 + $0x4] sm:%s499]
          %513 = vst [vmem:[%s507 + $0x8] sm:%s499] %v512
          %v514 = vld [vmem:[%s506 + $0x14] sm:%s499]
          %515 = vst [vmem:[%s507 + $0xc] sm:%s499] %v514
          %v516 = vld [vmem:[%s506 + $0x8] sm:%s499]
          %517 = vst [vmem:[%s507 + $0x10] sm:%s499] %v516
          %v518 = vld [vmem:[%s506 + $0x18] sm:%s499]
          %519 = vst [vmem:[%s507 + $0x14] sm:%s499] %v518
          %v520 = vld [vmem:[%s506 + $0xc] sm:%s499]
          %521 = vst [vmem:[%s507 + $0x18] sm:%s499] %v520
          %v522 = vld [vmem:[%s506 + $0x1c] sm:%s499]
          %523 = vst [vmem:[%s507 + $0x1c] sm:%s499] %v522
          %v524 = vld [vmem:[%s506 + $0x20] sm:%s499]
          %525 = vst [vmem:[%s507 + $0x20] sm:%s499] %v524
          %v526 = vld [vmem:[%s506 + $0x30] sm:%s499]
          %527 = vst [vmem:[%s507 + $0x24] sm:%s499] %v526
          %v528 = vld [vmem:[%s506 + $0x24] sm:%s499]
          %529 = vst [vmem:[%s507 + $0x28] sm:%s499] %v528
          %v530 = vld [vmem:[%s506 + $0x34] sm:%s499]
          %531 = vst [vmem:[%s507 + $0x2c] sm:%s499] %v530
          %v532 = vld [vmem:[%s506 + $0x28] sm:%s499]
          %533 = vst [vmem:[%s507 + $0x30] sm:%s499] %v532
          %v534 = vld [vmem:[%s506 + $0x38] sm:%s499]
          %535 = vst [vmem:[%s507 + $0x34] sm:%s499] %v534
          %v536 = vld [vmem:[%s506 + $0x2c] sm:%s499]
          %537 = vst [vmem:[%s507 + $0x38] sm:%s499] %v536
          %v538 = vld [vmem:[%s506 + $0x3c] sm:%s499]
          %539 = vst [vmem:[%s507 + $0x3c] sm:%s499] %v538
          %v540 = vld [vmem:[%s506 + $0x40] sm:%s499]
          %541 = vst [vmem:[%s507 + $0x40] sm:%s499] %v540
          %v542 = vld [vmem:[%s506 + $0x50] sm:%s499]
          %543 = vst [vmem:[%s507 + $0x44] sm:%s499] %v542
          %v544 = vld [vmem:[%s506 + $0x44] sm:%s499]
          %545 = vst [vmem:[%s507 + $0x48] sm:%s499] %v544
          %v546 = vld [vmem:[%s506 + $0x54] sm:%s499]
          %547 = vst [vmem:[%s507 + $0x4c] sm:%s499] %v546
          %v548 = vld [vmem:[%s506 + $0x48] sm:%s499]
          %549 = vst [vmem:[%s507 + $0x50] sm:%s499] %v548
          %v550 = vld [vmem:[%s506 + $0x58] sm:%s499]
          %551 = vst [vmem:[%s507 + $0x54] sm:%s499] %v550
          %v552 = vld [vmem:[%s506 + $0x4c] sm:%s499]
          %553 = vst [vmem:[%s507 + $0x58] sm:%s499] %v552
          %v554 = vld [vmem:[%s506 + $0x5c] sm:%s499]
          %555 = vst [vmem:[%s507 + $0x5c] sm:%s499] %v554
          %v556 = vld [vmem:[%s506 + $0x60] sm:%s499]
          %557 = vst [vmem:[%s507 + $0x60] sm:%s499] %v556
          %v558 = vld [vmem:[%s506 + $0x70] sm:%s499]
          %559 = vst [vmem:[%s507 + $0x64] sm:%s499] %v558
          %v560 = vld [vmem:[%s506 + $0x64] sm:%s499]
          %561 = vst [vmem:[%s507 + $0x68] sm:%s499] %v560
          %v562 = vld [vmem:[%s506 + $0x74] sm:%s499]
          %563 = vst [vmem:[%s507 + $0x6c] sm:%s499] %v562
          %v564 = vld [vmem:[%s506 + $0x68] sm:%s499]
          %565 = vst [vmem:[%s507 + $0x70] sm:%s499] %v564
          %v566 = vld [vmem:[%s506 + $0x78] sm:%s499]
          %567 = vst [vmem:[%s507 + $0x74] sm:%s499] %v566
          %v568 = vld [vmem:[%s506 + $0x6c] sm:%s499]
          %569 = vst [vmem:[%s507 + $0x78] sm:%s499] %v568
          %v570 = vld [vmem:[%s506 + $0x7c] sm:%s499]
          %571 = vst [vmem:[%s507 + $0x7c] sm:%s499] %v570
          %v572 = vld [vmem:[%s506 + $0x80] sm:%s499]
          %573 = vst [vmem:[%s507 + $0x80] sm:%s499] %v572
          %v574 = vld [vmem:[%s506 + $0x90] sm:%s499]
          %575 = vst [vmem:[%s507 + $0x84] sm:%s499] %v574
          %v576 = vld [vmem:[%s506 + $0x84] sm:%s499]
          %577 = vst [vmem:[%s507 + $0x88] sm:%s499] %v576
          %v578 = vld [vmem:[%s506 + $0x94] sm:%s499]
          %579 = vst [vmem:[%s507 + $0x8c] sm:%s499] %v578
          %v580 = vld [vmem:[%s506 + $0x88] sm:%s499]
          %581 = vst [vmem:[%s507 + $0x90] sm:%s499] %v580
          %v582 = vld [vmem:[%s506 + $0x98] sm:%s499]
          %583 = vst [vmem:[%s507 + $0x94] sm:%s499] %v582
          %v584 = vld [vmem:[%s506 + $0x8c] sm:%s499]
          %585 = vst [vmem:[%s507 + $0x98] sm:%s499] %v584
          %v586 = vld [vmem:[%s506 + $0x9c] sm:%s499]
          %587 = vst [vmem:[%s507 + $0x9c] sm:%s499] %v586
          %v588 = vld [vmem:[%s506 + $0xa0] sm:%s499]
          %589 = vst [vmem:[%s507 + $0xa0] sm:%s499] %v588
          %v590 = vld [vmem:[%s506 + $0xb0] sm:%s499]
          %591 = vst [vmem:[%s507 + $0xa4] sm:%s499] %v590
          %v592 = vld [vmem:[%s506 + $0xa4] sm:%s499]
          %593 = vst [vmem:[%s507 + $0xa8] sm:%s499] %v592
          %v594 = vld [vmem:[%s506 + $0xb4] sm:%s499]
          %595 = vst [vmem:[%s507 + $0xac] sm:%s499] %v594
          %v596 = vld [vmem:[%s506 + $0xa8] sm:%s499]
          %597 = vst [vmem:[%s507 + $0xb0] sm:%s499] %v596
          %v598 = vld [vmem:[%s506 + $0xb8] sm:%s499]
          %599 = vst [vmem:[%s507 + $0xb4] sm:%s499] %v598
          %v600 = vld [vmem:[%s506 + $0xac] sm:%s499]
          %601 = vst [vmem:[%s507 + $0xb8] sm:%s499] %v600
          %v602 = vld [vmem:[%s506 + $0xbc] sm:%s499]
          %603 = vst [vmem:[%s507 + $0xbc] sm:%s499] %v602
          %v604 = vld [vmem:[%s506 + $0xc0] sm:%s499]
          %605 = vst [vmem:[%s507 + $0xc0] sm:%s499] %v604
          %v606 = vld [vmem:[%s506 + $0xd0] sm:%s499]
          %607 = vst [vmem:[%s507 + $0xc4] sm:%s499] %v606
          %v608 = vld [vmem:[%s506 + $0xc4] sm:%s499]
          %609 = vst [vmem:[%s507 + $0xc8] sm:%s499] %v608
          %v610 = vld [vmem:[%s506 + $0xd4] sm:%s499]
          %611 = vst [vmem:[%s507 + $0xcc] sm:%s499] %v610
          %v612 = vld [vmem:[%s506 + $0xc8] sm:%s499]
          %613 = vst [vmem:[%s507 + $0xd0] sm:%s499] %v612
          %v614 = vld [vmem:[%s506 + $0xd8] sm:%s499]
          %615 = vst [vmem:[%s507 + $0xd4] sm:%s499] %v614
          %v616 = vld [vmem:[%s506 + $0xcc] sm:%s499]
          %617 = vst [vmem:[%s507 + $0xd8] sm:%s499] %v616
          %v618 = vld [vmem:[%s506 + $0xdc] sm:%s499]
          %619 = vst [vmem:[%s507 + $0xdc] sm:%s499] %v618
          %v620 = vld [vmem:[%s506 + $0xe0] sm:%s499]
          %621 = vst [vmem:[%s507 + $0xe0] sm:%s499] %v620
          %v622 = vld [vmem:[%s506 + $0xf0] sm:%s499]
          %623 = vst [vmem:[%s507 + $0xe4] sm:%s499] %v622
          %v624 = vld [vmem:[%s506 + $0xe4] sm:%s499]
          %625 = vst [vmem:[%s507 + $0xe8] sm:%s499] %v624
          %v626 = vld [vmem:[%s506 + $0xf4] sm:%s499]
          %627 = vst [vmem:[%s507 + $0xec] sm:%s499] %v626
          %v628 = vld [vmem:[%s506 + $0xe8] sm:%s499]
          %629 = vst [vmem:[%s507 + $0xf0] sm:%s499] %v628
          %v630 = vld [vmem:[%s506 + $0xf8] sm:%s499]
          %631 = vst [vmem:[%s507 + $0xf4] sm:%s499] %v630
          %v632 = vld [vmem:[%s506 + $0xec] sm:%s499]
          %633 = vst [vmem:[%s507 + $0xf8] sm:%s499] %v632
          %v634 = vld [vmem:[%s506 + $0xfc] sm:%s499]
          %635 = vst [vmem:[%s507 + $0xfc] sm:%s499] %v634
        $region93: #{lstm_decoder_forward.3} parent=80 // loop_footer
          %s505 = sadd.s32 1, %s501
        $region94: #{lstm_decoder_forward.3} parent=80 // loop_footer_branch
          %500 = sbr.rel target = $region90
        $region95: #{lstm_decoder_forward.3} parent=80 // loop_exit
          _
      $region81: #{lstm_decoder_forward.3} parent=65 // pred_fallthru
        _
    $region66: #{lstm_decoder_forward.3} parent=24 // pred_fallthru
      _
    // Predicated region
    $region67: #{lstm_decoder_forward.3} parent=24 // pred_check
      %p341 = pneg %p337
    $region68: #{lstm_decoder_forward.3} parent=24 // pred_check_branch
      %343 = sbr.rel (%p341) target = $region70
    $region69: #{lstm_decoder_forward.3} parent=24 // pred_region
      %s344 = sshllo.u32 0, 4
      loop: start=0, step=1, limit=1
      $region71: #{lstm_decoder_forward.3} parent=69 // loop_pre_header
        _
      $region72: #{lstm_decoder_forward.3} parent=69 // loop_header
        %s346 = sphi 0, %s350
        %p347 = scmp.ge.s32.totalorder %s346, 1
        %s351 = sphi %s6, %s6
        %s352 = sphi [#allocation3], [#allocation3]
      $region73: #{lstm_decoder_forward.3} parent=69 // loop_header_branch
        %349 = sbr.rel (%p347) target = $region77
      $region74: #{lstm_decoder_forward.3} parent=69 // loop_body
        %v353 = vld [vmem:[%s351] sm:%s344]
        %354 = vst [vmem:[%s352] sm:%s344] %v353
        %v355 = vld [vmem:[%s351 + $0x10] sm:%s344]
        %356 = vst [vmem:[%s352 + $0x4] sm:%s344] %v355
        %v357 = vld [vmem:[%s351 + $0x4] sm:%s344]
        %358 = vst [vmem:[%s352 + $0x8] sm:%s344] %v357
        %v359 = vld [vmem:[%s351 + $0x14] sm:%s344]
        %360 = vst [vmem:[%s352 + $0xc] sm:%s344] %v359
        %v361 = vld [vmem:[%s351 + $0x8] sm:%s344]
        %362 = vst [vmem:[%s352 + $0x10] sm:%s344] %v361
        %v363 = vld [vmem:[%s351 + $0x18] sm:%s344]
        %364 = vst [vmem:[%s352 + $0x14] sm:%s344] %v363
        %v365 = vld [vmem:[%s351 + $0xc] sm:%s344]
        %366 = vst [vmem:[%s352 + $0x18] sm:%s344] %v365
        %v367 = vld [vmem:[%s351 + $0x1c] sm:%s344]
        %368 = vst [vmem:[%s352 + $0x1c] sm:%s344] %v367
        %v369 = vld [vmem:[%s351 + $0x20] sm:%s344]
        %370 = vst [vmem:[%s352 + $0x20] sm:%s344] %v369
        %v371 = vld [vmem:[%s351 + $0x30] sm:%s344]
        %372 = vst [vmem:[%s352 + $0x24] sm:%s344] %v371
        %v373 = vld [vmem:[%s351 + $0x24] sm:%s344]
        %374 = vst [vmem:[%s352 + $0x28] sm:%s344] %v373
        %v375 = vld [vmem:[%s351 + $0x34] sm:%s344]
        %376 = vst [vmem:[%s352 + $0x2c] sm:%s344] %v375
        %v377 = vld [vmem:[%s351 + $0x28] sm:%s344]
        %378 = vst [vmem:[%s352 + $0x30] sm:%s344] %v377
        %v379 = vld [vmem:[%s351 + $0x38] sm:%s344]
        %380 = vst [vmem:[%s352 + $0x34] sm:%s344] %v379
        %v381 = vld [vmem:[%s351 + $0x2c] sm:%s344]
        %382 = vst [vmem:[%s352 + $0x38] sm:%s344] %v381
        %v383 = vld [vmem:[%s351 + $0x3c] sm:%s344]
        %384 = vst [vmem:[%s352 + $0x3c] sm:%s344] %v383
        %v385 = vld [vmem:[%s351 + $0x40] sm:%s344]
        %386 = vst [vmem:[%s352 + $0x40] sm:%s344] %v385
        %v387 = vld [vmem:[%s351 + $0x50] sm:%s344]
        %388 = vst [vmem:[%s352 + $0x44] sm:%s344] %v387
        %v389 = vld [vmem:[%s351 + $0x44] sm:%s344]
        %390 = vst [vmem:[%s352 + $0x48] sm:%s344] %v389
        %v391 = vld [vmem:[%s351 + $0x54] sm:%s344]
        %392 = vst [vmem:[%s352 + $0x4c] sm:%s344] %v391
        %v393 = vld [vmem:[%s351 + $0x48] sm:%s344]
        %394 = vst [vmem:[%s352 + $0x50] sm:%s344] %v393
        %v395 = vld [vmem:[%s351 + $0x58] sm:%s344]
        %396 = vst [vmem:[%s352 + $0x54] sm:%s344] %v395
        %v397 = vld [vmem:[%s351 + $0x4c] sm:%s344]
        %398 = vst [vmem:[%s352 + $0x58] sm:%s344] %v397
        %v399 = vld [vmem:[%s351 + $0x5c] sm:%s344]
        %400 = vst [vmem:[%s352 + $0x5c] sm:%s344] %v399
        %v401 = vld [vmem:[%s351 + $0x60] sm:%s344]
        %402 = vst [vmem:[%s352 + $0x60] sm:%s344] %v401
        %v403 = vld [vmem:[%s351 + $0x70] sm:%s344]
        %404 = vst [vmem:[%s352 + $0x64] sm:%s344] %v403
        %v405 = vld [vmem:[%s351 + $0x64] sm:%s344]
        %406 = vst [vmem:[%s352 + $0x68] sm:%s344] %v405
        %v407 = vld [vmem:[%s351 + $0x74] sm:%s344]
        %408 = vst [vmem:[%s352 + $0x6c] sm:%s344] %v407
        %v409 = vld [vmem:[%s351 + $0x68] sm:%s344]
        %410 = vst [vmem:[%s352 + $0x70] sm:%s344] %v409
        %v411 = vld [vmem:[%s351 + $0x78] sm:%s344]
        %412 = vst [vmem:[%s352 + $0x74] sm:%s344] %v411
        %v413 = vld [vmem:[%s351 + $0x6c] sm:%s344]
        %414 = vst [vmem:[%s352 + $0x78] sm:%s344] %v413
        %v415 = vld [vmem:[%s351 + $0x7c] sm:%s344]
        %416 = vst [vmem:[%s352 + $0x7c] sm:%s344] %v415
        %v417 = vld [vmem:[%s351 + $0x80] sm:%s344]
        %418 = vst [vmem:[%s352 + $0x80] sm:%s344] %v417
        %v419 = vld [vmem:[%s351 + $0x90] sm:%s344]
        %420 = vst [vmem:[%s352 + $0x84] sm:%s344] %v419
        %v421 = vld [vmem:[%s351 + $0x84] sm:%s344]
        %422 = vst [vmem:[%s352 + $0x88] sm:%s344] %v421
        %v423 = vld [vmem:[%s351 + $0x94] sm:%s344]
        %424 = vst [vmem:[%s352 + $0x8c] sm:%s344] %v423
        %v425 = vld [vmem:[%s351 + $0x88] sm:%s344]
        %426 = vst [vmem:[%s352 + $0x90] sm:%s344] %v425
        %v427 = vld [vmem:[%s351 + $0x98] sm:%s344]
        %428 = vst [vmem:[%s352 + $0x94] sm:%s344] %v427
        %v429 = vld [vmem:[%s351 + $0x8c] sm:%s344]
        %430 = vst [vmem:[%s352 + $0x98] sm:%s344] %v429
        %v431 = vld [vmem:[%s351 + $0x9c] sm:%s344]
        %432 = vst [vmem:[%s352 + $0x9c] sm:%s344] %v431
        %v433 = vld [vmem:[%s351 + $0xa0] sm:%s344]
        %434 = vst [vmem:[%s352 + $0xa0] sm:%s344] %v433
        %v435 = vld [vmem:[%s351 + $0xb0] sm:%s344]
        %436 = vst [vmem:[%s352 + $0xa4] sm:%s344] %v435
        %v437 = vld [vmem:[%s351 + $0xa4] sm:%s344]
        %438 = vst [vmem:[%s352 + $0xa8] sm:%s344] %v437
        %v439 = vld [vmem:[%s351 + $0xb4] sm:%s344]
        %440 = vst [vmem:[%s352 + $0xac] sm:%s344] %v439
        %v441 = vld [vmem:[%s351 + $0xa8] sm:%s344]
        %442 = vst [vmem:[%s352 + $0xb0] sm:%s344] %v441
        %v443 = vld [vmem:[%s351 + $0xb8] sm:%s344]
        %444 = vst [vmem:[%s352 + $0xb4] sm:%s344] %v443
        %v445 = vld [vmem:[%s351 + $0xac] sm:%s344]
        %446 = vst [vmem:[%s352 + $0xb8] sm:%s344] %v445
        %v447 = vld [vmem:[%s351 + $0xbc] sm:%s344]
        %448 = vst [vmem:[%s352 + $0xbc] sm:%s344] %v447
        %v449 = vld [vmem:[%s351 + $0xc0] sm:%s344]
        %450 = vst [vmem:[%s352 + $0xc0] sm:%s344] %v449
        %v451 = vld [vmem:[%s351 + $0xd0] sm:%s344]
        %452 = vst [vmem:[%s352 + $0xc4] sm:%s344] %v451
        %v453 = vld [vmem:[%s351 + $0xc4] sm:%s344]
        %454 = vst [vmem:[%s352 + $0xc8] sm:%s344] %v453
        %v455 = vld [vmem:[%s351 + $0xd4] sm:%s344]
        %456 = vst [vmem:[%s352 + $0xcc] sm:%s344] %v455
        %v457 = vld [vmem:[%s351 + $0xc8] sm:%s344]
        %458 = vst [vmem:[%s352 + $0xd0] sm:%s344] %v457
        %v459 = vld [vmem:[%s351 + $0xd8] sm:%s344]
        %460 = vst [vmem:[%s352 + $0xd4] sm:%s344] %v459
        %v461 = vld [vmem:[%s351 + $0xcc] sm:%s344]
        %462 = vst [vmem:[%s352 + $0xd8] sm:%s344] %v461
        %v463 = vld [vmem:[%s351 + $0xdc] sm:%s344]
        %464 = vst [vmem:[%s352 + $0xdc] sm:%s344] %v463
        %v465 = vld [vmem:[%s351 + $0xe0] sm:%s344]
        %466 = vst [vmem:[%s352 + $0xe0] sm:%s344] %v465
        %v467 = vld [vmem:[%s351 + $0xf0] sm:%s344]
        %468 = vst [vmem:[%s352 + $0xe4] sm:%s344] %v467
        %v469 = vld [vmem:[%s351 + $0xe4] sm:%s344]
        %470 = vst [vmem:[%s352 + $0xe8] sm:%s344] %v469
        %v471 = vld [vmem:[%s351 + $0xf4] sm:%s344]
        %472 = vst [vmem:[%s352 + $0xec] sm:%s344] %v471
        %v473 = vld [vmem:[%s351 + $0xe8] sm:%s344]
        %474 = vst [vmem:[%s352 + $0xf0] sm:%s344] %v473
        %v475 = vld [vmem:[%s351 + $0xf8] sm:%s344]
        %476 = vst [vmem:[%s352 + $0xf4] sm:%s344] %v475
        %v477 = vld [vmem:[%s351 + $0xec] sm:%s344]
        %478 = vst [vmem:[%s352 + $0xf8] sm:%s344] %v477
        %v479 = vld [vmem:[%s351 + $0xfc] sm:%s344]
        %480 = vst [vmem:[%s352 + $0xfc] sm:%s344] %v479
      $region75: #{lstm_decoder_forward.3} parent=69 // loop_footer
        %s350 = sadd.s32 1, %s346
      $region76: #{lstm_decoder_forward.3} parent=69 // loop_footer_branch
        %345 = sbr.rel target = $region72
      $region77: #{lstm_decoder_forward.3} parent=69 // loop_exit
        _
    $region70: #{lstm_decoder_forward.3} parent=24 // pred_fallthru
      _
    // Predicated region
    $region96: #{lstm_decoder_forward.3} parent=24 // pred_check
      _
    $region97: #{lstm_decoder_forward.3} parent=24 // pred_check_branch
      %638 = sbr.rel (0) target = $region99
    $region98: #{lstm_decoder_forward.3} parent=24 // pred_region
      %639 = vsyncadd %s335, 4096
    $region99: #{lstm_decoder_forward.3} parent=24 // pred_fallthru
      _
    %s640 = scalar_lea.sflag [#allocation9], 2
    // Predicated region
    $region100: #{lstm_decoder_forward.3} parent=24 // pred_check
      _
    $region101: #{lstm_decoder_forward.3} parent=24 // pred_check_branch
      %642 = sbr.rel target = $region103
    $region102: #{lstm_decoder_forward.3} parent=24 // pred_region
      %643 = sst [smem:[#allocation14]] [#allocation13]
      %644 = sst [smem:[#allocation15]] [#allocation12]
    $region103: #{lstm_decoder_forward.3} parent=24 // pred_fallthru
      _
    %646 = shalt.err (0)
    %s648 = sshll.u32 [#allocation4], 4
    %s649 = int_to_ptr.vmem [resolvable:$true] %s648
    %651 = dma.hbm_to_vmem [thread:$0]  %s7, 1024, %s649, %s640
    %s652 = smul.u32 4, 16
    %s653 = smul.u32 %s652, 4
    %s654 = sshll.u32 %s653, 4
    %655 = dma.done [#allocation9], %s654
    %v656 = vld [vmem:[%s1] sm:$0xff]
    %657 = vst [vmem:[#allocation7] sm:$0xff] %v656
    %v658 = vld [vmem:[%s2] sm:$0xff]
    %659 = vst [vmem:[#allocation8] sm:$0xff] %v658
  $region25: #{lstm_decoder_forward.3} parent=0 // pred_fallthru
    _
  %v660 = vld [vmem:[%s0] sm:$0xff]
  %v661 = vld [vmem:[%s0 + $0x8] sm:$0xff]
  %v662 = vld [vmem:[%s0 + $0x10] sm:$0xff]
  %v663 = vld [vmem:[%s0 + $0x18] sm:$0xff]
  %v664 = vld [vmem:[%s0 + $0x20] sm:$0xff]
  %v665 = vld [vmem:[%s0 + $0x28] sm:$0xff]
  %v666 = vld [vmem:[%s0 + $0x30] sm:$0xff]
  %v667 = vld [vmem:[%s0 + $0x38] sm:$0xff]
  %v668 = vpack.c.bf16 %v661, %v660
  %v669 = vpack.c.bf16 %v663, %v662
  %v670 = vpack.c.bf16 %v665, %v664
  %v671 = vpack.c.bf16 %v667, %v666
  %v672 = vld [vmem:[#allocation2] sm:$0xff]
  %v673 = vld [vmem:[#allocation2 + $0x8] sm:$0xff]
  %v674 = vld [vmem:[#allocation2 + $0x10] sm:$0xff]
  %v675 = vld [vmem:[#allocation2 + $0x18] sm:$0xff]
  %v676 = vld [vmem:[#allocation2 + $0x20] sm:$0xff]
  %v677 = vld [vmem:[#allocation2 + $0x28] sm:$0xff]
  %v678 = vld [vmem:[#allocation2 + $0x30] sm:$0xff]
  %v679 = vld [vmem:[#allocation2 + $0x38] sm:$0xff]
  %v680 = vld [vmem:[#allocation2 + $0x40] sm:$0xff]
  %v681 = vld [vmem:[#allocation2 + $0x48] sm:$0xff]
  %v682 = vld [vmem:[#allocation2 + $0x50] sm:$0xff]
  %v683 = vld [vmem:[#allocation2 + $0x58] sm:$0xff]
  %v684 = vld [vmem:[#allocation2 + $0x60] sm:$0xff]
  %v685 = vld [vmem:[#allocation2 + $0x68] sm:$0xff]
  %v686 = vld [vmem:[#allocation2 + $0x70] sm:$0xff]
  %v687 = vld [vmem:[#allocation2 + $0x78] sm:$0xff]
  %v688 = vld [vmem:[#allocation2 + $0x80] sm:$0xff]
  %v689 = vld [vmem:[#allocation2 + $0x88] sm:$0xff]
  %v690 = vld [vmem:[#allocation2 + $0x90] sm:$0xff]
  %v691 = vld [vmem:[#allocation2 + $0x98] sm:$0xff]
  %v692 = vld [vmem:[#allocation2 + $0xa0] sm:$0xff]
  %v693 = vld [vmem:[#allocation2 + $0xa8] sm:$0xff]
  %v694 = vld [vmem:[#allocation2 + $0xb0] sm:$0xff]
  %v695 = vld [vmem:[#allocation2 + $0xb8] sm:$0xff]
  %v696 = vld [vmem:[#allocation2 + $0xc0] sm:$0xff]
  %v697 = vld [vmem:[#allocation2 + $0xc8] sm:$0xff]
  %v698 = vld [vmem:[#allocation2 + $0xd0] sm:$0xff]
  %v699 = vld [vmem:[#allocation2 + $0xd8] sm:$0xff]
  %v700 = vld [vmem:[#allocation2 + $0xe0] sm:$0xff]
  %v701 = vld [vmem:[#allocation2 + $0xe8] sm:$0xff]
  %v702 = vld [vmem:[#allocation2 + $0xf0] sm:$0xff]
  %v703 = vld [vmem:[#allocation2 + $0xf8] sm:$0xff]
  %v704 = vld [vmem:[%s3] sm:$0xf]
  %v706 = vlaneseq
  %v707 = vshrl.u32 %v706, 7
  %v708 = vsub.s32 0, %v707
  %v709 = vrot.slane %v704, %v708
  %v710 = vlaneseq
  %v711 = vshrl.u32 %v710, 7
  %v712 = vsub.s32 1, %v711
  %v713 = vrot.slane %v704, %v712
  %v714 = vlaneseq
  %v715 = vshrl.u32 %v714, 7
  %v716 = vsub.s32 2, %v715
  %v717 = vrot.slane %v704, %v716
  %v718 = vlaneseq
  %v719 = vshrl.u32 %v718, 7
  %v720 = vsub.s32 3, %v719
  %v721 = vrot.slane %v704, %v720
  %726 = vmatprep.subr.bf16.mxu0 %v673
  %727 = vmatpush1.bf16.msra.mxu0 %v672
  %728 = vmatprep.subr.bf16.mxu0 %v677
  %729 = vmatpush1.bf16.msra.mxu0 %v676
  %730 = vmatprep.subr.bf16.mxu0 %v681
  %731 = vmatpush1.bf16.msra.mxu0 %v680
  %732 = vmatprep.subr.bf16.mxu0 %v685
  %733 = vmatpush1.bf16.msra.mxu0 %v684
  %734 = vmatprep.subr.bf16.mxu0 %v689
  %735 = vmatpush1.bf16.msra.mxu0 %v688
  %736 = vmatprep.subr.bf16.mxu0 %v693
  %737 = vmatpush1.bf16.msra.mxu0 %v692
  %738 = vmatprep.subr.bf16.mxu0 %v697
  %739 = vmatpush1.bf16.msra.mxu0 %v696
  %740 = vmatprep.subr.bf16.mxu0 %v701
  %741 = vmatpush1.bf16.msra.mxu0 %v700
  %742 = vmatprep.subr.bf16.mxu0 0
  %743 = vmatpush1.bf16.msra.mxu0 0
  %744 = vmatprep.subr.bf16.mxu0 0
  %745 = vmatpush1.bf16.msra.mxu0 0
  %746 = vmatprep.subr.bf16.mxu0 0
  %747 = vmatpush1.bf16.msra.mxu0 0
  %748 = vmatprep.subr.bf16.mxu0 0
  %749 = vmatpush1.bf16.msra.mxu0 0
  %750 = vmatprep.subr.bf16.mxu0 0
  %751 = vmatpush1.bf16.msra.mxu0 0
  %752 = vmatprep.subr.bf16.mxu0 0
  %753 = vmatpush1.bf16.msra.mxu0 0
  %754 = vmatprep.subr.bf16.mxu0 0
  %755 = vmatpush1.bf16.msra.mxu0 0
  %756 = vmatprep.subr.bf16.mxu0 0
  %757 = vmatpush1.bf16.msra.mxu0 0
  %758 = vmatprep.mubr.bf16.mxu0 0
  %759 = vmatmul.mubr.bf16.gmra.mrb[0].mxu0 %v668
  %v760 = vpop.f32.mrb[0].mxu0
  %v761 = vadd.f32 %v709, %v760
  %v762 = vpop.f32.mrb[0].mxu0
  %v763 = vadd.f32 %v713, %v762
  %v764 = vpop.f32.mrb[0].mxu0
  %v765 = vadd.f32 %v709, %v764
  %v766 = vpop.f32.mrb[0].mxu0
  %v767 = vadd.f32 %v713, %v766
  %768 = vmatprep.mubr.bf16.mxu0 0
  %769 = vmatmul.mubr.bf16.gmra.mrb[0].mxu0 %v669
  %v770 = vpop.f32.mrb[0].mxu0
  %v771 = vadd.f32 %v709, %v770
  %v772 = vpop.f32.mrb[0].mxu0
  %v773 = vadd.f32 %v713, %v772
  %v774 = vpop.f32.mrb[0].mxu0
  %v775 = vadd.f32 %v709, %v774
  %v776 = vpop.f32.mrb[0].mxu0
  %v777 = vadd.f32 %v713, %v776
  %778 = vmatprep.mubr.bf16.mxu0 0
  %779 = vmatmul.mubr.bf16.gmra.mrb[0].mxu0 %v670
  %v780 = vpop.f32.mrb[0].mxu0
  %v781 = vadd.f32 %v709, %v780
  %v782 = vpop.f32.mrb[0].mxu0
  %v783 = vadd.f32 %v713, %v782
  %v784 = vpop.f32.mrb[0].mxu0
  %v785 = vadd.f32 %v709, %v784
  %v786 = vpop.f32.mrb[0].mxu0
  %v787 = vadd.f32 %v713, %v786
  %788 = vmatprep.mubr.bf16.mxu0 0
  %789 = vmatmul.mubr.bf16.gmra.mrb[0].mxu0 %v671
  %v790 = vpop.f32.mrb[0].mxu0
  %v791 = vadd.f32 %v709, %v790
  %v792 = vpop.f32.mrb[0].mxu0
  %v793 = vadd.f32 %v713, %v792
  %v794 = vpop.f32.mrb[0].mxu0
  %v795 = vadd.f32 %v709, %v794
  %v796 = vpop.f32.mrb[0].mxu0
  %v797 = vadd.f32 %v713, %v796
  %798 = vdwg.mxu0
  %799 = vmatprep.subr.bf16.mxu0 %v675
  %800 = vmatpush1.bf16.msra.mxu0 %v674
  %801 = vmatprep.subr.bf16.mxu0 %v679
  %802 = vmatpush1.bf16.msra.mxu0 %v678
  %803 = vmatprep.subr.bf16.mxu0 %v683
  %804 = vmatpush1.bf16.msra.mxu0 %v682
  %805 = vmatprep.subr.bf16.mxu0 %v687
  %806 = vmatpush1.bf16.msra.mxu0 %v686
  %807 = vmatprep.subr.bf16.mxu0 %v691
  %808 = vmatpush1.bf16.msra.mxu0 %v690
  %809 = vmatprep.subr.bf16.mxu0 %v695
  %810 = vmatpush1.bf16.msra.mxu0 %v694
  %811 = vmatprep.subr.bf16.mxu0 %v699
  %812 = vmatpush1.bf16.msra.mxu0 %v698
  %813 = vmatprep.subr.bf16.mxu0 %v703
  %814 = vmatpush1.bf16.msra.mxu0 %v702
  %815 = vmatprep.subr.bf16.mxu0 0
  %816 = vmatpush1.bf16.msra.mxu0 0
  %817 = vmatprep.subr.bf16.mxu0 0
  %818 = vmatpush1.bf16.msra.mxu0 0
  %819 = vmatprep.subr.bf16.mxu0 0
  %820 = vmatpush1.bf16.msra.mxu0 0
  %821 = vmatprep.subr.bf16.mxu0 0
  %822 = vmatpush1.bf16.msra.mxu0 0
  %823 = vmatprep.subr.bf16.mxu0 0
  %824 = vmatpush1.bf16.msra.mxu0 0
  %825 = vmatprep.subr.bf16.mxu0 0
  %826 = vmatpush1.bf16.msra.mxu0 0
  %827 = vmatprep.subr.bf16.mxu0 0
  %828 = vmatpush1.bf16.msra.mxu0 0
  %829 = vmatprep.subr.bf16.mxu0 0
  %830 = vmatpush1.bf16.msra.mxu0 0
  %831 = vmatprep.mubr.bf16.mxu0 0
  %832 = vmatmul.mubr.bf16.gmra.mrb[0].mxu0 %v668
  %v833 = vpop.f32.mrb[0].mxu0
  %v834 = vadd.f32 %v717, %v833
  %v835 = vpop.f32.mrb[0].mxu0
  %v836 = vadd.f32 %v721, %v835
  %v837 = vpop.f32.mrb[0].mxu0
  %v838 = vadd.f32 %v717, %v837
  %v839 = vpop.f32.mrb[0].mxu0
  %v840 = vadd.f32 %v721, %v839
  %841 = vmatprep.mubr.bf16.mxu0 0
  %842 = vmatmul.mubr.bf16.gmra.mrb[0].mxu0 %v669
  %v843 = vpop.f32.mrb[0].mxu0
  %v844 = vadd.f32 %v717, %v843
  %v845 = vpop.f32.mrb[0].mxu0
  %v846 = vadd.f32 %v721, %v845
  %v847 = vpop.f32.mrb[0].mxu0
  %v848 = vadd.f32 %v717, %v847
  %v849 = vpop.f32.mrb[0].mxu0
  %v850 = vadd.f32 %v721, %v849
  %851 = vmatprep.mubr.bf16.mxu0 0
  %852 = vmatmul.mubr.bf16.gmra.mrb[0].mxu0 %v670
  %v853 = vpop.f32.mrb[0].mxu0
  %v854 = vadd.f32 %v717, %v853
  %v855 = vpop.f32.mrb[0].mxu0
  %v856 = vadd.f32 %v721, %v855
  %v857 = vpop.f32.mrb[0].mxu0
  %v858 = vadd.f32 %v717, %v857
  %v859 = vpop.f32.mrb[0].mxu0
  %v860 = vadd.f32 %v721, %v859
  %861 = vmatprep.mubr.bf16.mxu0 0
  %862 = vmatmul.mubr.bf16.gmra.mrb[0].mxu0 %v671
  %v863 = vpop.f32.mrb[0].mxu0
  %v864 = vadd.f32 %v717, %v863
  %v865 = vpop.f32.mrb[0].mxu0
  %v866 = vadd.f32 %v721, %v865
  %v867 = vpop.f32.mrb[0].mxu0
  %v868 = vadd.f32 %v717, %v867
  %v869 = vpop.f32.mrb[0].mxu0
  %v870 = vadd.f32 %v721, %v869
  %871 = vdwg.mxu0
  %872 = vst [vmem:[#allocation5] sm:$0xff] %v761
  %873 = vst [vmem:[#allocation5 + $0x8] sm:$0xff] %v763
  %874 = vst [vmem:[#allocation5 + $0x10] sm:$0xff] %v834
  %875 = vst [vmem:[#allocation5 + $0x18] sm:$0xff] %v836
  %876 = vst [vmem:[#allocation5 + $0x20] sm:$0xff] %v765
  %877 = vst [vmem:[#allocation5 + $0x28] sm:$0xff] %v767
  %878 = vst [vmem:[#allocation5 + $0x30] sm:$0xff] %v838
  %879 = vst [vmem:[#allocation5 + $0x38] sm:$0xff] %v840
  %880 = vst [vmem:[#allocation5 + $0x40] sm:$0xff] %v771
  %881 = vst [vmem:[#allocation5 + $0x48] sm:$0xff] %v773
  %882 = vst [vmem:[#allocation5 + $0x50] sm:$0xff] %v844
  %883 = vst [vmem:[#allocation5 + $0x58] sm:$0xff] %v846
  %884 = vst [vmem:[#allocation5 + $0x60] sm:$0xff] %v775
  %885 = vst [vmem:[#allocation5 + $0x68] sm:$0xff] %v777
  %886 = vst [vmem:[#allocation5 + $0x70] sm:$0xff] %v848
  %887 = vst [vmem:[#allocation5 + $0x78] sm:$0xff] %v850
  %888 = vst [vmem:[#allocation5 + $0x80] sm:$0xff] %v781
  %889 = vst [vmem:[#allocation5 + $0x88] sm:$0xff] %v783
  %890 = vst [vmem:[#allocation5 + $0x90] sm:$0xff] %v854
  %891 = vst [vmem:[#allocation5 + $0x98] sm:$0xff] %v856
  %892 = vst [vmem:[#allocation5 + $0xa0] sm:$0xff] %v785
  %893 = vst [vmem:[#allocation5 + $0xa8] sm:$0xff] %v787
  %894 = vst [vmem:[#allocation5 + $0xb0] sm:$0xff] %v858
  %895 = vst [vmem:[#allocation5 + $0xb8] sm:$0xff] %v860
  %896 = vst [vmem:[#allocation5 + $0xc0] sm:$0xff] %v791
  %897 = vst [vmem:[#allocation5 + $0xc8] sm:$0xff] %v793
  %898 = vst [vmem:[#allocation5 + $0xd0] sm:$0xff] %v864
  %899 = vst [vmem:[#allocation5 + $0xd8] sm:$0xff] %v866
  %900 = vst [vmem:[#allocation5 + $0xe0] sm:$0xff] %v795
  %901 = vst [vmem:[#allocation5 + $0xe8] sm:$0xff] %v797
  %902 = vst [vmem:[#allocation5 + $0xf0] sm:$0xff] %v868
  %903 = vst [vmem:[#allocation5 + $0xf8] sm:$0xff] %v870
  // Predicated region
  $region104: #{lstm_decoder_forward.3} parent=0 // pred_check
    %p904 = pneg %p27
  $region105: #{lstm_decoder_forward.3} parent=0 // pred_check_branch
    %906 = sbr.rel (%p904) target = $region107
  $region106: #{lstm_decoder_forward.3} parent=0 // pred_region
    %s907 = scalar_lea.sflag [#allocation9], 1
    %s908 = smul.u32 4, 16
    %s909 = smul.u32 %s908, 4
    %s910 = sshll.u32 %s909, 4
    %911 = dma.done %s907, %s910
  $region107: #{lstm_decoder_forward.3} parent=0 // pred_fallthru
    _
  %v912 = vld [vmem:[#allocation7] sm:$0xff]
  %v913 = vld [vmem:[#allocation8] sm:$0xff]
  %s914 = smul.u32 0, 4
  %s915 = smul.addr %s914, 8
  %s916 = scalar_lea.vmem [#allocation5], %s915
  %v917 = vld [vmem:[%s916] sm:$0xff]
  %v918 = vld [vmem:[%s916 + $0x8] sm:$0xff]
  %v919 = vld [vmem:[%s916 + $0x10] sm:$0xff]
  %v920 = vld [vmem:[%s916 + $0x18] sm:$0xff]
  %v921 = vpack.c.bf16 %v912, %v912
  %v922 = vld [vmem:[#allocation3] sm:$0xff]
  %v923 = vld [vmem:[#allocation3 + $0x8] sm:$0xff]
  %v924 = vld [vmem:[#allocation3 + $0x10] sm:$0xff]
  %v925 = vld [vmem:[#allocation3 + $0x18] sm:$0xff]
  %v926 = vld [vmem:[#allocation3 + $0x20] sm:$0xff]
  %v927 = vld [vmem:[#allocation3 + $0x28] sm:$0xff]
  %v928 = vld [vmem:[#allocation3 + $0x30] sm:$0xff]
  %v929 = vld [vmem:[#allocation3 + $0x38] sm:$0xff]
  %v930 = vld [vmem:[#allocation3 + $0x40] sm:$0xff]
  %v931 = vld [vmem:[#allocation3 + $0x48] sm:$0xff]
  %v932 = vld [vmem:[#allocation3 + $0x50] sm:$0xff]
  %v933 = vld [vmem:[#allocation3 + $0x58] sm:$0xff]
  %v934 = vld [vmem:[#allocation3 + $0x60] sm:$0xff]
  %v935 = vld [vmem:[#allocation3 + $0x68] sm:$0xff]
  %v936 = vld [vmem:[#allocation3 + $0x70] sm:$0xff]
  %v937 = vld [vmem:[#allocation3 + $0x78] sm:$0xff]
  %v938 = vld [vmem:[#allocation3 + $0x80] sm:$0xff]
  %v939 = vld [vmem:[#allocation3 + $0x88] sm:$0xff]
  %v940 = vld [vmem:[#allocation3 + $0x90] sm:$0xff]
  %v941 = vld [vmem:[#allocation3 + $0x98] sm:$0xff]
  %v942 = vld [vmem:[#allocation3 + $0xa0] sm:$0xff]
  %v943 = vld [vmem:[#allocation3 + $0xa8] sm:$0xff]
  %v944 = vld [vmem:[#allocation3 + $0xb0] sm:$0xff]
  %v945 = vld [vmem:[#allocation3 + $0xb8] sm:$0xff]
  %v946 = vld [vmem:[#allocation3 + $0xc0] sm:$0xff]
  %v947 = vld [vmem:[#allocation3 + $0xc8] sm:$0xff]
  %v948 = vld [vmem:[#allocation3 + $0xd0] sm:$0xff]
  %v949 = vld [vmem:[#allocation3 + $0xd8] sm:$0xff]
  %v950 = vld [vmem:[#allocation3 + $0xe0] sm:$0xff]
  %v951 = vld [vmem:[#allocation3 + $0xe8] sm:$0xff]
  %v952 = vld [vmem:[#allocation3 + $0xf0] sm:$0xff]
  %v953 = vld [vmem:[#allocation3 + $0xf8] sm:$0xff]
  %954 = vmatprep.subr.bf16.mxu0 %v923
  %955 = vmatpush1.bf16.msra.mxu0 %v922
  %956 = vmatprep.subr.bf16.mxu0 %v927
  %957 = vmatpush1.bf16.msra.mxu0 %v926
  %958 = vmatprep.subr.bf16.mxu0 %v931
  %959 = vmatpush1.bf16.msra.mxu0 %v930
  %960 = vmatprep.subr.bf16.mxu0 %v935
  %961 = vmatpush1.bf16.msra.mxu0 %v934
  %962 = vmatprep.subr.bf16.mxu0 %v939
  %963 = vmatpush1.bf16.msra.mxu0 %v938
  %964 = vmatprep.subr.bf16.mxu0 %v943
  %965 = vmatpush1.bf16.msra.mxu0 %v942
  %966 = vmatprep.subr.bf16.mxu0 %v947
  %967 = vmatpush1.bf16.msra.mxu0 %v946
  %968 = vmatprep.subr.bf16.mxu0 %v951
  %969 = vmatpush1.bf16.msra.mxu0 %v950
  %970 = vmatprep.subr.bf16.mxu0 0
  %971 = vmatpush1.bf16.msra.mxu0 0
  %972 = vmatprep.subr.bf16.mxu0 0
  %973 = vmatpush1.bf16.msra.mxu0 0
  %974 = vmatprep.subr.bf16.mxu0 0
  %975 = vmatpush1.bf16.msra.mxu0 0
  %976 = vmatprep.subr.bf16.mxu0 0
  %977 = vmatpush1.bf16.msra.mxu0 0
  %978 = vmatprep.subr.bf16.mxu0 0
  %979 = vmatpush1.bf16.msra.mxu0 0
  %980 = vmatprep.subr.bf16.mxu0 0
  %981 = vmatpush1.bf16.msra.mxu0 0
  %982 = vmatprep.subr.bf16.mxu0 0
  %983 = vmatpush1.bf16.msra.mxu0 0
  %984 = vmatprep.subr.bf16.mxu0 0
  %985 = vmatpush1.bf16.msra.mxu0 0
  %986 = vmatprep.mubr.bf16.mxu0 0
  %987 = vmatmul.mubr.bf16.gmra.mrb[0].mxu0 %v921
  %v988 = vpop.f32.mrb[0].mxu0
  %v989 = vadd.f32 0.0, %v988
  %v990 = vpop.f32.mrb[0].mxu0
  %v991 = vadd.f32 0.0, %v990
  %v992 = vpop.f32.mrb[0].mxu0
  %v993 = vpop.f32.mrb[0].mxu0
  %994 = vdwg.mxu0
  %995 = vmatprep.subr.bf16.mxu0 %v925
  %996 = vmatpush1.bf16.msra.mxu0 %v924
  %997 = vmatprep.subr.bf16.mxu0 %v929
  %998 = vmatpush1.bf16.msra.mxu0 %v928
  %999 = vmatprep.subr.bf16.mxu0 %v933
  %1000 = vmatpush1.bf16.msra.mxu0 %v932
  %1001 = vmatprep.subr.bf16.mxu0 %v937
  %1002 = vmatpush1.bf16.msra.mxu0 %v936
  %1003 = vmatprep.subr.bf16.mxu0 %v941
  %1004 = vmatpush1.bf16.msra.mxu0 %v940
  %1005 = vmatprep.subr.bf16.mxu0 %v945
  %1006 = vmatpush1.bf16.msra.mxu0 %v944
  %1007 = vmatprep.subr.bf16.mxu0 %v949
  %1008 = vmatpush1.bf16.msra.mxu0 %v948
  %1009 = vmatprep.subr.bf16.mxu0 %v953
  %1010 = vmatpush1.bf16.msra.mxu0 %v952
  %1011 = vmatprep.subr.bf16.mxu0 0
  %1012 = vmatpush1.bf16.msra.mxu0 0
  %1013 = vmatprep.subr.bf16.mxu0 0
  %1014 = vmatpush1.bf16.msra.mxu0 0
  %1015 = vmatprep.subr.bf16.mxu0 0
  %1016 = vmatpush1.bf16.msra.mxu0 0
  %1017 = vmatprep.subr.bf16.mxu0 0
  %1018 = vmatpush1.bf16.msra.mxu0 0
  %1019 = vmatprep.subr.bf16.mxu0 0
  %1020 = vmatpush1.bf16.msra.mxu0 0
  %1021 = vmatprep.subr.bf16.mxu0 0
  %1022 = vmatpush1.bf16.msra.mxu0 0
  %1023 = vmatprep.subr.bf16.mxu0 0
  %1024 = vmatpush1.bf16.msra.mxu0 0
  %1025 = vmatprep.subr.bf16.mxu0 0
  %1026 = vmatpush1.bf16.msra.mxu0 0
  %1027 = vmatprep.mubr.bf16.mxu0 0
  %1028 = vmatmul.mubr.bf16.gmra.mrb[0].mxu0 %v921
  %v1029 = vpop.f32.mrb[0].mxu0
  %v1030 = vadd.f32 0.0, %v1029
  %v1031 = vpop.f32.mrb[0].mxu0
  %v1032 = vadd.f32 0.0, %v1031
  %v1033 = vpop.f32.mrb[0].mxu0
  %v1034 = vpop.f32.mrb[0].mxu0
  %1035 = vdwg.mxu0
  %v1036 = vadd.f32 %v917, %v989
  %v1037 = vadd.f32 %v918, %v991
  %v1038 = vadd.f32 %v919, %v1030
  %v1039 = vadd.f32 %v920, %v1032
  %v1040 = vxor.u32 %v1036, 2147483648
  %v1041 = vmul.f32 %v1040, 1.442695
  %v1042 = vpow.pop %v1041
  %v1043 = vadd.f32 %v1042, 1.0
  %v1044 = vrcp.pop %v1043
  %v1045 = vmul.f32 1.0, %v1044
  %v1046 = vxor.u32 %v1037, 2147483648
  %v1047 = vmul.f32 %v1046, 1.442695
  %v1048 = vpow.pop %v1047
  %v1049 = vadd.f32 %v1048, 1.0
  %v1050 = vrcp.pop %v1049
  %v1051 = vmul.f32 1.0, %v1050
  %v1052 = vtanh.pop %v1038
  %v1053 = vxor.u32 %v1039, 2147483648
  %v1054 = vmul.f32 %v1053, 1.442695
  %v1055 = vpow.pop %v1054
  %v1056 = vadd.f32 %v1055, 1.0
  %v1057 = vrcp.pop %v1056
  %v1058 = vmul.f32 1.0, %v1057
  %v1059 = vmul.f32 %v1051, %v913
  %v1060 = vmul.f32 %v1045, %v1052
  %v1061 = vadd.f32 %v1059, %v1060
  %v1062 = vtanh.pop %v1061
  %v1063 = vmul.f32 %v1058, %v1062
  %1064 = vst [vmem:[#allocation6] sm:$0xff] %v1063
  %s1065 = smul.u32 1, 4
  %s1066 = smul.addr %s1065, 8
  %s1067 = scalar_lea.vmem [#allocation5], %s1066
  %v1068 = vld [vmem:[%s1067] sm:$0xff]
  %v1069 = vld [vmem:[%s1067 + $0x8] sm:$0xff]
  %v1070 = vld [vmem:[%s1067 + $0x10] sm:$0xff]
  %v1071 = vld [vmem:[%s1067 + $0x18] sm:$0xff]
  %v1072 = vpack.c.bf16 %v1063, %v1063
  %v1073 = vld [vmem:[#allocation3] sm:$0xff]
  %v1074 = vld [vmem:[#allocation3 + $0x8] sm:$0xff]
  %v1075 = vld [vmem:[#allocation3 + $0x10] sm:$0xff]
  %v1076 = vld [vmem:[#allocation3 + $0x18] sm:$0xff]
  %v1077 = vld [vmem:[#allocation3 + $0x20] sm:$0xff]
  %v1078 = vld [vmem:[#allocation3 + $0x28] sm:$0xff]
  %v1079 = vld [vmem:[#allocation3 + $0x30] sm:$0xff]
  %v1080 = vld [vmem:[#allocation3 + $0x38] sm:$0xff]
  %v1081 = vld [vmem:[#allocation3 + $0x40] sm:$0xff]
  %v1082 = vld [vmem:[#allocation3 + $0x48] sm:$0xff]
  %v1083 = vld [vmem:[#allocation3 + $0x50] sm:$0xff]
  %v1084 = vld [vmem:[#allocation3 + $0x58] sm:$0xff]
  %v1085 = vld [vmem:[#allocation3 + $0x60] sm:$0xff]
  %v1086 = vld [vmem:[#allocation3 + $0x68] sm:$0xff]
  %v1087 = vld [vmem:[#allocation3 + $0x70] sm:$0xff]
  %v1088 = vld [vmem:[#allocation3 + $0x78] sm:$0xff]
  %v1089 = vld [vmem:[#allocation3 + $0x80] sm:$0xff]
  %v1090 = vld [vmem:[#allocation3 + $0x88] sm:$0xff]
  %v1091 = vld [vmem:[#allocation3 + $0x90] sm:$0xff]
  %v1092 = vld [vmem:[#allocation3 + $0x98] sm:$0xff]
  %v1093 = vld [vmem:[#allocation3 + $0xa0] sm:$0xff]
  %v1094 = vld [vmem:[#allocation3 + $0xa8] sm:$0xff]
  %v1095 = vld [vmem:[#allocation3 + $0xb0] sm:$0xff]
  %v1096 = vld [vmem:[#allocation3 + $0xb8] sm:$0xff]
  %v1097 = vld [vmem:[#allocation3 + $0xc0] sm:$0xff]
  %v1098 = vld [vmem:[#allocation3 + $0xc8] sm:$0xff]
  %v1099 = vld [vmem:[#allocation3 + $0xd0] sm:$0xff]
  %v1100 = vld [vmem:[#allocation3 + $0xd8] sm:$0xff]
  %v1101 = vld [vmem:[#allocation3 + $0xe0] sm:$0xff]
  %v1102 = vld [vmem:[#allocation3 + $0xe8] sm:$0xff]
  %v1103 = vld [vmem:[#allocation3 + $0xf0] sm:$0xff]
  %v1104 = vld [vmem:[#allocation3 + $0xf8] sm:$0xff]
  %1105 = vmatprep.subr.bf16.mxu0 %v1074
  %1106 = vmatpush1.bf16.msra.mxu0 %v1073
  %1107 = vmatprep.subr.bf16.mxu0 %v1078
  %1108 = vmatpush1.bf16.msra.mxu0 %v1077
  %1109 = vmatprep.subr.bf16.mxu0 %v1082
  %1110 = vmatpush1.bf16.msra.mxu0 %v1081
  %1111 = vmatprep.subr.bf16.mxu0 %v1086
  %1112 = vmatpush1.bf16.msra.mxu0 %v1085
  %1113 = vmatprep.subr.bf16.mxu0 %v1090
  %1114 = vmatpush1.bf16.msra.mxu0 %v1089
  %1115 = vmatprep.subr.bf16.mxu0 %v1094
  %1116 = vmatpush1.bf16.msra.mxu0 %v1093
  %1117 = vmatprep.subr.bf16.mxu0 %v1098
  %1118 = vmatpush1.bf16.msra.mxu0 %v1097
  %1119 = vmatprep.subr.bf16.mxu0 %v1102
  %1120 = vmatpush1.bf16.msra.mxu0 %v1101
  %1121 = vmatprep.subr.bf16.mxu0 0
  %1122 = vmatpush1.bf16.msra.mxu0 0
  %1123 = vmatprep.subr.bf16.mxu0 0
  %1124 = vmatpush1.bf16.msra.mxu0 0
  %1125 = vmatprep.subr.bf16.mxu0 0
  %1126 = vmatpush1.bf16.msra.mxu0 0
  %1127 = vmatprep.subr.bf16.mxu0 0
  %1128 = vmatpush1.bf16.msra.mxu0 0
  %1129 = vmatprep.subr.bf16.mxu0 0
  %1130 = vmatpush1.bf16.msra.mxu0 0
  %1131 = vmatprep.subr.bf16.mxu0 0
  %1132 = vmatpush1.bf16.msra.mxu0 0
  %1133 = vmatprep.subr.bf16.mxu0 0
  %1134 = vmatpush1.bf16.msra.mxu0 0
  %1135 = vmatprep.subr.bf16.mxu0 0
  %1136 = vmatpush1.bf16.msra.mxu0 0
  %1137 = vmatprep.mubr.bf16.mxu0 0
  %1138 = vmatmul.mubr.bf16.gmra.mrb[0].mxu0 %v1072
  %v1139 = vpop.f32.mrb[0].mxu0
  %v1140 = vadd.f32 0.0, %v1139
  %v1141 = vpop.f32.mrb[0].mxu0
  %v1142 = vadd.f32 0.0, %v1141
  %v1143 = vpop.f32.mrb[0].mxu0
  %v1144 = vpop.f32.mrb[0].mxu0
  %1145 = vdwg.mxu0
  %1146 = vmatprep.subr.bf16.mxu0 %v1076
  %1147 = vmatpush1.bf16.msra.mxu0 %v1075
  %1148 = vmatprep.subr.bf16.mxu0 %v1080
  %1149 = vmatpush1.bf16.msra.mxu0 %v1079
  %1150 = vmatprep.subr.bf16.mxu0 %v1084
  %1151 = vmatpush1.bf16.msra.mxu0 %v1083
  %1152 = vmatprep.subr.bf16.mxu0 %v1088
  %1153 = vmatpush1.bf16.msra.mxu0 %v1087
  %1154 = vmatprep.subr.bf16.mxu0 %v1092
  %1155 = vmatpush1.bf16.msra.mxu0 %v1091
  %1156 = vmatprep.subr.bf16.mxu0 %v1096
  %1157 = vmatpush1.bf16.msra.mxu0 %v1095
  %1158 = vmatprep.subr.bf16.mxu0 %v1100
  %1159 = vmatpush1.bf16.msra.mxu0 %v1099
  %1160 = vmatprep.subr.bf16.mxu0 %v1104
  %1161 = vmatpush1.bf16.msra.mxu0 %v1103
  %1162 = vmatprep.subr.bf16.mxu0 0
  %1163 = vmatpush1.bf16.msra.mxu0 0
  %1164 = vmatprep.subr.bf16.mxu0 0
  %1165 = vmatpush1.bf16.msra.mxu0 0
  %1166 = vmatprep.subr.bf16.mxu0 0
  %1167 = vmatpush1.bf16.msra.mxu0 0
  %1168 = vmatprep.subr.bf16.mxu0 0
  %1169 = vmatpush1.bf16.msra.mxu0 0
  %1170 = vmatprep.subr.bf16.mxu0 0
  %1171 = vmatpush1.bf16.msra.mxu0 0
  %1172 = vmatprep.subr.bf16.mxu0 0
  %1173 = vmatpush1.bf16.msra.mxu0 0
  %1174 = vmatprep.subr.bf16.mxu0 0
  %1175 = vmatpush1.bf16.msra.mxu0 0
  %1176 = vmatprep.subr.bf16.mxu0 0
  %1177 = vmatpush1.bf16.msra.mxu0 0
  %1178 = vmatprep.mubr.bf16.mxu0 0
  %1179 = vmatmul.mubr.bf16.gmra.mrb[0].mxu0 %v1072
  %v1180 = vpop.f32.mrb[0].mxu0
  %v1181 = vadd.f32 0.0, %v1180
  %v1182 = vpop.f32.mrb[0].mxu0
  %v1183 = vadd.f32 0.0, %v1182
  %v1184 = vpop.f32.mrb[0].mxu0
  %v1185 = vpop.f32.mrb[0].mxu0
  %1186 = vdwg.mxu0
  %v1187 = vadd.f32 %v1068, %v1140
  %v1188 = vadd.f32 %v1069, %v1142
  %v1189 = vadd.f32 %v1070, %v1181
  %v1190 = vadd.f32 %v1071, %v1183
  %v1191 = vxor.u32 %v1187, 2147483648
  %v1192 = vmul.f32 %v1191, 1.442695
  %v1193 = vpow.pop %v1192
  %v1194 = vadd.f32 %v1193, 1.0
  %v1195 = vrcp.pop %v1194
  %v1196 = vmul.f32 1.0, %v1195
  %v1197 = vxor.u32 %v1188, 2147483648
  %v1198 = vmul.f32 %v1197, 1.442695
  %v1199 = vpow.pop %v1198
  %v1200 = vadd.f32 %v1199, 1.0
  %v1201 = vrcp.pop %v1200
  %v1202 = vmul.f32 1.0, %v1201
  %v1203 = vtanh.pop %v1189
  %v1204 = vxor.u32 %v1190, 2147483648
  %v1205 = vmul.f32 %v1204, 1.442695
  %v1206 = vpow.pop %v1205
  %v1207 = vadd.f32 %v1206, 1.0
  %v1208 = vrcp.pop %v1207
  %v1209 = vmul.f32 1.0, %v1208
  %v1210 = vmul.f32 %v1202, %v1061
  %v1211 = vmul.f32 %v1196, %v1203
  %v1212 = vadd.f32 %v1210, %v1211
  %v1213 = vtanh.pop %v1212
  %v1214 = vmul.f32 %v1209, %v1213
  %s1215 = scalar_lea.vmem [#allocation6], 8
  %1216 = vst [vmem:[%s1215] sm:$0xff] %v1214
  %s1217 = smul.u32 2, 4
  %s1218 = smul.addr %s1217, 8
  %s1219 = scalar_lea.vmem [#allocation5], %s1218
  %v1220 = vld [vmem:[%s1219] sm:$0xff]
  %v1221 = vld [vmem:[%s1219 + $0x8] sm:$0xff]
  %v1222 = vld [vmem:[%s1219 + $0x10] sm:$0xff]
  %v1223 = vld [vmem:[%s1219 + $0x18] sm:$0xff]
  %v1224 = vpack.c.bf16 %v1214, %v1214
  %v1225 = vld [vmem:[#allocation3] sm:$0xff]
  %v1226 = vld [vmem:[#allocation3 + $0x8] sm:$0xff]
  %v1227 = vld [vmem:[#allocation3 + $0x10] sm:$0xff]
  %v1228 = vld [vmem:[#allocation3 + $0x18] sm:$0xff]
  %v1229 = vld [vmem:[#allocation3 + $0x20] sm:$0xff]
  %v1230 = vld [vmem:[#allocation3 + $0x28] sm:$0xff]
  %v1231 = vld [vmem:[#allocation3 + $0x30] sm:$0xff]
  %v1232 = vld [vmem:[#allocation3 + $0x38] sm:$0xff]
  %v1233 = vld [vmem:[#allocation3 + $0x40] sm:$0xff]
  %v1234 = vld [vmem:[#allocation3 + $0x48] sm:$0xff]
  %v1235 = vld [vmem:[#allocation3 + $0x50] sm:$0xff]
  %v1236 = vld [vmem:[#allocation3 + $0x58] sm:$0xff]
  %v1237 = vld [vmem:[#allocation3 + $0x60] sm:$0xff]
  %v1238 = vld [vmem:[#allocation3 + $0x68] sm:$0xff]
  %v1239 = vld [vmem:[#allocation3 + $0x70] sm:$0xff]
  %v1240 = vld [vmem:[#allocation3 + $0x78] sm:$0xff]
  %v1241 = vld [vmem:[#allocation3 + $0x80] sm:$0xff]
  %v1242 = vld [vmem:[#allocation3 + $0x88] sm:$0xff]
  %v1243 = vld [vmem:[#allocation3 + $0x90] sm:$0xff]
  %v1244 = vld [vmem:[#allocation3 + $0x98] sm:$0xff]
  %v1245 = vld [vmem:[#allocation3 + $0xa0] sm:$0xff]
  %v1246 = vld [vmem:[#allocation3 + $0xa8] sm:$0xff]
  %v1247 = vld [vmem:[#allocation3 + $0xb0] sm:$0xff]
  %v1248 = vld [vmem:[#allocation3 + $0xb8] sm:$0xff]
  %v1249 = vld [vmem:[#allocation3 + $0xc0] sm:$0xff]
  %v1250 = vld [vmem:[#allocation3 + $0xc8] sm:$0xff]
  %v1251 = vld [vmem:[#allocation3 + $0xd0] sm:$0xff]
  %v1252 = vld [vmem:[#allocation3 + $0xd8] sm:$0xff]
  %v1253 = vld [vmem:[#allocation3 + $0xe0] sm:$0xff]
  %v1254 = vld [vmem:[#allocation3 + $0xe8] sm:$0xff]
  %v1255 = vld [vmem:[#allocation3 + $0xf0] sm:$0xff]
  %v1256 = vld [vmem:[#allocation3 + $0xf8] sm:$0xff]
  %1257 = vmatprep.subr.bf16.mxu0 %v1226
  %1258 = vmatpush1.bf16.msra.mxu0 %v1225
  %1259 = vmatprep.subr.bf16.mxu0 %v1230
  %1260 = vmatpush1.bf16.msra.mxu0 %v1229
  %1261 = vmatprep.subr.bf16.mxu0 %v1234
  %1262 = vmatpush1.bf16.msra.mxu0 %v1233
  %1263 = vmatprep.subr.bf16.mxu0 %v1238
  %1264 = vmatpush1.bf16.msra.mxu0 %v1237
  %1265 = vmatprep.subr.bf16.mxu0 %v1242
  %1266 = vmatpush1.bf16.msra.mxu0 %v1241
  %1267 = vmatprep.subr.bf16.mxu0 %v1246
  %1268 = vmatpush1.bf16.msra.mxu0 %v1245
  %1269 = vmatprep.subr.bf16.mxu0 %v1250
  %1270 = vmatpush1.bf16.msra.mxu0 %v1249
  %1271 = vmatprep.subr.bf16.mxu0 %v1254
  %1272 = vmatpush1.bf16.msra.mxu0 %v1253
  %1273 = vmatprep.subr.bf16.mxu0 0
  %1274 = vmatpush1.bf16.msra.mxu0 0
  %1275 = vmatprep.subr.bf16.mxu0 0
  %1276 = vmatpush1.bf16.msra.mxu0 0
  %1277 = vmatprep.subr.bf16.mxu0 0
  %1278 = vmatpush1.bf16.msra.mxu0 0
  %1279 = vmatprep.subr.bf16.mxu0 0
  %1280 = vmatpush1.bf16.msra.mxu0 0
  %1281 = vmatprep.subr.bf16.mxu0 0
  %1282 = vmatpush1.bf16.msra.mxu0 0
  %1283 = vmatprep.subr.bf16.mxu0 0
  %1284 = vmatpush1.bf16.msra.mxu0 0
  %1285 = vmatprep.subr.bf16.mxu0 0
  %1286 = vmatpush1.bf16.msra.mxu0 0
  %1287 = vmatprep.subr.bf16.mxu0 0
  %1288 = vmatpush1.bf16.msra.mxu0 0
  %1289 = vmatprep.mubr.bf16.mxu0 0
  %1290 = vmatmul.mubr.bf16.gmra.mrb[0].mxu0 %v1224
  %v1291 = vpop.f32.mrb[0].mxu0
  %v1292 = vadd.f32 0.0, %v1291
  %v1293 = vpop.f32.mrb[0].mxu0
  %v1294 = vadd.f32 0.0, %v1293
  %v1295 = vpop.f32.mrb[0].mxu0
  %v1296 = vpop.f32.mrb[0].mxu0
  %1297 = vdwg.mxu0
  %1298 = vmatprep.subr.bf16.mxu0 %v1228
  %1299 = vmatpush1.bf16.msra.mxu0 %v1227
  %1300 = vmatprep.subr.bf16.mxu0 %v1232
  %1301 = vmatpush1.bf16.msra.mxu0 %v1231
  %1302 = vmatprep.subr.bf16.mxu0 %v1236
  %1303 = vmatpush1.bf16.msra.mxu0 %v1235
  %1304 = vmatprep.subr.bf16.mxu0 %v1240
  %1305 = vmatpush1.bf16.msra.mxu0 %v1239
  %1306 = vmatprep.subr.bf16.mxu0 %v1244
  %1307 = vmatpush1.bf16.msra.mxu0 %v1243
  %1308 = vmatprep.subr.bf16.mxu0 %v1248
  %1309 = vmatpush1.bf16.msra.mxu0 %v1247
  %1310 = vmatprep.subr.bf16.mxu0 %v1252
  %1311 = vmatpush1.bf16.msra.mxu0 %v1251
  %1312 = vmatprep.subr.bf16.mxu0 %v1256
  %1313 = vmatpush1.bf16.msra.mxu0 %v1255
  %1314 = vmatprep.subr.bf16.mxu0 0
  %1315 = vmatpush1.bf16.msra.mxu0 0
  %1316 = vmatprep.subr.bf16.mxu0 0
  %1317 = vmatpush1.bf16.msra.mxu0 0
  %1318 = vmatprep.subr.bf16.mxu0 0
  %1319 = vmatpush1.bf16.msra.mxu0 0
  %1320 = vmatprep.subr.bf16.mxu0 0
  %1321 = vmatpush1.bf16.msra.mxu0 0
  %1322 = vmatprep.subr.bf16.mxu0 0
  %1323 = vmatpush1.bf16.msra.mxu0 0
  %1324 = vmatprep.subr.bf16.mxu0 0
  %1325 = vmatpush1.bf16.msra.mxu0 0
  %1326 = vmatprep.subr.bf16.mxu0 0
  %1327 = vmatpush1.bf16.msra.mxu0 0
  %1328 = vmatprep.subr.bf16.mxu0 0
  %1329 = vmatpush1.bf16.msra.mxu0 0
  %1330 = vmatprep.mubr.bf16.mxu0 0
  %1331 = vmatmul.mubr.bf16.gmra.mrb[0].mxu0 %v1224
  %v1332 = vpop.f32.mrb[0].mxu0
  %v1333 = vadd.f32 0.0, %v1332
  %v1334 = vpop.f32.mrb[0].mxu0
  %v1335 = vadd.f32 0.0, %v1334
  %v1336 = vpop.f32.mrb[0].mxu0
  %v1337 = vpop.f32.mrb[0].mxu0
  %1338 = vdwg.mxu0
  %v1339 = vadd.f32 %v1220, %v1292
  %v1340 = vadd.f32 %v1221, %v1294
  %v1341 = vadd.f32 %v1222, %v1333
  %v1342 = vadd.f32 %v1223, %v1335
  %v1343 = vxor.u32 %v1339, 2147483648
  %v1344 = vmul.f32 %v1343, 1.442695
  %v1345 = vpow.pop %v1344
  %v1346 = vadd.f32 %v1345, 1.0
  %v1347 = vrcp.pop %v1346
  %v1348 = vmul.f32 1.0, %v1347
  %v1349 = vxor.u32 %v1340, 2147483648
  %v1350 = vmul.f32 %v1349, 1.442695
  %v1351 = vpow.pop %v1350
  %v1352 = vadd.f32 %v1351, 1.0
  %v1353 = vrcp.pop %v1352
  %v1354 = vmul.f32 1.0, %v1353
  %v1355 = vtanh.pop %v1341
  %v1356 = vxor.u32 %v1342, 2147483648
  %v1357 = vmul.f32 %v1356, 1.442695
  %v1358 = vpow.pop %v1357
  %v1359 = vadd.f32 %v1358, 1.0
  %v1360 = vrcp.pop %v1359
  %v1361 = vmul.f32 1.0, %v1360
  %v1362 = vmul.f32 %v1354, %v1212
  %v1363 = vmul.f32 %v1348, %v1355
  %v1364 = vadd.f32 %v1362, %v1363
  %v1365 = vtanh.pop %v1364
  %v1366 = vmul.f32 %v1361, %v1365
  %s1367 = scalar_lea.vmem [#allocation6], 16
  %1368 = vst [vmem:[%s1367] sm:$0xff] %v1366
  %s1369 = smul.u32 3, 4
  %s1370 = smul.addr %s1369, 8
  %s1371 = scalar_lea.vmem [#allocation5], %s1370
  %v1372 = vld [vmem:[%s1371] sm:$0xff]
  %v1373 = vld [vmem:[%s1371 + $0x8] sm:$0xff]
  %v1374 = vld [vmem:[%s1371 + $0x10] sm:$0xff]
  %v1375 = vld [vmem:[%s1371 + $0x18] sm:$0xff]
  %v1376 = vpack.c.bf16 %v1366, %v1366
  %v1377 = vld [vmem:[#allocation3] sm:$0xff]
  %v1378 = vld [vmem:[#allocation3 + $0x8] sm:$0xff]
  %v1379 = vld [vmem:[#allocation3 + $0x10] sm:$0xff]
  %v1380 = vld [vmem:[#allocation3 + $0x18] sm:$0xff]
  %v1381 = vld [vmem:[#allocation3 + $0x20] sm:$0xff]
  %v1382 = vld [vmem:[#allocation3 + $0x28] sm:$0xff]
  %v1383 = vld [vmem:[#allocation3 + $0x30] sm:$0xff]
  %v1384 = vld [vmem:[#allocation3 + $0x38] sm:$0xff]
  %v1385 = vld [vmem:[#allocation3 + $0x40] sm:$0xff]
  %v1386 = vld [vmem:[#allocation3 + $0x48] sm:$0xff]
  %v1387 = vld [vmem:[#allocation3 + $0x50] sm:$0xff]
  %v1388 = vld [vmem:[#allocation3 + $0x58] sm:$0xff]
  %v1389 = vld [vmem:[#allocation3 + $0x60] sm:$0xff]
  %v1390 = vld [vmem:[#allocation3 + $0x68] sm:$0xff]
  %v1391 = vld [vmem:[#allocation3 + $0x70] sm:$0xff]
  %v1392 = vld [vmem:[#allocation3 + $0x78] sm:$0xff]
  %v1393 = vld [vmem:[#allocation3 + $0x80] sm:$0xff]
  %v1394 = vld [vmem:[#allocation3 + $0x88] sm:$0xff]
  %v1395 = vld [vmem:[#allocation3 + $0x90] sm:$0xff]
  %v1396 = vld [vmem:[#allocation3 + $0x98] sm:$0xff]
  %v1397 = vld [vmem:[#allocation3 + $0xa0] sm:$0xff]
  %v1398 = vld [vmem:[#allocation3 + $0xa8] sm:$0xff]
  %v1399 = vld [vmem:[#allocation3 + $0xb0] sm:$0xff]
  %v1400 = vld [vmem:[#allocation3 + $0xb8] sm:$0xff]
  %v1401 = vld [vmem:[#allocation3 + $0xc0] sm:$0xff]
  %v1402 = vld [vmem:[#allocation3 + $0xc8] sm:$0xff]
  %v1403 = vld [vmem:[#allocation3 + $0xd0] sm:$0xff]
  %v1404 = vld [vmem:[#allocation3 + $0xd8] sm:$0xff]
  %v1405 = vld [vmem:[#allocation3 + $0xe0] sm:$0xff]
  %v1406 = vld [vmem:[#allocation3 + $0xe8] sm:$0xff]
  %v1407 = vld [vmem:[#allocation3 + $0xf0] sm:$0xff]
  %v1408 = vld [vmem:[#allocation3 + $0xf8] sm:$0xff]
  %1409 = vmatprep.subr.bf16.mxu0 %v1378
  %1410 = vmatpush1.bf16.msra.mxu0 %v1377
  %1411 = vmatprep.subr.bf16.mxu0 %v1382
  %1412 = vmatpush1.bf16.msra.mxu0 %v1381
  %1413 = vmatprep.subr.bf16.mxu0 %v1386
  %1414 = vmatpush1.bf16.msra.mxu0 %v1385
  %1415 = vmatprep.subr.bf16.mxu0 %v1390
  %1416 = vmatpush1.bf16.msra.mxu0 %v1389
  %1417 = vmatprep.subr.bf16.mxu0 %v1394
  %1418 = vmatpush1.bf16.msra.mxu0 %v1393
  %1419 = vmatprep.subr.bf16.mxu0 %v1398
  %1420 = vmatpush1.bf16.msra.mxu0 %v1397
  %1421 = vmatprep.subr.bf16.mxu0 %v1402
  %1422 = vmatpush1.bf16.msra.mxu0 %v1401
  %1423 = vmatprep.subr.bf16.mxu0 %v1406
  %1424 = vmatpush1.bf16.msra.mxu0 %v1405
  %1425 = vmatprep.subr.bf16.mxu0 0
  %1426 = vmatpush1.bf16.msra.mxu0 0
  %1427 = vmatprep.subr.bf16.mxu0 0
  %1428 = vmatpush1.bf16.msra.mxu0 0
  %1429 = vmatprep.subr.bf16.mxu0 0
  %1430 = vmatpush1.bf16.msra.mxu0 0
  %1431 = vmatprep.subr.bf16.mxu0 0
  %1432 = vmatpush1.bf16.msra.mxu0 0
  %1433 = vmatprep.subr.bf16.mxu0 0
  %1434 = vmatpush1.bf16.msra.mxu0 0
  %1435 = vmatprep.subr.bf16.mxu0 0
  %1436 = vmatpush1.bf16.msra.mxu0 0
  %1437 = vmatprep.subr.bf16.mxu0 0
  %1438 = vmatpush1.bf16.msra.mxu0 0
  %1439 = vmatprep.subr.bf16.mxu0 0
  %1440 = vmatpush1.bf16.msra.mxu0 0
  %1441 = vmatprep.mubr.bf16.mxu0 0
  %1442 = vmatmul.mubr.bf16.gmra.mrb[0].mxu0 %v1376
  %v1443 = vpop.f32.mrb[0].mxu0
  %v1444 = vadd.f32 0.0, %v1443
  %v1445 = vpop.f32.mrb[0].mxu0
  %v1446 = vadd.f32 0.0, %v1445
  %v1447 = vpop.f32.mrb[0].mxu0
  %v1448 = vpop.f32.mrb[0].mxu0
  %1449 = vdwg.mxu0
  %1450 = vmatprep.subr.bf16.mxu0 %v1380
  %1451 = vmatpush1.bf16.msra.mxu0 %v1379
  %1452 = vmatprep.subr.bf16.mxu0 %v1384
  %1453 = vmatpush1.bf16.msra.mxu0 %v1383
  %1454 = vmatprep.subr.bf16.mxu0 %v1388
  %1455 = vmatpush1.bf16.msra.mxu0 %v1387
  %1456 = vmatprep.subr.bf16.mxu0 %v1392
  %1457 = vmatpush1.bf16.msra.mxu0 %v1391
  %1458 = vmatprep.subr.bf16.mxu0 %v1396
  %1459 = vmatpush1.bf16.msra.mxu0 %v1395
  %1460 = vmatprep.subr.bf16.mxu0 %v1400
  %1461 = vmatpush1.bf16.msra.mxu0 %v1399
  %1462 = vmatprep.subr.bf16.mxu0 %v1404
  %1463 = vmatpush1.bf16.msra.mxu0 %v1403
  %1464 = vmatprep.subr.bf16.mxu0 %v1408
  %1465 = vmatpush1.bf16.msra.mxu0 %v1407
  %1466 = vmatprep.subr.bf16.mxu0 0
  %1467 = vmatpush1.bf16.msra.mxu0 0
  %1468 = vmatprep.subr.bf16.mxu0 0
  %1469 = vmatpush1.bf16.msra.mxu0 0
  %1470 = vmatprep.subr.bf16.mxu0 0
  %1471 = vmatpush1.bf16.msra.mxu0 0
  %1472 = vmatprep.subr.bf16.mxu0 0
  %1473 = vmatpush1.bf16.msra.mxu0 0
  %1474 = vmatprep.subr.bf16.mxu0 0
  %1475 = vmatpush1.bf16.msra.mxu0 0
  %1476 = vmatprep.subr.bf16.mxu0 0
  %1477 = vmatpush1.bf16.msra.mxu0 0
  %1478 = vmatprep.subr.bf16.mxu0 0
  %1479 = vmatpush1.bf16.msra.mxu0 0
  %1480 = vmatprep.subr.bf16.mxu0 0
  %1481 = vmatpush1.bf16.msra.mxu0 0
  %1482 = vmatprep.mubr.bf16.mxu0 0
  %1483 = vmatmul.mubr.bf16.gmra.mrb[0].mxu0 %v1376
  %v1484 = vpop.f32.mrb[0].mxu0
  %v1485 = vadd.f32 0.0, %v1484
  %v1486 = vpop.f32.mrb[0].mxu0
  %v1487 = vadd.f32 0.0, %v1486
  %v1488 = vpop.f32.mrb[0].mxu0
  %v1489 = vpop.f32.mrb[0].mxu0
  %1490 = vdwg.mxu0
  %v1491 = vadd.f32 %v1372, %v1444
  %v1492 = vadd.f32 %v1373, %v1446
  %v1493 = vadd.f32 %v1374, %v1485
  %v1494 = vadd.f32 %v1375, %v1487
  %v1495 = vxor.u32 %v1491, 2147483648
  %v1496 = vmul.f32 %v1495, 1.442695
  %v1497 = vpow.pop %v1496
  %v1498 = vadd.f32 %v1497, 1.0
  %v1499 = vrcp.pop %v1498
  %v1500 = vmul.f32 1.0, %v1499
  %v1501 = vxor.u32 %v1492, 2147483648
  %v1502 = vmul.f32 %v1501, 1.442695
  %v1503 = vpow.pop %v1502
  %v1504 = vadd.f32 %v1503, 1.0
  %v1505 = vrcp.pop %v1504
  %v1506 = vmul.f32 1.0, %v1505
  %v1507 = vtanh.pop %v1493
  %v1508 = vxor.u32 %v1494, 2147483648
  %v1509 = vmul.f32 %v1508, 1.442695
  %v1510 = vpow.pop %v1509
  %v1511 = vadd.f32 %v1510, 1.0
  %v1512 = vrcp.pop %v1511
  %v1513 = vmul.f32 1.0, %v1512
  %v1514 = vmul.f32 %v1506, %v1364
  %v1515 = vmul.f32 %v1500, %v1507
  %v1516 = vadd.f32 %v1514, %v1515
  %v1517 = vtanh.pop %v1516
  %v1518 = vmul.f32 %v1513, %v1517
  %s1519 = scalar_lea.vmem [#allocation6], 24
  %1520 = vst [vmem:[%s1519] sm:$0xff] %v1518
  %s1521 = smul.u32 4, 4
  %s1522 = smul.addr %s1521, 8
  %s1523 = scalar_lea.vmem [#allocation5], %s1522
  %v1524 = vld [vmem:[%s1523] sm:$0xff]
  %v1525 = vld [vmem:[%s1523 + $0x8] sm:$0xff]
  %v1526 = vld [vmem:[%s1523 + $0x10] sm:$0xff]
  %v1527 = vld [vmem:[%s1523 + $0x18] sm:$0xff]
  %v1528 = vpack.c.bf16 %v1518, %v1518
  %v1529 = vld [vmem:[#allocation3] sm:$0xff]
  %v1530 = vld [vmem:[#allocation3 + $0x8] sm:$0xff]
  %v1531 = vld [vmem:[#allocation3 + $0x10] sm:$0xff]
  %v1532 = vld [vmem:[#allocation3 + $0x18] sm:$0xff]
  %v1533 = vld [vmem:[#allocation3 + $0x20] sm:$0xff]
  %v1534 = vld [vmem:[#allocation3 + $0x28] sm:$0xff]
  %v1535 = vld [vmem:[#allocation3 + $0x30] sm:$0xff]
  %v1536 = vld [vmem:[#allocation3 + $0x38] sm:$0xff]
  %v1537 = vld [vmem:[#allocation3 + $0x40] sm:$0xff]
  %v1538 = vld [vmem:[#allocation3 + $0x48] sm:$0xff]
  %v1539 = vld [vmem:[#allocation3 + $0x50] sm:$0xff]
  %v1540 = vld [vmem:[#allocation3 + $0x58] sm:$0xff]
  %v1541 = vld [vmem:[#allocation3 + $0x60] sm:$0xff]
  %v1542 = vld [vmem:[#allocation3 + $0x68] sm:$0xff]
  %v1543 = vld [vmem:[#allocation3 + $0x70] sm:$0xff]
  %v1544 = vld [vmem:[#allocation3 + $0x78] sm:$0xff]
  %v1545 = vld [vmem:[#allocation3 + $0x80] sm:$0xff]
  %v1546 = vld [vmem:[#allocation3 + $0x88] sm:$0xff]
  %v1547 = vld [vmem:[#allocation3 + $0x90] sm:$0xff]
  %v1548 = vld [vmem:[#allocation3 + $0x98] sm:$0xff]
  %v1549 = vld [vmem:[#allocation3 + $0xa0] sm:$0xff]
  %v1550 = vld [vmem:[#allocation3 + $0xa8] sm:$0xff]
  %v1551 = vld [vmem:[#allocation3 + $0xb0] sm:$0xff]
  %v1552 = vld [vmem:[#allocation3 + $0xb8] sm:$0xff]
  %v1553 = vld [vmem:[#allocation3 + $0xc0] sm:$0xff]
  %v1554 = vld [vmem:[#allocation3 + $0xc8] sm:$0xff]
  %v1555 = vld [vmem:[#allocation3 + $0xd0] sm:$0xff]
  %v1556 = vld [vmem:[#allocation3 + $0xd8] sm:$0xff]
  %v1557 = vld [vmem:[#allocation3 + $0xe0] sm:$0xff]
  %v1558 = vld [vmem:[#allocation3 + $0xe8] sm:$0xff]
  %v1559 = vld [vmem:[#allocation3 + $0xf0] sm:$0xff]
  %v1560 = vld [vmem:[#allocation3 + $0xf8] sm:$0xff]
  %1561 = vmatprep.subr.bf16.mxu0 %v1530
  %1562 = vmatpush1.bf16.msra.mxu0 %v1529
  %1563 = vmatprep.subr.bf16.mxu0 %v1534
  %1564 = vmatpush1.bf16.msra.mxu0 %v1533
  %1565 = vmatprep.subr.bf16.mxu0 %v1538
  %1566 = vmatpush1.bf16.msra.mxu0 %v1537
  %1567 = vmatprep.subr.bf16.mxu0 %v1542
  %1568 = vmatpush1.bf16.msra.mxu0 %v1541
  %1569 = vmatprep.subr.bf16.mxu0 %v1546
  %1570 = vmatpush1.bf16.msra.mxu0 %v1545
  %1571 = vmatprep.subr.bf16.mxu0 %v1550
  %1572 = vmatpush1.bf16.msra.mxu0 %v1549
  %1573 = vmatprep.subr.bf16.mxu0 %v1554
  %1574 = vmatpush1.bf16.msra.mxu0 %v1553
  %1575 = vmatprep.subr.bf16.mxu0 %v1558
  %1576 = vmatpush1.bf16.msra.mxu0 %v1557
  %1577 = vmatprep.subr.bf16.mxu0 0
  %1578 = vmatpush1.bf16.msra.mxu0 0
  %1579 = vmatprep.subr.bf16.mxu0 0
  %1580 = vmatpush1.bf16.msra.mxu0 0
  %1581 = vmatprep.subr.bf16.mxu0 0
  %1582 = vmatpush1.bf16.msra.mxu0 0
  %1583 = vmatprep.subr.bf16.mxu0 0
  %1584 = vmatpush1.bf16.msra.mxu0 0
  %1585 = vmatprep.subr.bf16.mxu0 0
  %1586 = vmatpush1.bf16.msra.mxu0 0
  %1587 = vmatprep.subr.bf16.mxu0 0
  %1588 = vmatpush1.bf16.msra.mxu0 0
  %1589 = vmatprep.subr.bf16.mxu0 0
  %1590 = vmatpush1.bf16.msra.mxu0 0
  %1591 = vmatprep.subr.bf16.mxu0 0
  %1592 = vmatpush1.bf16.msra.mxu0 0
  %1593 = vmatprep.mubr.bf16.mxu0 0
  %1594 = vmatmul.mubr.bf16.gmra.mrb[0].mxu0 %v1528
  %v1595 = vpop.f32.mrb[0].mxu0
  %v1596 = vadd.f32 0.0, %v1595
  %v1597 = vpop.f32.mrb[0].mxu0
  %v1598 = vadd.f32 0.0, %v1597
  %v1599 = vpop.f32.mrb[0].mxu0
  %v1600 = vpop.f32.mrb[0].mxu0
  %1601 = vdwg.mxu0
  %1602 = vmatprep.subr.bf16.mxu0 %v1532
  %1603 = vmatpush1.bf16.msra.mxu0 %v1531
  %1604 = vmatprep.subr.bf16.mxu0 %v1536
  %1605 = vmatpush1.bf16.msra.mxu0 %v1535
  %1606 = vmatprep.subr.bf16.mxu0 %v1540
  %1607 = vmatpush1.bf16.msra.mxu0 %v1539
  %1608 = vmatprep.subr.bf16.mxu0 %v1544
  %1609 = vmatpush1.bf16.msra.mxu0 %v1543
  %1610 = vmatprep.subr.bf16.mxu0 %v1548
  %1611 = vmatpush1.bf16.msra.mxu0 %v1547
  %1612 = vmatprep.subr.bf16.mxu0 %v1552
  %1613 = vmatpush1.bf16.msra.mxu0 %v1551
  %1614 = vmatprep.subr.bf16.mxu0 %v1556
  %1615 = vmatpush1.bf16.msra.mxu0 %v1555
  %1616 = vmatprep.subr.bf16.mxu0 %v1560
  %1617 = vmatpush1.bf16.msra.mxu0 %v1559
  %1618 = vmatprep.subr.bf16.mxu0 0
  %1619 = vmatpush1.bf16.msra.mxu0 0
  %1620 = vmatprep.subr.bf16.mxu0 0
  %1621 = vmatpush1.bf16.msra.mxu0 0
  %1622 = vmatprep.subr.bf16.mxu0 0
  %1623 = vmatpush1.bf16.msra.mxu0 0
  %1624 = vmatprep.subr.bf16.mxu0 0
  %1625 = vmatpush1.bf16.msra.mxu0 0
  %1626 = vmatprep.subr.bf16.mxu0 0
  %1627 = vmatpush1.bf16.msra.mxu0 0
  %1628 = vmatprep.subr.bf16.mxu0 0
  %1629 = vmatpush1.bf16.msra.mxu0 0
  %1630 = vmatprep.subr.bf16.mxu0 0
  %1631 = vmatpush1.bf16.msra.mxu0 0
  %1632 = vmatprep.subr.bf16.mxu0 0
  %1633 = vmatpush1.bf16.msra.mxu0 0
  %1634 = vmatprep.mubr.bf16.mxu0 0
  %1635 = vmatmul.mubr.bf16.gmra.mrb[0].mxu0 %v1528
  %v1636 = vpop.f32.mrb[0].mxu0
  %v1637 = vadd.f32 0.0, %v1636
  %v1638 = vpop.f32.mrb[0].mxu0
  %v1639 = vadd.f32 0.0, %v1638
  %v1640 = vpop.f32.mrb[0].mxu0
  %v1641 = vpop.f32.mrb[0].mxu0
  %1642 = vdwg.mxu0
  %v1643 = vadd.f32 %v1524, %v1596
  %v1644 = vadd.f32 %v1525, %v1598
  %v1645 = vadd.f32 %v1526, %v1637
  %v1646 = vadd.f32 %v1527, %v1639
  %v1647 = vxor.u32 %v1643, 2147483648
  %v1648 = vmul.f32 %v1647, 1.442695
  %v1649 = vpow.pop %v1648
  %v1650 = vadd.f32 %v1649, 1.0
  %v1651 = vrcp.pop %v1650
  %v1652 = vmul.f32 1.0, %v1651
  %v1653 = vxor.u32 %v1644, 2147483648
  %v1654 = vmul.f32 %v1653, 1.442695
  %v1655 = vpow.pop %v1654
  %v1656 = vadd.f32 %v1655, 1.0
  %v1657 = vrcp.pop %v1656
  %v1658 = vmul.f32 1.0, %v1657
  %v1659 = vtanh.pop %v1645
  %v1660 = vxor.u32 %v1646, 2147483648
  %v1661 = vmul.f32 %v1660, 1.442695
  %v1662 = vpow.pop %v1661
  %v1663 = vadd.f32 %v1662, 1.0
  %v1664 = vrcp.pop %v1663
  %v1665 = vmul.f32 1.0, %v1664
  %v1666 = vmul.f32 %v1658, %v1516
  %v1667 = vmul.f32 %v1652, %v1659
  %v1668 = vadd.f32 %v1666, %v1667
  %v1669 = vtanh.pop %v1668
  %v1670 = vmul.f32 %v1665, %v1669
  %s1671 = scalar_lea.vmem [#allocation6], 32
  %1672 = vst [vmem:[%s1671] sm:$0xff] %v1670
  %s1673 = smul.u32 5, 4
  %s1674 = smul.addr %s1673, 8
  %s1675 = scalar_lea.vmem [#allocation5], %s1674
  %v1676 = vld [vmem:[%s1675] sm:$0xff]
  %v1677 = vld [vmem:[%s1675 + $0x8] sm:$0xff]
  %v1678 = vld [vmem:[%s1675 + $0x10] sm:$0xff]
  %v1679 = vld [vmem:[%s1675 + $0x18] sm:$0xff]
  %v1680 = vpack.c.bf16 %v1670, %v1670
  %v1681 = vld [vmem:[#allocation3] sm:$0xff]
  %v1682 = vld [vmem:[#allocation3 + $0x8] sm:$0xff]
  %v1683 = vld [vmem:[#allocation3 + $0x10] sm:$0xff]
  %v1684 = vld [vmem:[#allocation3 + $0x18] sm:$0xff]
  %v1685 = vld [vmem:[#allocation3 + $0x20] sm:$0xff]
  %v1686 = vld [vmem:[#allocation3 + $0x28] sm:$0xff]
  %v1687 = vld [vmem:[#allocation3 + $0x30] sm:$0xff]
  %v1688 = vld [vmem:[#allocation3 + $0x38] sm:$0xff]
  %v1689 = vld [vmem:[#allocation3 + $0x40] sm:$0xff]
  %v1690 = vld [vmem:[#allocation3 + $0x48] sm:$0xff]
  %v1691 = vld [vmem:[#allocation3 + $0x50] sm:$0xff]
  %v1692 = vld [vmem:[#allocation3 + $0x58] sm:$0xff]
  %v1693 = vld [vmem:[#allocation3 + $0x60] sm:$0xff]
  %v1694 = vld [vmem:[#allocation3 + $0x68] sm:$0xff]
  %v1695 = vld [vmem:[#allocation3 + $0x70] sm:$0xff]
  %v1696 = vld [vmem:[#allocation3 + $0x78] sm:$0xff]
  %v1697 = vld [vmem:[#allocation3 + $0x80] sm:$0xff]
  %v1698 = vld [vmem:[#allocation3 + $0x88] sm:$0xff]
  %v1699 = vld [vmem:[#allocation3 + $0x90] sm:$0xff]
  %v1700 = vld [vmem:[#allocation3 + $0x98] sm:$0xff]
  %v1701 = vld [vmem:[#allocation3 + $0xa0] sm:$0xff]
  %v1702 = vld [vmem:[#allocation3 + $0xa8] sm:$0xff]
  %v1703 = vld [vmem:[#allocation3 + $0xb0] sm:$0xff]
  %v1704 = vld [vmem:[#allocation3 + $0xb8] sm:$0xff]
  %v1705 = vld [vmem:[#allocation3 + $0xc0] sm:$0xff]
  %v1706 = vld [vmem:[#allocation3 + $0xc8] sm:$0xff]
  %v1707 = vld [vmem:[#allocation3 + $0xd0] sm:$0xff]
  %v1708 = vld [vmem:[#allocation3 + $0xd8] sm:$0xff]
  %v1709 = vld [vmem:[#allocation3 + $0xe0] sm:$0xff]
  %v1710 = vld [vmem:[#allocation3 + $0xe8] sm:$0xff]
  %v1711 = vld [vmem:[#allocation3 + $0xf0] sm:$0xff]
  %v1712 = vld [vmem:[#allocation3 + $0xf8] sm:$0xff]
  %1713 = vmatprep.subr.bf16.mxu0 %v1682
  %1714 = vmatpush1.bf16.msra.mxu0 %v1681
  %1715 = vmatprep.subr.bf16.mxu0 %v1686
  %1716 = vmatpush1.bf16.msra.mxu0 %v1685
  %1717 = vmatprep.subr.bf16.mxu0 %v1690
  %1718 = vmatpush1.bf16.msra.mxu0 %v1689
  %1719 = vmatprep.subr.bf16.mxu0 %v1694
  %1720 = vmatpush1.bf16.msra.mxu0 %v1693
  %1721 = vmatprep.subr.bf16.mxu0 %v1698
  %1722 = vmatpush1.bf16.msra.mxu0 %v1697
  %1723 = vmatprep.subr.bf16.mxu0 %v1702
  %1724 = vmatpush1.bf16.msra.mxu0 %v1701
  %1725 = vmatprep.subr.bf16.mxu0 %v1706
  %1726 = vmatpush1.bf16.msra.mxu0 %v1705
  %1727 = vmatprep.subr.bf16.mxu0 %v1710
  %1728 = vmatpush1.bf16.msra.mxu0 %v1709
  %1729 = vmatprep.subr.bf16.mxu0 0
  %1730 = vmatpush1.bf16.msra.mxu0 0
  %1731 = vmatprep.subr.bf16.mxu0 0
  %1732 = vmatpush1.bf16.msra.mxu0 0
  %1733 = vmatprep.subr.bf16.mxu0 0
  %1734 = vmatpush1.bf16.msra.mxu0 0
  %1735 = vmatprep.subr.bf16.mxu0 0
  %1736 = vmatpush1.bf16.msra.mxu0 0
  %1737 = vmatprep.subr.bf16.mxu0 0
  %1738 = vmatpush1.bf16.msra.mxu0 0
  %1739 = vmatprep.subr.bf16.mxu0 0
  %1740 = vmatpush1.bf16.msra.mxu0 0
  %1741 = vmatprep.subr.bf16.mxu0 0
  %1742 = vmatpush1.bf16.msra.mxu0 0
  %1743 = vmatprep.subr.bf16.mxu0 0
  %1744 = vmatpush1.bf16.msra.mxu0 0
  %1745 = vmatprep.mubr.bf16.mxu0 0
  %1746 = vmatmul.mubr.bf16.gmra.mrb[0].mxu0 %v1680
  %v1747 = vpop.f32.mrb[0].mxu0
  %v1748 = vadd.f32 0.0, %v1747
  %v1749 = vpop.f32.mrb[0].mxu0
  %v1750 = vadd.f32 0.0, %v1749
  %v1751 = vpop.f32.mrb[0].mxu0
  %v1752 = vpop.f32.mrb[0].mxu0
  %1753 = vdwg.mxu0
  %1754 = vmatprep.subr.bf16.mxu0 %v1684
  %1755 = vmatpush1.bf16.msra.mxu0 %v1683
  %1756 = vmatprep.subr.bf16.mxu0 %v1688
  %1757 = vmatpush1.bf16.msra.mxu0 %v1687
  %1758 = vmatprep.subr.bf16.mxu0 %v1692
  %1759 = vmatpush1.bf16.msra.mxu0 %v1691
  %1760 = vmatprep.subr.bf16.mxu0 %v1696
  %1761 = vmatpush1.bf16.msra.mxu0 %v1695
  %1762 = vmatprep.subr.bf16.mxu0 %v1700
  %1763 = vmatpush1.bf16.msra.mxu0 %v1699
  %1764 = vmatprep.subr.bf16.mxu0 %v1704
  %1765 = vmatpush1.bf16.msra.mxu0 %v1703
  %1766 = vmatprep.subr.bf16.mxu0 %v1708
  %1767 = vmatpush1.bf16.msra.mxu0 %v1707
  %1768 = vmatprep.subr.bf16.mxu0 %v1712
  %1769 = vmatpush1.bf16.msra.mxu0 %v1711
  %1770 = vmatprep.subr.bf16.mxu0 0
  %1771 = vmatpush1.bf16.msra.mxu0 0
  %1772 = vmatprep.subr.bf16.mxu0 0
  %1773 = vmatpush1.bf16.msra.mxu0 0
  %1774 = vmatprep.subr.bf16.mxu0 0
  %1775 = vmatpush1.bf16.msra.mxu0 0
  %1776 = vmatprep.subr.bf16.mxu0 0
  %1777 = vmatpush1.bf16.msra.mxu0 0
  %1778 = vmatprep.subr.bf16.mxu0 0
  %1779 = vmatpush1.bf16.msra.mxu0 0
  %1780 = vmatprep.subr.bf16.mxu0 0
  %1781 = vmatpush1.bf16.msra.mxu0 0
  %1782 = vmatprep.subr.bf16.mxu0 0
  %1783 = vmatpush1.bf16.msra.mxu0 0
  %1784 = vmatprep.subr.bf16.mxu0 0
  %1785 = vmatpush1.bf16.msra.mxu0 0
  %1786 = vmatprep.mubr.bf16.mxu0 0
  %1787 = vmatmul.mubr.bf16.gmra.mrb[0].mxu0 %v1680
  %v1788 = vpop.f32.mrb[0].mxu0
  %v1789 = vadd.f32 0.0, %v1788
  %v1790 = vpop.f32.mrb[0].mxu0
  %v1791 = vadd.f32 0.0, %v1790
  %v1792 = vpop.f32.mrb[0].mxu0
  %v1793 = vpop.f32.mrb[0].mxu0
  %1794 = vdwg.mxu0
  %v1795 = vadd.f32 %v1676, %v1748
  %v1796 = vadd.f32 %v1677, %v1750
  %v1797 = vadd.f32 %v1678, %v1789
  %v1798 = vadd.f32 %v1679, %v1791
  %v1799 = vxor.u32 %v1795, 2147483648
  %v1800 = vmul.f32 %v1799, 1.442695
  %v1801 = vpow.pop %v1800
  %v1802 = vadd.f32 %v1801, 1.0
  %v1803 = vrcp.pop %v1802
  %v1804 = vmul.f32 1.0, %v1803
  %v1805 = vxor.u32 %v1796, 2147483648
  %v1806 = vmul.f32 %v1805, 1.442695
  %v1807 = vpow.pop %v1806
  %v1808 = vadd.f32 %v1807, 1.0
  %v1809 = vrcp.pop %v1808
  %v1810 = vmul.f32 1.0, %v1809
  %v1811 = vtanh.pop %v1797
  %v1812 = vxor.u32 %v1798, 2147483648
  %v1813 = vmul.f32 %v1812, 1.442695
  %v1814 = vpow.pop %v1813
  %v1815 = vadd.f32 %v1814, 1.0
  %v1816 = vrcp.pop %v1815
  %v1817 = vmul.f32 1.0, %v1816
  %v1818 = vmul.f32 %v1810, %v1668
  %v1819 = vmul.f32 %v1804, %v1811
  %v1820 = vadd.f32 %v1818, %v1819
  %v1821 = vtanh.pop %v1820
  %v1822 = vmul.f32 %v1817, %v1821
  %s1823 = scalar_lea.vmem [#allocation6], 40
  %1824 = vst [vmem:[%s1823] sm:$0xff] %v1822
  %s1825 = smul.u32 6, 4
  %s1826 = smul.addr %s1825, 8
  %s1827 = scalar_lea.vmem [#allocation5], %s1826
  %v1828 = vld [vmem:[%s1827] sm:$0xff]
  %v1829 = vld [vmem:[%s1827 + $0x8] sm:$0xff]
  %v1830 = vld [vmem:[%s1827 + $0x10] sm:$0xff]
  %v1831 = vld [vmem:[%s1827 + $0x18] sm:$0xff]
  %v1832 = vpack.c.bf16 %v1822, %v1822
  %v1833 = vld [vmem:[#allocation3] sm:$0xff]
  %v1834 = vld [vmem:[#allocation3 + $0x8] sm:$0xff]
  %v1835 = vld [vmem:[#allocation3 + $0x10] sm:$0xff]
  %v1836 = vld [vmem:[#allocation3 + $0x18] sm:$0xff]
  %v1837 = vld [vmem:[#allocation3 + $0x20] sm:$0xff]
  %v1838 = vld [vmem:[#allocation3 + $0x28] sm:$0xff]
  %v1839 = vld [vmem:[#allocation3 + $0x30] sm:$0xff]
  %v1840 = vld [vmem:[#allocation3 + $0x38] sm:$0xff]
  %v1841 = vld [vmem:[#allocation3 + $0x40] sm:$0xff]
  %v1842 = vld [vmem:[#allocation3 + $0x48] sm:$0xff]
  %v1843 = vld [vmem:[#allocation3 + $0x50] sm:$0xff]
  %v1844 = vld [vmem:[#allocation3 + $0x58] sm:$0xff]
  %v1845 = vld [vmem:[#allocation3 + $0x60] sm:$0xff]
  %v1846 = vld [vmem:[#allocation3 + $0x68] sm:$0xff]
  %v1847 = vld [vmem:[#allocation3 + $0x70] sm:$0xff]
  %v1848 = vld [vmem:[#allocation3 + $0x78] sm:$0xff]
  %v1849 = vld [vmem:[#allocation3 + $0x80] sm:$0xff]
  %v1850 = vld [vmem:[#allocation3 + $0x88] sm:$0xff]
  %v1851 = vld [vmem:[#allocation3 + $0x90] sm:$0xff]
  %v1852 = vld [vmem:[#allocation3 + $0x98] sm:$0xff]
  %v1853 = vld [vmem:[#allocation3 + $0xa0] sm:$0xff]
  %v1854 = vld [vmem:[#allocation3 + $0xa8] sm:$0xff]
  %v1855 = vld [vmem:[#allocation3 + $0xb0] sm:$0xff]
  %v1856 = vld [vmem:[#allocation3 + $0xb8] sm:$0xff]
  %v1857 = vld [vmem:[#allocation3 + $0xc0] sm:$0xff]
  %v1858 = vld [vmem:[#allocation3 + $0xc8] sm:$0xff]
  %v1859 = vld [vmem:[#allocation3 + $0xd0] sm:$0xff]
  %v1860 = vld [vmem:[#allocation3 + $0xd8] sm:$0xff]
  %v1861 = vld [vmem:[#allocation3 + $0xe0] sm:$0xff]
  %v1862 = vld [vmem:[#allocation3 + $0xe8] sm:$0xff]
  %v1863 = vld [vmem:[#allocation3 + $0xf0] sm:$0xff]
  %v1864 = vld [vmem:[#allocation3 + $0xf8] sm:$0xff]
  %1865 = vmatprep.subr.bf16.mxu0 %v1834
  %1866 = vmatpush1.bf16.msra.mxu0 %v1833
  %1867 = vmatprep.subr.bf16.mxu0 %v1838
  %1868 = vmatpush1.bf16.msra.mxu0 %v1837
  %1869 = vmatprep.subr.bf16.mxu0 %v1842
  %1870 = vmatpush1.bf16.msra.mxu0 %v1841
  %1871 = vmatprep.subr.bf16.mxu0 %v1846
  %1872 = vmatpush1.bf16.msra.mxu0 %v1845
  %1873 = vmatprep.subr.bf16.mxu0 %v1850
  %1874 = vmatpush1.bf16.msra.mxu0 %v1849
  %1875 = vmatprep.subr.bf16.mxu0 %v1854
  %1876 = vmatpush1.bf16.msra.mxu0 %v1853
  %1877 = vmatprep.subr.bf16.mxu0 %v1858
  %1878 = vmatpush1.bf16.msra.mxu0 %v1857
  %1879 = vmatprep.subr.bf16.mxu0 %v1862
  %1880 = vmatpush1.bf16.msra.mxu0 %v1861
  %1881 = vmatprep.subr.bf16.mxu0 0
  %1882 = vmatpush1.bf16.msra.mxu0 0
  %1883 = vmatprep.subr.bf16.mxu0 0
  %1884 = vmatpush1.bf16.msra.mxu0 0
  %1885 = vmatprep.subr.bf16.mxu0 0
  %1886 = vmatpush1.bf16.msra.mxu0 0
  %1887 = vmatprep.subr.bf16.mxu0 0
  %1888 = vmatpush1.bf16.msra.mxu0 0
  %1889 = vmatprep.subr.bf16.mxu0 0
  %1890 = vmatpush1.bf16.msra.mxu0 0
  %1891 = vmatprep.subr.bf16.mxu0 0
  %1892 = vmatpush1.bf16.msra.mxu0 0
  %1893 = vmatprep.subr.bf16.mxu0 0
  %1894 = vmatpush1.bf16.msra.mxu0 0
  %1895 = vmatprep.subr.bf16.mxu0 0
  %1896 = vmatpush1.bf16.msra.mxu0 0
  %1897 = vmatprep.mubr.bf16.mxu0 0
  %1898 = vmatmul.mubr.bf16.gmra.mrb[0].mxu0 %v1832
  %v1899 = vpop.f32.mrb[0].mxu0
  %v1900 = vadd.f32 0.0, %v1899
  %v1901 = vpop.f32.mrb[0].mxu0
  %v1902 = vadd.f32 0.0, %v1901
  %v1903 = vpop.f32.mrb[0].mxu0
  %v1904 = vpop.f32.mrb[0].mxu0
  %1905 = vdwg.mxu0
  %1906 = vmatprep.subr.bf16.mxu0 %v1836
  %1907 = vmatpush1.bf16.msra.mxu0 %v1835
  %1908 = vmatprep.subr.bf16.mxu0 %v1840
  %1909 = vmatpush1.bf16.msra.mxu0 %v1839
  %1910 = vmatprep.subr.bf16.mxu0 %v1844
  %1911 = vmatpush1.bf16.msra.mxu0 %v1843
  %1912 = vmatprep.subr.bf16.mxu0 %v1848
  %1913 = vmatpush1.bf16.msra.mxu0 %v1847
  %1914 = vmatprep.subr.bf16.mxu0 %v1852
  %1915 = vmatpush1.bf16.msra.mxu0 %v1851
  %1916 = vmatprep.subr.bf16.mxu0 %v1856
  %1917 = vmatpush1.bf16.msra.mxu0 %v1855
  %1918 = vmatprep.subr.bf16.mxu0 %v1860
  %1919 = vmatpush1.bf16.msra.mxu0 %v1859
  %1920 = vmatprep.subr.bf16.mxu0 %v1864
  %1921 = vmatpush1.bf16.msra.mxu0 %v1863
  %1922 = vmatprep.subr.bf16.mxu0 0
  %1923 = vmatpush1.bf16.msra.mxu0 0
  %1924 = vmatprep.subr.bf16.mxu0 0
  %1925 = vmatpush1.bf16.msra.mxu0 0
  %1926 = vmatprep.subr.bf16.mxu0 0
  %1927 = vmatpush1.bf16.msra.mxu0 0
  %1928 = vmatprep.subr.bf16.mxu0 0
  %1929 = vmatpush1.bf16.msra.mxu0 0
  %1930 = vmatprep.subr.bf16.mxu0 0
  %1931 = vmatpush1.bf16.msra.mxu0 0
  %1932 = vmatprep.subr.bf16.mxu0 0
  %1933 = vmatpush1.bf16.msra.mxu0 0
  %1934 = vmatprep.subr.bf16.mxu0 0
  %1935 = vmatpush1.bf16.msra.mxu0 0
  %1936 = vmatprep.subr.bf16.mxu0 0
  %1937 = vmatpush1.bf16.msra.mxu0 0
  %1938 = vmatprep.mubr.bf16.mxu0 0
  %1939 = vmatmul.mubr.bf16.gmra.mrb[0].mxu0 %v1832
  %v1940 = vpop.f32.mrb[0].mxu0
  %v1941 = vadd.f32 0.0, %v1940
  %v1942 = vpop.f32.mrb[0].mxu0
  %v1943 = vadd.f32 0.0, %v1942
  %v1944 = vpop.f32.mrb[0].mxu0
  %v1945 = vpop.f32.mrb[0].mxu0
  %1946 = vdwg.mxu0
  %v1947 = vadd.f32 %v1828, %v1900
  %v1948 = vadd.f32 %v1829, %v1902
  %v1949 = vadd.f32 %v1830, %v1941
  %v1950 = vadd.f32 %v1831, %v1943
  %v1951 = vxor.u32 %v1947, 2147483648
  %v1952 = vmul.f32 %v1951, 1.442695
  %v1953 = vpow.pop %v1952
  %v1954 = vadd.f32 %v1953, 1.0
  %v1955 = vrcp.pop %v1954
  %v1956 = vmul.f32 1.0, %v1955
  %v1957 = vxor.u32 %v1948, 2147483648
  %v1958 = vmul.f32 %v1957, 1.442695
  %v1959 = vpow.pop %v1958
  %v1960 = vadd.f32 %v1959, 1.0
  %v1961 = vrcp.pop %v1960
  %v1962 = vmul.f32 1.0, %v1961
  %v1963 = vtanh.pop %v1949
  %v1964 = vxor.u32 %v1950, 2147483648
  %v1965 = vmul.f32 %v1964, 1.442695
  %v1966 = vpow.pop %v1965
  %v1967 = vadd.f32 %v1966, 1.0
  %v1968 = vrcp.pop %v1967
  %v1969 = vmul.f32 1.0, %v1968
  %v1970 = vmul.f32 %v1962, %v1820
  %v1971 = vmul.f32 %v1956, %v1963
  %v1972 = vadd.f32 %v1970, %v1971
  %v1973 = vtanh.pop %v1972
  %v1974 = vmul.f32 %v1969, %v1973
  %s1975 = scalar_lea.vmem [#allocation6], 48
  %1976 = vst [vmem:[%s1975] sm:$0xff] %v1974
  %s1977 = smul.u32 7, 4
  %s1978 = smul.addr %s1977, 8
  %s1979 = scalar_lea.vmem [#allocation5], %s1978
  %v1980 = vld [vmem:[%s1979] sm:$0xff]
  %v1981 = vld [vmem:[%s1979 + $0x8] sm:$0xff]
  %v1982 = vld [vmem:[%s1979 + $0x10] sm:$0xff]
  %v1983 = vld [vmem:[%s1979 + $0x18] sm:$0xff]
  %v1984 = vpack.c.bf16 %v1974, %v1974
  %v1985 = vld [vmem:[#allocation3] sm:$0xff]
  %v1986 = vld [vmem:[#allocation3 + $0x8] sm:$0xff]
  %v1987 = vld [vmem:[#allocation3 + $0x10] sm:$0xff]
  %v1988 = vld [vmem:[#allocation3 + $0x18] sm:$0xff]
  %v1989 = vld [vmem:[#allocation3 + $0x20] sm:$0xff]
  %v1990 = vld [vmem:[#allocation3 + $0x28] sm:$0xff]
  %v1991 = vld [vmem:[#allocation3 + $0x30] sm:$0xff]
  %v1992 = vld [vmem:[#allocation3 + $0x38] sm:$0xff]
  %v1993 = vld [vmem:[#allocation3 + $0x40] sm:$0xff]
  %v1994 = vld [vmem:[#allocation3 + $0x48] sm:$0xff]
  %v1995 = vld [vmem:[#allocation3 + $0x50] sm:$0xff]
  %v1996 = vld [vmem:[#allocation3 + $0x58] sm:$0xff]
  %v1997 = vld [vmem:[#allocation3 + $0x60] sm:$0xff]
  %v1998 = vld [vmem:[#allocation3 + $0x68] sm:$0xff]
  %v1999 = vld [vmem:[#allocation3 + $0x70] sm:$0xff]
  %v2000 = vld [vmem:[#allocation3 + $0x78] sm:$0xff]
  %v2001 = vld [vmem:[#allocation3 + $0x80] sm:$0xff]
  %v2002 = vld [vmem:[#allocation3 + $0x88] sm:$0xff]
  %v2003 = vld [vmem:[#allocation3 + $0x90] sm:$0xff]
  %v2004 = vld [vmem:[#allocation3 + $0x98] sm:$0xff]
  %v2005 = vld [vmem:[#allocation3 + $0xa0] sm:$0xff]
  %v2006 = vld [vmem:[#allocation3 + $0xa8] sm:$0xff]
  %v2007 = vld [vmem:[#allocation3 + $0xb0] sm:$0xff]
  %v2008 = vld [vmem:[#allocation3 + $0xb8] sm:$0xff]
  %v2009 = vld [vmem:[#allocation3 + $0xc0] sm:$0xff]
  %v2010 = vld [vmem:[#allocation3 + $0xc8] sm:$0xff]
  %v2011 = vld [vmem:[#allocation3 + $0xd0] sm:$0xff]
  %v2012 = vld [vmem:[#allocation3 + $0xd8] sm:$0xff]
  %v2013 = vld [vmem:[#allocation3 + $0xe0] sm:$0xff]
  %v2014 = vld [vmem:[#allocation3 + $0xe8] sm:$0xff]
  %v2015 = vld [vmem:[#allocation3 + $0xf0] sm:$0xff]
  %v2016 = vld [vmem:[#allocation3 + $0xf8] sm:$0xff]
  %2017 = vmatprep.subr.bf16.mxu0 %v1986
  %2018 = vmatpush1.bf16.msra.mxu0 %v1985
  %2019 = vmatprep.subr.bf16.mxu0 %v1990
  %2020 = vmatpush1.bf16.msra.mxu0 %v1989
  %2021 = vmatprep.subr.bf16.mxu0 %v1994
  %2022 = vmatpush1.bf16.msra.mxu0 %v1993
  %2023 = vmatprep.subr.bf16.mxu0 %v1998
  %2024 = vmatpush1.bf16.msra.mxu0 %v1997
  %2025 = vmatprep.subr.bf16.mxu0 %v2002
  %2026 = vmatpush1.bf16.msra.mxu0 %v2001
  %2027 = vmatprep.subr.bf16.mxu0 %v2006
  %2028 = vmatpush1.bf16.msra.mxu0 %v2005
  %2029 = vmatprep.subr.bf16.mxu0 %v2010
  %2030 = vmatpush1.bf16.msra.mxu0 %v2009
  %2031 = vmatprep.subr.bf16.mxu0 %v2014
  %2032 = vmatpush1.bf16.msra.mxu0 %v2013
  %2033 = vmatprep.subr.bf16.mxu0 0
  %2034 = vmatpush1.bf16.msra.mxu0 0
  %2035 = vmatprep.subr.bf16.mxu0 0
  %2036 = vmatpush1.bf16.msra.mxu0 0
  %2037 = vmatprep.subr.bf16.mxu0 0
  %2038 = vmatpush1.bf16.msra.mxu0 0
  %2039 = vmatprep.subr.bf16.mxu0 0
  %2040 = vmatpush1.bf16.msra.mxu0 0
  %2041 = vmatprep.subr.bf16.mxu0 0
  %2042 = vmatpush1.bf16.msra.mxu0 0
  %2043 = vmatprep.subr.bf16.mxu0 0
  %2044 = vmatpush1.bf16.msra.mxu0 0
  %2045 = vmatprep.subr.bf16.mxu0 0
  %2046 = vmatpush1.bf16.msra.mxu0 0
  %2047 = vmatprep.subr.bf16.mxu0 0
  %2048 = vmatpush1.bf16.msra.mxu0 0
  %2049 = vmatprep.mubr.bf16.mxu0 0
  %2050 = vmatmul.mubr.bf16.gmra.mrb[0].mxu0 %v1984
  %v2051 = vpop.f32.mrb[0].mxu0
  %v2052 = vadd.f32 0.0, %v2051
  %v2053 = vpop.f32.mrb[0].mxu0
  %v2054 = vadd.f32 0.0, %v2053
  %v2055 = vpop.f32.mrb[0].mxu0
  %v2056 = vpop.f32.mrb[0].mxu0
  %2057 = vdwg.mxu0
  %2058 = vmatprep.subr.bf16.mxu0 %v1988
  %2059 = vmatpush1.bf16.msra.mxu0 %v1987
  %2060 = vmatprep.subr.bf16.mxu0 %v1992
  %2061 = vmatpush1.bf16.msra.mxu0 %v1991
  %2062 = vmatprep.subr.bf16.mxu0 %v1996
  %2063 = vmatpush1.bf16.msra.mxu0 %v1995
  %2064 = vmatprep.subr.bf16.mxu0 %v2000
  %2065 = vmatpush1.bf16.msra.mxu0 %v1999
  %2066 = vmatprep.subr.bf16.mxu0 %v2004
  %2067 = vmatpush1.bf16.msra.mxu0 %v2003
  %2068 = vmatprep.subr.bf16.mxu0 %v2008
  %2069 = vmatpush1.bf16.msra.mxu0 %v2007
  %2070 = vmatprep.subr.bf16.mxu0 %v2012
  %2071 = vmatpush1.bf16.msra.mxu0 %v2011
  %2072 = vmatprep.subr.bf16.mxu0 %v2016
  %2073 = vmatpush1.bf16.msra.mxu0 %v2015
  %2074 = vmatprep.subr.bf16.mxu0 0
  %2075 = vmatpush1.bf16.msra.mxu0 0
  %2076 = vmatprep.subr.bf16.mxu0 0
  %2077 = vmatpush1.bf16.msra.mxu0 0
  %2078 = vmatprep.subr.bf16.mxu0 0
  %2079 = vmatpush1.bf16.msra.mxu0 0
  %2080 = vmatprep.subr.bf16.mxu0 0
  %2081 = vmatpush1.bf16.msra.mxu0 0
  %2082 = vmatprep.subr.bf16.mxu0 0
  %2083 = vmatpush1.bf16.msra.mxu0 0
  %2084 = vmatprep.subr.bf16.mxu0 0
  %2085 = vmatpush1.bf16.msra.mxu0 0
  %2086 = vmatprep.subr.bf16.mxu0 0
  %2087 = vmatpush1.bf16.msra.mxu0 0
  %2088 = vmatprep.subr.bf16.mxu0 0
  %2089 = vmatpush1.bf16.msra.mxu0 0
  %2090 = vmatprep.mubr.bf16.mxu0 0
  %2091 = vmatmul.mubr.bf16.gmra.mrb[0].mxu0 %v1984
  %v2092 = vpop.f32.mrb[0].mxu0
  %v2093 = vadd.f32 0.0, %v2092
  %v2094 = vpop.f32.mrb[0].mxu0
  %v2095 = vadd.f32 0.0, %v2094
  %v2096 = vpop.f32.mrb[0].mxu0
  %v2097 = vpop.f32.mrb[0].mxu0
  %2098 = vdwg.mxu0
  %v2099 = vadd.f32 %v1980, %v2052
  %v2100 = vadd.f32 %v1981, %v2054
  %v2101 = vadd.f32 %v1982, %v2093
  %v2102 = vadd.f32 %v1983, %v2095
  %v2103 = vxor.u32 %v2099, 2147483648
  %v2104 = vmul.f32 %v2103, 1.442695
  %v2105 = vpow.pop %v2104
  %v2106 = vadd.f32 %v2105, 1.0
  %v2107 = vrcp.pop %v2106
  %v2108 = vmul.f32 1.0, %v2107
  %v2109 = vxor.u32 %v2100, 2147483648
  %v2110 = vmul.f32 %v2109, 1.442695
  %v2111 = vpow.pop %v2110
  %v2112 = vadd.f32 %v2111, 1.0
  %v2113 = vrcp.pop %v2112
  %v2114 = vmul.f32 1.0, %v2113
  %v2115 = vtanh.pop %v2101
  %v2116 = vxor.u32 %v2102, 2147483648
  %v2117 = vmul.f32 %v2116, 1.442695
  %v2118 = vpow.pop %v2117
  %v2119 = vadd.f32 %v2118, 1.0
  %v2120 = vrcp.pop %v2119
  %v2121 = vmul.f32 1.0, %v2120
  %v2122 = vmul.f32 %v2114, %v1972
  %v2123 = vmul.f32 %v2108, %v2115
  %v2124 = vadd.f32 %v2122, %v2123
  %v2125 = vtanh.pop %v2124
  %v2126 = vmul.f32 %v2121, %v2125
  %s2127 = scalar_lea.vmem [#allocation6], 56
  %2128 = vst [vmem:[%s2127] sm:$0xff] %v2126
  %2129 = vst [vmem:[#allocation7] sm:$0xff] %v2126
  %2130 = vst [vmem:[#allocation8] sm:$0xff] %v2124
  // Predicated region
  $region108: #{lstm_decoder_forward.3} parent=0 // pred_check
    %p2131 = pneg %p27
  $region109: #{lstm_decoder_forward.3} parent=0 // pred_check_branch
    %2133 = sbr.rel (%p2131) target = $region111
  $region110: #{lstm_decoder_forward.3} parent=0 // pred_region
    %s2134 = scalar_lea.sflag [#allocation9], 2
    %s2135 = smul.u32 4, 16
    %s2136 = smul.u32 %s2135, 1
    %s2137 = sshll.u32 %s2136, 4
    %2138 = dma.done %s2134, %s2137
  $region111: #{lstm_decoder_forward.3} parent=0 // pred_fallthru
    _
  %v2139 = vld [vmem:[#allocation6] sm:$0xff]
  %v2140 = vld [vmem:[#allocation6 + $0x8] sm:$0xff]
  %v2141 = vld [vmem:[#allocation6 + $0x10] sm:$0xff]
  %v2142 = vld [vmem:[#allocation6 + $0x18] sm:$0xff]
  %v2143 = vld [vmem:[#allocation6 + $0x20] sm:$0xff]
  %v2144 = vld [vmem:[#allocation6 + $0x28] sm:$0xff]
  %v2145 = vld [vmem:[#allocation6 + $0x30] sm:$0xff]
  %v2146 = vld [vmem:[#allocation6 + $0x38] sm:$0xff]
  %v2147 = vpack.c.bf16 %v2140, %v2139
  %v2148 = vpack.c.bf16 %v2142, %v2141
  %v2149 = vpack.c.bf16 %v2144, %v2143
  %v2150 = vpack.c.bf16 %v2146, %v2145
  %v2151 = vld [vmem:[#allocation4] sm:$0xff]
  %v2152 = vld [vmem:[#allocation4 + $0x8] sm:$0xff]
  %v2153 = vld [vmem:[#allocation4 + $0x10] sm:$0xff]
  %v2154 = vld [vmem:[#allocation4 + $0x18] sm:$0xff]
  %v2155 = vld [vmem:[#allocation4 + $0x20] sm:$0xff]
  %v2156 = vld [vmem:[#allocation4 + $0x28] sm:$0xff]
  %v2157 = vld [vmem:[#allocation4 + $0x30] sm:$0xff]
  %v2158 = vld [vmem:[#allocation4 + $0x38] sm:$0xff]
  %v2159 = vld [vmem:[%s4] sm:$0x1]
  %v2161 = vlaneseq
  %v2162 = vshrl.u32 %v2161, 7
  %v2163 = vsub.s32 0, %v2162
  %v2164 = vrot.slane %v2159, %v2163
  %2166 = vmatprep.subr.bf16.mxu0 0
  %2167 = vmatpush1.bf16.msra.mxu0 %v2151
  %2168 = vmatprep.subr.bf16.mxu0 0
  %2169 = vmatpush1.bf16.msra.mxu0 %v2152
  %2170 = vmatprep.subr.bf16.mxu0 0
  %2171 = vmatpush1.bf16.msra.mxu0 %v2153
  %2172 = vmatprep.subr.bf16.mxu0 0
  %2173 = vmatpush1.bf16.msra.mxu0 %v2154
  %2174 = vmatprep.subr.bf16.mxu0 0
  %2175 = vmatpush1.bf16.msra.mxu0 %v2155
  %2176 = vmatprep.subr.bf16.mxu0 0
  %2177 = vmatpush1.bf16.msra.mxu0 %v2156
  %2178 = vmatprep.subr.bf16.mxu0 0
  %2179 = vmatpush1.bf16.msra.mxu0 %v2157
  %2180 = vmatprep.subr.bf16.mxu0 0
  %2181 = vmatpush1.bf16.msra.mxu0 %v2158
  %2182 = vmatprep.subr.bf16.mxu0 0
  %2183 = vmatpush1.bf16.msra.mxu0 0
  %2184 = vmatprep.subr.bf16.mxu0 0
  %2185 = vmatpush1.bf16.msra.mxu0 0
  %2186 = vmatprep.subr.bf16.mxu0 0
  %2187 = vmatpush1.bf16.msra.mxu0 0
  %2188 = vmatprep.subr.bf16.mxu0 0
  %2189 = vmatpush1.bf16.msra.mxu0 0
  %2190 = vmatprep.subr.bf16.mxu0 0
  %2191 = vmatpush1.bf16.msra.mxu0 0
  %2192 = vmatprep.subr.bf16.mxu0 0
  %2193 = vmatpush1.bf16.msra.mxu0 0
  %2194 = vmatprep.subr.bf16.mxu0 0
  %2195 = vmatpush1.bf16.msra.mxu0 0
  %2196 = vmatprep.subr.bf16.mxu0 0
  %2197 = vmatpush1.bf16.msra.mxu0 0
  %2198 = vmatprep.mubr.bf16.mxu0 0
  %2199 = vmatmul.mubr.bf16.gmra.mrb[0].mxu0 %v2147
  %v2200 = vpop.f32.mrb[0].mxu0
  %v2201 = vadd.f32 %v2164, %v2200
  %v2202 = vpop.f32.mrb[0].mxu0
  %v2203 = vpop.f32.mrb[0].mxu0
  %v2204 = vadd.f32 %v2164, %v2203
  %v2205 = vpop.f32.mrb[0].mxu0
  %2206 = vmatprep.mubr.bf16.mxu0 0
  %2207 = vmatmul.mubr.bf16.gmra.mrb[0].mxu0 %v2148
  %v2208 = vpop.f32.mrb[0].mxu0
  %v2209 = vadd.f32 %v2164, %v2208
  %v2210 = vpop.f32.mrb[0].mxu0
  %v2211 = vpop.f32.mrb[0].mxu0
  %v2212 = vadd.f32 %v2164, %v2211
  %v2213 = vpop.f32.mrb[0].mxu0
  %2214 = vmatprep.mubr.bf16.mxu0 0
  %2215 = vmatmul.mubr.bf16.gmra.mrb[0].mxu0 %v2149
  %v2216 = vpop.f32.mrb[0].mxu0
  %v2217 = vadd.f32 %v2164, %v2216
  %v2218 = vpop.f32.mrb[0].mxu0
  %v2219 = vpop.f32.mrb[0].mxu0
  %v2220 = vadd.f32 %v2164, %v2219
  %v2221 = vpop.f32.mrb[0].mxu0
  %2222 = vmatprep.mubr.bf16.mxu0 0
  %2223 = vmatmul.mubr.bf16.gmra.mrb[0].mxu0 %v2150
  %v2224 = vpop.f32.mrb[0].mxu0
  %v2225 = vadd.f32 %v2164, %v2224
  %v2226 = vpop.f32.mrb[0].mxu0
  %v2227 = vpop.f32.mrb[0].mxu0
  %v2228 = vadd.f32 %v2164, %v2227
  %v2229 = vpop.f32.mrb[0].mxu0
  %2230 = vdwg.mxu0
  %2231 = vst [vmem:[%s8] sm:$0xff] %v2201
  %2232 = vst [vmem:[%s8 + $0x8] sm:$0xff] %v2204
  %2233 = vst [vmem:[%s8 + $0x10] sm:$0xff] %v2209
  %2234 = vst [vmem:[%s8 + $0x18] sm:$0xff] %v2212
  %2235 = vst [vmem:[%s8 + $0x20] sm:$0xff] %v2217
  %2236 = vst [vmem:[%s8 + $0x28] sm:$0xff] %v2220
  %2237 = vst [vmem:[%s8 + $0x30] sm:$0xff] %v2225
  %2238 = vst [vmem:[%s8 + $0x38] sm:$0xff] %v2228
  // Predicated region
  $region112: #{lstm_decoder_forward.3} parent=0 // pred_check
    %p2239 = pneg %p27
  $region113: #{lstm_decoder_forward.3} parent=0 // pred_check_branch
    %2241 = sbr.rel (%p2239) target = $region115
  $region114: #{lstm_decoder_forward.3} parent=0 // pred_region
    %2242 = vst [vmem:[%s9] sm:$0xff] %v2126
    %2243 = vst [vmem:[%s10] sm:$0xff] %v2124
  $region115: #{lstm_decoder_forward.3} parent=0 // pred_fallthru
    _
  // Predicated region
  $region116: #{lstm_decoder_forward.3} parent=0 // pred_check
    _
  $region117: #{lstm_decoder_forward.3} parent=0 // pred_check_branch
    %2245 = sbr.rel (0) target = $region119
  $region118: #{lstm_decoder_forward.3} parent=0 // pred_region
    _
  $region119: #{lstm_decoder_forward.3} parent=0 // pred_fallthru
    _
  // Predicated region
  $region120: #{lstm_decoder_forward.3} parent=0 // pred_check
    _
  $region121: #{lstm_decoder_forward.3} parent=0 // pred_check_branch
    %2247 = sbr.rel (0) target = $region123
  $region122: #{lstm_decoder_forward.3} parent=0 // pred_region
    _
  $region123: #{lstm_decoder_forward.3} parent=0 // pred_fallthru
    _
  // Predicated region
  $region124: #{lstm_decoder_forward.3} parent=0 // pred_check
    _
  $region125: #{lstm_decoder_forward.3} parent=0 // pred_check_branch
    %2249 = sbr.rel (0) target = $region127
  $region126: #{lstm_decoder_forward.3} parent=0 // pred_region
    _
  $region127: #{lstm_decoder_forward.3} parent=0 // pred_fallthru
    _
  // Predicated region
  $region128: #{lstm_decoder_forward.3} parent=0 // pred_check
    _
  $region129: #{lstm_decoder_forward.3} parent=0 // pred_check_branch
    %2251 = sbr.rel (0) target = $region131
  $region130: #{lstm_decoder_forward.3} parent=0 // pred_region
    _
  $region131: #{lstm_decoder_forward.3} parent=0 // pred_fallthru
    _
  // Predicated region
  $region132: #{lstm_decoder_forward.3} parent=0 // pred_check
    _
  $region133: #{lstm_decoder_forward.3} parent=0 // pred_check_branch
    %2253 = sbr.rel (0) target = $region135
  $region134: #{lstm_decoder_forward.3} parent=0 // pred_region
    _
  $region135: #{lstm_decoder_forward.3} parent=0 // pred_fallthru
    _
  // Predicated region
  $region136: #{lstm_decoder_forward.3} parent=0 // pred_check
    _
  $region137: #{lstm_decoder_forward.3} parent=0 // pred_check_branch
    %2255 = sbr.rel (0) target = $region139
  $region138: #{lstm_decoder_forward.3} parent=0 // pred_region
    _
  $region139: #{lstm_decoder_forward.3} parent=0 // pred_fallthru
    _
  %2256 = vsyncmov [#allocation9]
  %s2257 = vpop.sfrf %2256
  %p2258 = scmp.eq.s32.totalorder %s2257, 0
  %p2259 = pneg %p2258
  %2261 = shalt.err (%p2259)
  %s2262 = scalar_lea.sflag [#allocation9], 1
  %2263 = vsyncmov %s2262
  %s2264 = vpop.sfrf %2263
  %p2265 = scmp.eq.s32.totalorder %s2264, 0
  %p2266 = pneg %p2265
  %2268 = shalt.err (%p2266)
  %s2269 = scalar_lea.sflag [#allocation9], 2
  %2270 = vsyncmov %s2269
  %s2271 = vpop.sfrf %2270
  %p2272 = scmp.eq.s32.totalorder %s2271, 0
  %p2273 = pneg %p2272
  %2275 = shalt.err (%p2273)

</llo_original>
